<compile_context>
chip_gen: v7x
topology: tpu7x:2x2x1
jax: 0.10.0
libtpu: 0.0.40
codegen_flags: <defaults>
</compile_context>

<pallas_src>
import functools

import jax
import jax.numpy as jnp
from jax.experimental import pallas as pl
from jax.experimental.pallas import tpu as pltpu


# ------------------------------ Pallas kernel ------------------------------

def _bn_relu_conv_kernel(x_ref, scale_ref, shift_ref, w_ref, *rest,
                         kh_size, kw_size, pad, h_out, w_out, has_bias):
    """One batch element per grid step.

    x_ref:     (1, H, W, Cin)        f32   NHWC input tile
    scale_ref: (1, Cin)              f32   folded BN scale  gamma/sqrt(var+eps)
    shift_ref: (1, Cin)              f32   folded BN shift  beta - mean*scale
    w_ref:     (KH*KW, Cin, Np)      bf16  conv weights, N padded to 128 lanes
    b_ref:     (1, Np)               f32   optional conv bias
    o_ref:     (1, H_out*W_out, Np)  f32   lane-dense output slab
    hp_ref:    (H+2p, W+2p, Cin)     f32   scratch: padded post-ReLU activation
    """
    if has_bias:
        b_ref, o_ref, hp_ref = rest
    else:
        o_ref, hp_ref = rest

    x = x_ref[0].astype(jnp.float32)                        # (H, W, Cin)
    h_in, w_in, cin = x.shape

    # BatchNorm (eval, folded) + ReLU in f32 on the VPU — BEFORE zero padding,
    # matching PyTorch's BN -> ReLU -> Conv2d(padding=p) semantics.
    act = jnp.maximum(x * scale_ref[...] + shift_ref[...], 0.0)

    if pad > 0:
        hp_ref[...] = jnp.zeros_like(hp_ref)                # zero halo
    hp_ref[pad:pad + h_in, pad:pad + w_in, :] = act.astype(hp_ref.dtype)

    m = h_out * w_out
    n_p = o_ref.shape[-1]
    acc = jnp.zeros((m, n_p), jnp.float32)
    # In-kernel "im2col": accumulate KH*KW shifted views, each a bf16 MXU
    # matmul with f32 accumulation.  No HBM im2col materialization.
    for kh in range(kh_size):
        for kw in range(kw_size):
            tap = hp_ref[kh:kh + h_out, kw:kw + w_out, :]   # (H_out, W_out, Cin)
            tap2 = tap.reshape(m, cin).astype(jnp.bfloat16)
            acc = acc + jnp.dot(tap2, w_ref[kh * kw_size + kw],
                                preferred_element_type=jnp.float32)
    if has_bias:
        acc = acc + b_ref[...]
    o_ref[0] = acc.astype(o_ref.dtype)


# -------------------------------- wrappers ---------------------------------

def bn_relu_conv_nhwc(x, bn, w_oihw, bias=None, *, stride=1, padding=0,
                      eps=1e-5):
    """Fused BatchNorm(eval) -> ReLU -> Conv2d on an NHWC tensor."""
    assert stride == 1, "only stride=1 supported"  # TODO(synk): general stride
    B, H, W, Cin = x.shape
    Cout, Cin_w, KH, KW = w_oihw.shape
    assert Cin_w == Cin
    H_out = H + 2 * padding - KH + 1
    W_out = W + 2 * padding - KW + 1
    Np = int(pl.cdiv(Cout, 128) * 128)      # lane-dense (unmasked) output stores

    scale = (bn["gamma"] / jnp.sqrt(bn["var"] + eps)).astype(jnp.float32)
    shift = (bn["beta"] - bn["mean"] * scale).astype(jnp.float32)

    # OIHW -> (KH*KW, Cin, Np) bf16 for the MXU; zero-pad the N (lane) dim.
    w = jnp.transpose(w_oihw, (2, 3, 1, 0)).reshape(KH * KW, Cin, Cout)
    w = jnp.pad(w, ((0, 0), (0, 0), (0, Np - Cout))).astype(jnp.bfloat16)

    has_bias = bias is not None
    args = [x.astype(jnp.float32), scale.reshape(1, Cin), shift.reshape(1, Cin), w]
    in_specs = [
        pl.BlockSpec((1, H, W, Cin), lambda b: (b, 0, 0, 0)),
        pl.BlockSpec((1, Cin), lambda b: (0, 0)),
        pl.BlockSpec((1, Cin), lambda b: (0, 0)),
        pl.BlockSpec((KH * KW, Cin, Np), lambda b: (0, 0, 0)),
    ]
    if has_bias:
        args.append(jnp.pad(bias.astype(jnp.float32), (0, Np - Cout)).reshape(1, Np))
        in_specs.append(pl.BlockSpec((1, Np), lambda b: (0, 0)))

    kern = functools.partial(_bn_relu_conv_kernel, kh_size=KH, kw_size=KW,
                             pad=padding, h_out=H_out, w_out=W_out,
                             has_bias=has_bias)
    out = pl.pallas_call(
        kern,
        out_shape=jax.ShapeDtypeStruct((B, H_out * W_out, Np), jnp.float32),
        grid=(B,),
        in_specs=in_specs,
        out_specs=pl.BlockSpec((1, H_out * W_out, Np), lambda b: (b, 0, 0)),
        scratch_shapes=[pltpu.VMEM((H + 2 * padding, W + 2 * padding, Cin),
                                   jnp.float32)],
        compiler_params=pltpu.CompilerParams(
            dimension_semantics=("parallel",),      # batch axis -> megacore/TCs
            vmem_limit_bytes=32 * 1024 * 1024),
    )(*args)
    return out[:, :, :Cout].reshape(B, H_out, W_out, Cout)


def bn_relu_conv_forward(x_nchw, params, *, stride=1, padding=0):
    """PyTorch-layout wrapper: NCHW in, NCHW out (mirrors bn_relu_conv.forward)."""
    x = jnp.transpose(x_nchw, (0, 2, 3, 1))
    y = bn_relu_conv_nhwc(x, params["bn"], params["w"], params.get("bias"),
                          stride=stride, padding=padding)
    return jnp.transpose(y, (0, 3, 1, 2))


def bn_relu_conv_reference(x_nchw, params, *, stride=1, padding=0, eps=1e-5):
    """Pure-JAX f32 reference with PyTorch semantics (BN eval -> ReLU -> Conv)."""
    bn = params["bn"]
    scale = bn["gamma"] / jnp.sqrt(bn["var"] + eps)
    shift = bn["beta"] - bn["mean"] * scale
    h = jnp.maximum(x_nchw * scale[None, :, None, None]
                    + shift[None, :, None, None], 0.0)
    out = jax.lax.conv_general_dilated(
        h, params["w"], window_strides=(stride, stride),
        padding=[(padding, padding), (padding, padding)],
        dimension_numbers=("NCHW", "OIHW", "NCHW"),
        precision=jax.lax.Precision.HIGHEST)
    if params.get("bias") is not None:
        out = out + params["bias"][None, :, None, None]
    return out


# ----------------------------------- main -----------------------------------

if __name__ == "__main__":
    key = jax.random.PRNGKey(0)
    ks = jax.random.split(key, 8)

    B, Cin, H, W = 2, 4, 16, 16
    C1, C2 = 32, 16

    def make_bn(k, c):
        k1, k2, k3, k4 = jax.random.split(k, 4)
        return dict(
            gamma=1.0 + 0.1 * jax.random.normal(k1, (c,), jnp.float32),
            beta=0.1 * jax.random.normal(k2, (c,), jnp.float32),
            mean=0.1 * jax.random.normal(k3, (c,), jnp.float32),
            var=1.0 + 0.1 * jnp.abs(jax.random.normal(k4, (c,), jnp.float32)),
        )

    x = jax.random.normal(ks[0], (B, Cin, H, W), jnp.float32)
    # bn_relu_conv(nin=4,  nout=32, kernel_size=3, stride=1, padding=1, bias=False)
    p3 = dict(bn=make_bn(ks[1], Cin),
              w=0.05 * jax.random.normal(ks[2], (C1, Cin, 3, 3), jnp.float32))
    # bn_relu_conv(nin=32, nout=16, kernel_size=1, stride=1, padding=0, bias=False)
    p1 = dict(bn=make_bn(ks[3], C1),
              w=0.05 * jax.random.normal(ks[4], (C2, C1, 1, 1), jnp.float32))

    @jax.jit
    def model(x_nchw):
        y = bn_relu_conv_forward(x_nchw, p3, stride=1, padding=1)  # 3x3, pad 1
        z = bn_relu_conv_forward(y, p1, stride=1, padding=0)       # 1x1, pad 0
        return y, z

    y, z = jax.block_until_ready(model(x))

    y_ref = bn_relu_conv_reference(x, p3, stride=1, padding=1)
    z_ref = bn_relu_conv_reference(y_ref, p1, stride=1, padding=0)

    assert y.shape == (B, C1, H, W), y.shape
    assert z.shape == (B, C2, H, W), z.shape
    assert bool(jnp.all(jnp.isfinite(y))) and bool(jnp.all(jnp.isfinite(z)))
    assert bool(jnp.allclose(y, y_ref, atol=3e-2, rtol=3e-2)), \
        float(jnp.max(jnp.abs(y - y_ref)))
    assert bool(jnp.allclose(z, z_ref, atol=3e-2, rtol=3e-2)), \
        float(jnp.max(jnp.abs(z - z_ref)))
    print("KERNEL_OK")
</pallas_src>

<mosaic_0001>
module attributes {stable_mosaic.version = 11 : i64} {
  func.func @_bn_relu_conv_kernel(%arg0: i32, %arg1: memref<1x16x16x32xf32, #tpu.memory_space<vmem>>, %arg2: memref<1x32xf32, #tpu.memory_space<vmem>>, %arg3: memref<1x32xf32, #tpu.memory_space<vmem>>, %arg4: memref<1x32x128xbf16, #tpu.memory_space<vmem>>, %arg5: memref<1x256x128xf32, #tpu.memory_space<vmem>>, %arg6: memref<16x16x32xf32, #tpu.memory_space<vmem>>) attributes {dimension_semantics = [#tpu.dimension_semantics<parallel>], iteration_bounds = array<i64: 2>, scalar_prefetch = 0 : i64, scratch_operands = 1 : i64, tpu.core_type = #tpu.core_type<tc>, window_params = [{transform_indices = @transform_0, window_bounds = array<i64: 1, 16, 16, 32>}, {pipeline_mode = #tpu.pipeline_mode<synchronous>, transform_indices = @transform_1, window_bounds = array<i64: 1, 32>}, {pipeline_mode = #tpu.pipeline_mode<synchronous>, transform_indices = @transform_2, window_bounds = array<i64: 1, 32>}, {pipeline_mode = #tpu.pipeline_mode<synchronous>, transform_indices = @transform_3, window_bounds = array<i64: 1, 32, 128>}, {transform_indices = @transform_4, window_bounds = array<i64: 1, 256, 128>}]} {
    %c0 = arith.constant 0 : index
    %c0_0 = arith.constant 0 : index
    %c0_1 = arith.constant 0 : index
    %c0_2 = arith.constant 0 : index
    %0 = vector.load %arg1[%c0, %c0_0, %c0_1, %c0_2] : memref<1x16x16x32xf32, #tpu.memory_space<vmem>>, vector<1x16x16x32xf32>
    %1 = vector.shape_cast %0 : vector<1x16x16x32xf32> to vector<16x16x32xf32>
    %c0_3 = arith.constant 0 : index
    %c0_4 = arith.constant 0 : index
    %2 = vector.load %arg2[%c0_3, %c0_4] : memref<1x32xf32, #tpu.memory_space<vmem>>, vector<1x32xf32>
    %3 = vector.shape_cast %2 : vector<1x32xf32> to vector<1x1x32xf32>
    %4 = vector.broadcast %3 : vector<1x1x32xf32> to vector<16x16x32xf32>
    %5 = arith.mulf %1, %4 : vector<16x16x32xf32>
    %c0_5 = arith.constant 0 : index
    %c0_6 = arith.constant 0 : index
    %6 = vector.load %arg3[%c0_5, %c0_6] : memref<1x32xf32, #tpu.memory_space<vmem>>, vector<1x32xf32>
    %7 = vector.shape_cast %6 : vector<1x32xf32> to vector<1x1x32xf32>
    %8 = vector.broadcast %7 : vector<1x1x32xf32> to vector<16x16x32xf32>
    %9 = arith.addf %5, %8 : vector<16x16x32xf32>
    %cst = arith.constant 0.000000e+00 : f32
    %10 = vector.broadcast %cst : f32 to vector<16x16x32xf32>
    %11 = arith.maximumf %9, %10 : vector<16x16x32xf32>
    %c0_7 = arith.constant 0 : index
    %c0_8 = arith.constant 0 : index
    %c0_9 = arith.constant 0 : index
    %12 = vector.load %arg6[%c0_7, %c0_8, %c0_9] : memref<16x16x32xf32, #tpu.memory_space<vmem>>, vector<16x16x32xf32>
    tpu.vector_store %arg6[%c0_7, %c0_8, %c0_9], %11 {strides = array<i32>} : memref<16x16x32xf32, #tpu.memory_space<vmem>>, vector<16x16x32xf32>,
    %cst_10 = arith.constant 0.000000e+00 : f32
    %13 = vector.broadcast %cst_10 : f32 to vector<256x128xf32>
    %c0_11 = arith.constant 0 : index
    %c0_12 = arith.constant 0 : index
    %c0_13 = arith.constant 0 : index
    %14 = vector.load %arg6[%c0_11, %c0_12, %c0_13] : memref<16x16x32xf32, #tpu.memory_space<vmem>>, vector<16x16x32xf32>
    %15 = vector.shape_cast %14 : vector<16x16x32xf32> to vector<256x32xf32>
    %16 = arith.truncf %15 : vector<256x32xf32> to vector<256x32xbf16>
    %c0_14 = arith.constant 0 : index
    %c0_15 = arith.constant 0 : index
    %c0_16 = arith.constant 0 : index
    %17 = vector.load %arg4[%c0_14, %c0_15, %c0_16] : memref<1x32x128xbf16, #tpu.memory_space<vmem>>, vector<1x32x128xbf16>
    %18 = vector.shape_cast %17 : vector<1x32x128xbf16> to vector<32x128xbf16>
    %cst_17 = arith.constant dense<0.000000e+00> : vector<256x128xf32>
    %19 = tpu.matmul %16, %18, %cst_17 {dimension_numbers = #tpu.dot_dimension_numbers<[1], [0], [0], [1], [0, 0, 1, 1], [], []>} : vector<256x32xbf16>, vector<32x128xbf16>, vector<256x128xf32> -> vector<256x128xf32>
    %20 = arith.addf %13, %19 : vector<256x128xf32>
    %c0_18 = arith.constant 0 : index
    %c0_19 = arith.constant 0 : index
    %c0_20 = arith.constant 0 : index
    %21 = vector.load %arg5[%c0_18, %c0_19, %c0_20] : memref<1x256x128xf32, #tpu.memory_space<vmem>>, vector<1x256x128xf32>
    %22 = vector.shape_cast %21 : vector<1x256x128xf32> to vector<256x128xf32>
    %23 = vector.shape_cast %20 : vector<256x128xf32> to vector<1x256x128xf32>
    tpu.vector_store %arg5[%c0_18, %c0_19, %c0_20], %23 {strides = array<i32>} : memref<1x256x128xf32, #tpu.memory_space<vmem>>, vector<1x256x128xf32>,
    return
  }
  func.func @transform_0(%arg0: i32) -> (i32, i32, i32, i32) {
    %c0_i32 = arith.constant 0 : i32
    %c0_i32_0 = arith.constant 0 : i32
    %c0_i32_1 = arith.constant 0 : i32
    %c0_i32_2 = arith.constant 0 : i32
    return %arg0, %c0_i32, %c0_i32_0, %c0_i32_1 : i32, i32, i32, i32
  }
  func.func @transform_1(%arg0: i32) -> (i32, i32) {
    %c0_i32 = arith.constant 0 : i32
    %c0_i32_0 = arith.constant 0 : i32
    %c0_i32_1 = arith.constant 0 : i32
    return %c0_i32, %c0_i32_0 : i32, i32
  }
  func.func @transform_2(%arg0: i32) -> (i32, i32) {
    %c0_i32 = arith.constant 0 : i32
    %c0_i32_0 = arith.constant 0 : i32
    %c0_i32_1 = arith.constant 0 : i32
    return %c0_i32, %c0_i32_0 : i32, i32
  }
  func.func @transform_3(%arg0: i32) -> (i32, i32, i32) {
    %c0_i32 = arith.constant 0 : i32
    %c0_i32_0 = arith.constant 0 : i32
    %c0_i32_1 = arith.constant 0 : i32
    %c0_i32_2 = arith.constant 0 : i32
    return %c0_i32, %c0_i32_0, %c0_i32_1 : i32, i32, i32
  }
  func.func @transform_4(%arg0: i32) -> (i32, i32, i32) {
    %c0_i32 = arith.constant 0 : i32
    %c0_i32_0 = arith.constant 0 : i32
    %c0_i32_1 = arith.constant 0 : i32
    return %arg0, %c0_i32, %c0_i32_0 : i32, i32, i32
  }
}

module attributes {stable_mosaic.version = 11 : i64} {
  func.func @_bn_relu_conv_kernel(%arg0: i32, %arg1: memref<1x16x16x4xf32, #tpu.memory_space<vmem>>, %arg2: memref<1x4xf32, #tpu.memory_space<vmem>>, %arg3: memref<1x4xf32, #tpu.memory_space<vmem>>, %arg4: memref<9x4x128xbf16, #tpu.memory_space<vmem>>, %arg5: memref<1x256x128xf32, #tpu.memory_space<vmem>>, %arg6: memref<18x18x4xf32, #tpu.memory_space<vmem>>) attributes {dimension_semantics = [#tpu.dimension_semantics<parallel>], iteration_bounds = array<i64: 2>, scalar_prefetch = 0 : i64, scratch_operands = 1 : i64, tpu.core_type = #tpu.core_type<tc>, window_params = [{transform_indices = @transform_0, window_bounds = array<i64: 1, 16, 16, 4>}, {pipeline_mode = #tpu.pipeline_mode<synchronous>, transform_indices = @transform_1, window_bounds = array<i64: 1, 4>}, {pipeline_mode = #tpu.pipeline_mode<synchronous>, transform_indices = @transform_2, window_bounds = array<i64: 1, 4>}, {pipeline_mode = #tpu.pipeline_mode<synchronous>, transform_indices = @transform_3, window_bounds = array<i64: 9, 4, 128>}, {transform_indices = @transform_4, window_bounds = array<i64: 1, 256, 128>}]} {
    %c0 = arith.constant 0 : index
    %c0_0 = arith.constant 0 : index
    %c0_1 = arith.constant 0 : index
    %c0_2 = arith.constant 0 : index
    %0 = vector.load %arg1[%c0, %c0_0, %c0_1, %c0_2] : memref<1x16x16x4xf32, #tpu.memory_space<vmem>>, vector<1x16x16x4xf32>
    %1 = vector.shape_cast %0 : vector<1x16x16x4xf32> to vector<16x16x4xf32>
    %c0_3 = arith.constant 0 : index
    %c0_4 = arith.constant 0 : index
    %2 = vector.load %arg2[%c0_3, %c0_4] : memref<1x4xf32, #tpu.memory_space<vmem>>, vector<1x4xf32>
    %3 = vector.shape_cast %2 : vector<1x4xf32> to vector<1x1x4xf32>
    %4 = vector.broadcast %3 : vector<1x1x4xf32> to vector<16x16x4xf32>
    %5 = arith.mulf %1, %4 : vector<16x16x4xf32>
    %c0_5 = arith.constant 0 : index
    %c0_6 = arith.constant 0 : index
    %6 = vector.load %arg3[%c0_5, %c0_6] : memref<1x4xf32, #tpu.memory_space<vmem>>, vector<1x4xf32>
    %7 = vector.shape_cast %6 : vector<1x4xf32> to vector<1x1x4xf32>
    %8 = vector.broadcast %7 : vector<1x1x4xf32> to vector<16x16x4xf32>
    %9 = arith.addf %5, %8 : vector<16x16x4xf32>
    %cst = arith.constant 0.000000e+00 : f32
    %10 = vector.broadcast %cst : f32 to vector<16x16x4xf32>
    %11 = arith.maximumf %9, %10 : vector<16x16x4xf32>
    %cst_7 = arith.constant 0.000000e+00 : f32
    %12 = vector.broadcast %cst_7 : f32 to vector<18x18x4xf32>
    %c0_8 = arith.constant 0 : index
    %c0_9 = arith.constant 0 : index
    %c0_10 = arith.constant 0 : index
    %13 = vector.load %arg6[%c0_8, %c0_9, %c0_10] : memref<18x18x4xf32, #tpu.memory_space<vmem>>, vector<18x18x4xf32>
    tpu.vector_store %arg6[%c0_8, %c0_9, %c0_10], %12 {strides = array<i32>} : memref<18x18x4xf32, #tpu.memory_space<vmem>>, vector<18x18x4xf32>,
    %c1 = arith.constant 1 : index
    %c1_11 = arith.constant 1 : index
    %c0_12 = arith.constant 0 : index
    %14 = vector.load %arg6[%c1, %c1_11, %c0_12] : memref<18x18x4xf32, #tpu.memory_space<vmem>>, vector<16x16x4xf32>
    tpu.vector_store %arg6[%c1, %c1_11, %c0_12], %11 {strides = array<i32>} : memref<18x18x4xf32, #tpu.memory_space<vmem>>, vector<16x16x4xf32>,
    %cst_13 = arith.constant 0.000000e+00 : f32
    %15 = vector.broadcast %cst_13 : f32 to vector<256x128xf32>
    %c0_14 = arith.constant 0 : index
    %c0_15 = arith.constant 0 : index
    %c0_16 = arith.constant 0 : index
    %16 = vector.load %arg6[%c0_14, %c0_15, %c0_16] : memref<18x18x4xf32, #tpu.memory_space<vmem>>, vector<16x16x4xf32>
    %17 = vector.shape_cast %16 : vector<16x16x4xf32> to vector<256x4xf32>
    %18 = arith.truncf %17 : vector<256x4xf32> to vector<256x4xbf16>
    %c0_17 = arith.constant 0 : index
    %c0_18 = arith.constant 0 : index
    %c0_19 = arith.constant 0 : index
    %19 = vector.load %arg4[%c0_17, %c0_18, %c0_19] : memref<9x4x128xbf16, #tpu.memory_space<vmem>>, vector<1x4x128xbf16>
    %20 = vector.shape_cast %19 : vector<1x4x128xbf16> to vector<4x128xbf16>
    %cst_20 = arith.constant dense<0.000000e+00> : vector<256x128xf32>
    %21 = tpu.matmul %18, %20, %cst_20 {dimension_numbers = #tpu.dot_dimension_numbers<[1], [0], [0], [1], [0, 0, 1, 1], [], []>} : vector<256x4xbf16>, vector<4x128xbf16>, vector<256x128xf32> -> vector<256x128xf32>
    %22 = arith.addf %15, %21 : vector<256x128xf32>
    %c0_21 = arith.constant 0 : index
    %c1_22 = arith.constant 1 : index
    %c0_23 = arith.constant 0 : index
    %23 = vector.load %arg6[%c0_21, %c1_22, %c0_23] : memref<18x18x4xf32, #tpu.memory_space<vmem>>, vector<16x16x4xf32>
    %24 = vector.shape_cast %23 : vector<16x16x4xf32> to vector<256x4xf32>
    %25 = arith.truncf %24 : vector<256x4xf32> to vector<256x4xbf16>
    %c1_24 = arith.constant 1 : index
    %c0_25 = arith.constant 0 : index
    %c0_26 = arith.constant 0 : index
    %26 = vector.load %arg4[%c1_24, %c0_25, %c0_26] : memref<9x4x128xbf16, #tpu.memory_space<vmem>>, vector<1x4x128xbf16>
    %27 = vector.shape_cast %26 : vector<1x4x128xbf16> to vector<4x128xbf16>
    %cst_27 = arith.constant dense<0.000000e+00> : vector<256x128xf32>
    %28 = tpu.matmul %25, %27, %cst_27 {dimension_numbers = #tpu.dot_dimension_numbers<[1], [0], [0], [1], [0, 0, 1, 1], [], []>} : vector<256x4xbf16>, vector<4x128xbf16>, vector<256x128xf32> -> vector<256x128xf32>
    %29 = arith.addf %22, %28 : vector<256x128xf32>
    %c0_28 = arith.constant 0 : index
    %c2 = arith.constant 2 : index
    %c0_29 = arith.constant 0 : index
    %30 = vector.load %arg6[%c0_28, %c2, %c0_29] : memref<18x18x4xf32, #tpu.memory_space<vmem>>, vector<16x16x4xf32>
    %31 = vector.shape_cast %30 : vector<16x16x4xf32> to vector<256x4xf32>
    %32 = arith.truncf %31 : vector<256x4xf32> to vector<256x4xbf16>
    %c2_30 = arith.constant 2 : index
    %c0_31 = arith.constant 0 : index
    %c0_32 = arith.constant 0 : index
    %33 = vector.load %arg4[%c2_30, %c0_31, %c0_32] : memref<9x4x128xbf16, #tpu.memory_space<vmem>>, vector<1x4x128xbf16>
    %34 = vector.shape_cast %33 : vector<1x4x128xbf16> to vector<4x128xbf16>
    %cst_33 = arith.constant dense<0.000000e+00> : vector<256x128xf32>
    %35 = tpu.matmul %32, %34, %cst_33 {dimension_numbers = #tpu.dot_dimension_numbers<[1], [0], [0], [1], [0, 0, 1, 1], [], []>} : vector<256x4xbf16>, vector<4x128xbf16>, vector<256x128xf32> -> vector<256x128xf32>
    %36 = arith.addf %29, %35 : vector<256x128xf32>
    %c1_34 = arith.constant 1 : index
    %c0_35 = arith.constant 0 : index
    %c0_36 = arith.constant 0 : index
    %37 = vector.load %arg6[%c1_34, %c0_35, %c0_36] : memref<18x18x4xf32, #tpu.memory_space<vmem>>, vector<16x16x4xf32>
    %38 = vector.shape_cast %37 : vector<16x16x4xf32> to vector<256x4xf32>
    %39 = arith.truncf %38 : vector<256x4xf32> to vector<256x4xbf16>
    %c3 = arith.constant 3 : index
    %c0_37 = arith.constant 0 : index
    %c0_38 = arith.constant 0 : index
    %40 = vector.load %arg4[%c3, %c0_37, %c0_38] : memref<9x4x128xbf16, #tpu.memory_space<vmem>>, vector<1x4x128xbf16>
    %41 = vector.shape_cast %40 : vector<1x4x128xbf16> to vector<4x128xbf16>
    %cst_39 = arith.constant dense<0.000000e+00> : vector<256x128xf32>
    %42 = tpu.matmul %39, %41, %cst_39 {dimension_numbers = #tpu.dot_dimension_numbers<[1], [0], [0], [1], [0, 0, 1, 1], [], []>} : vector<256x4xbf16>, vector<4x128xbf16>, vector<256x128xf32> -> vector<256x128xf32>
    %43 = arith.addf %36, %42 : vector<256x128xf32>
    %c1_40 = arith.constant 1 : index
    %c1_41 = arith.constant 1 : index
    %c0_42 = arith.constant 0 : index
    %44 = vector.load %arg6[%c1_40, %c1_41, %c0_42] : memref<18x18x4xf32, #tpu.memory_space<vmem>>, vector<16x16x4xf32>
    %45 = vector.shape_cast %44 : vector<16x16x4xf32> to vector<256x4xf32>
    %46 = arith.truncf %45 : vector<256x4xf32> to vector<256x4xbf16>
    %c4 = arith.constant 4 : index
    %c0_43 = arith.constant 0 : index
    %c0_44 = arith.constant 0 : index
    %47 = vector.load %arg4[%c4, %c0_43, %c0_44] : memref<9x4x128xbf16, #tpu.memory_space<vmem>>, vector<1x4x128xbf16>
    %48 = vector.shape_cast %47 : vector<1x4x128xbf16> to vector<4x128xbf16>
    %cst_45 = arith.constant dense<0.000000e+00> : vector<256x128xf32>
    %49 = tpu.matmul %46, %48, %cst_45 {dimension_numbers = #tpu.dot_dimension_numbers<[1], [0], [0], [1], [0, 0, 1, 1], [], []>} : vector<256x4xbf16>, vector<4x128xbf16>, vector<256x128xf32> -> vector<256x128xf32>
    %50 = arith.addf %43, %49 : vector<256x128xf32>
    %c1_46 = arith.constant 1 : index
    %c2_47 = arith.constant 2 : index
    %c0_48 = arith.constant 0 : index
    %51 = vector.load %arg6[%c1_46, %c2_47, %c0_48] : memref<18x18x4xf32, #tpu.memory_space<vmem>>, vector<16x16x4xf32>
    %52 = vector.shape_cast %51 : vector<16x16x4xf32> to vector<256x4xf32>
    %53 = arith.truncf %52 : vector<256x4xf32> to vector<256x4xbf16>
    %c5 = arith.constant 5 : index
    %c0_49 = arith.constant 0 : index
    %c0_50 = arith.constant 0 : index
    %54 = vector.load %arg4[%c5, %c0_49, %c0_50] : memref<9x4x128xbf16, #tpu.memory_space<vmem>>, vector<1x4x128xbf16>
    %55 = vector.shape_cast %54 : vector<1x4x128xbf16> to vector<4x128xbf16>
    %cst_51 = arith.constant dense<0.000000e+00> : vector<256x128xf32>
    %56 = tpu.matmul %53, %55, %cst_51 {dimension_numbers = #tpu.dot_dimension_numbers<[1], [0], [0], [1], [0, 0, 1, 1], [], []>} : vector<256x4xbf16>, vector<4x128xbf16>, vector<256x128xf32> -> vector<256x128xf32>
    %57 = arith.addf %50, %56 : vector<256x128xf32>
    %c2_52 = arith.constant 2 : index
    %c0_53 = arith.constant 0 : index
    %c0_54 = arith.constant 0 : index
    %58 = vector.load %arg6[%c2_52, %c0_53, %c0_54] : memref<18x18x4xf32, #tpu.memory_space<vmem>>, vector<16x16x4xf32>
    %59 = vector.shape_cast %58 : vector<16x16x4xf32> to vector<256x4xf32>
    %60 = arith.truncf %59 : vector<256x4xf32> to vector<256x4xbf16>
    %c6 = arith.constant 6 : index
    %c0_55 = arith.constant 0 : index
    %c0_56 = arith.constant 0 : index
    %61 = vector.load %arg4[%c6, %c0_55, %c0_56] : memref<9x4x128xbf16, #tpu.memory_space<vmem>>, vector<1x4x128xbf16>
    %62 = vector.shape_cast %61 : vector<1x4x128xbf16> to vector<4x128xbf16>
    %cst_57 = arith.constant dense<0.000000e+00> : vector<256x128xf32>
    %63 = tpu.matmul %60, %62, %cst_57 {dimension_numbers = #tpu.dot_dimension_numbers<[1], [0], [0], [1], [0, 0, 1, 1], [], []>} : vector<256x4xbf16>, vector<4x128xbf16>, vector<256x128xf32> -> vector<256x128xf32>
    %64 = arith.addf %57, %63 : vector<256x128xf32>
    %c2_58 = arith.constant 2 : index
    %c1_59 = arith.constant 1 : index
    %c0_60 = arith.constant 0 : index
    %65 = vector.load %arg6[%c2_58, %c1_59, %c0_60] : memref<18x18x4xf32, #tpu.memory_space<vmem>>, vector<16x16x4xf32>
    %66 = vector.shape_cast %65 : vector<16x16x4xf32> to vector<256x4xf32>
    %67 = arith.truncf %66 : vector<256x4xf32> to vector<256x4xbf16>
    %c7 = arith.constant 7 : index
    %c0_61 = arith.constant 0 : index
    %c0_62 = arith.constant 0 : index
    %68 = vector.load %arg4[%c7, %c0_61, %c0_62] : memref<9x4x128xbf16, #tpu.memory_space<vmem>>, vector<1x4x128xbf16>
    %69 = vector.shape_cast %68 : vector<1x4x128xbf16> to vector<4x128xbf16>
    %cst_63 = arith.constant dense<0.000000e+00> : vector<256x128xf32>
    %70 = tpu.matmul %67, %69, %cst_63 {dimension_numbers = #tpu.dot_dimension_numbers<[1], [0], [0], [1], [0, 0, 1, 1], [], []>} : vector<256x4xbf16>, vector<4x128xbf16>, vector<256x128xf32> -> vector<256x128xf32>
    %71 = arith.addf %64, %70 : vector<256x128xf32>
    %c2_64 = arith.constant 2 : index
    %c2_65 = arith.constant 2 : index
    %c0_66 = arith.constant 0 : index
    %72 = vector.load %arg6[%c2_64, %c2_65, %c0_66] : memref<18x18x4xf32, #tpu.memory_space<vmem>>, vector<16x16x4xf32>
    %73 = vector.shape_cast %72 : vector<16x16x4xf32> to vector<256x4xf32>
    %74 = arith.truncf %73 : vector<256x4xf32> to vector<256x4xbf16>
    %c8 = arith.constant 8 : index
    %c0_67 = arith.constant 0 : index
    %c0_68 = arith.constant 0 : index
    %75 = vector.load %arg4[%c8, %c0_67, %c0_68] : memref<9x4x128xbf16, #tpu.memory_space<vmem>>, vector<1x4x128xbf16>
    %76 = vector.shape_cast %75 : vector<1x4x128xbf16> to vector<4x128xbf16>
    %cst_69 = arith.constant dense<0.000000e+00> : vector<256x128xf32>
    %77 = tpu.matmul %74, %76, %cst_69 {dimension_numbers = #tpu.dot_dimension_numbers<[1], [0], [0], [1], [0, 0, 1, 1], [], []>} : vector<256x4xbf16>, vector<4x128xbf16>, vector<256x128xf32> -> vector<256x128xf32>
    %78 = arith.addf %71, %77 : vector<256x128xf32>
    %c0_70 = arith.constant 0 : index
    %c0_71 = arith.constant 0 : index
    %c0_72 = arith.constant 0 : index
    %79 = vector.load %arg5[%c0_70, %c0_71, %c0_72] : memref<1x256x128xf32, #tpu.memory_space<vmem>>, vector<1x256x128xf32>
    %80 = vector.shape_cast %79 : vector<1x256x128xf32> to vector<256x128xf32>
    %81 = vector.shape_cast %78 : vector<256x128xf32> to vector<1x256x128xf32>
    tpu.vector_store %arg5[%c0_70, %c0_71, %c0_72], %81 {strides = array<i32>} : memref<1x256x128xf32, #tpu.memory_space<vmem>>, vector<1x256x128xf32>,
    return
  }
  func.func @transform_0(%arg0: i32) -> (i32, i32, i32, i32) {
    %c0_i32 = arith.constant 0 : i32
    %c0_i32_0 = arith.constant 0 : i32
    %c0_i32_1 = arith.constant 0 : i32
    %c0_i32_2 = arith.constant 0 : i32
    return %arg0, %c0_i32, %c0_i32_0, %c0_i32_1 : i32, i32, i32, i32
  }
  func.func @transform_1(%arg0: i32) -> (i32, i32) {
    %c0_i32 = arith.constant 0 : i32
    %c0_i32_0 = arith.constant 0 : i32
    %c0_i32_1 = arith.constant 0 : i32
    return %c0_i32, %c0_i32_0 : i32, i32
  }
  func.func @transform_2(%arg0: i32) -> (i32, i32) {
    %c0_i32 = arith.constant 0 : i32
    %c0_i32_0 = arith.constant 0 : i32
    %c0_i32_1 = arith.constant 0 : i32
    return %c0_i32, %c0_i32_0 : i32, i32
  }
  func.func @transform_3(%arg0: i32) -> (i32, i32, i32) {
    %c0_i32 = arith.constant 0 : i32
    %c0_i32_0 = arith.constant 0 : i32
    %c0_i32_1 = arith.constant 0 : i32
    %c0_i32_2 = arith.constant 0 : i32
    return %c0_i32, %c0_i32_0, %c0_i32_1 : i32, i32, i32
  }
  func.func @transform_4(%arg0: i32) -> (i32, i32, i32) {
    %c0_i32 = arith.constant 0 : i32
    %c0_i32_0 = arith.constant 0 : i32
    %c0_i32_1 = arith.constant 0 : i32
    return %arg0, %c0_i32, %c0_i32_0 : i32, i32, i32
  }
}

</mosaic_0001>

<llo_original>
// kernel: model.3
$region0: #{model.3}
  #allocation0 [shape = 'u32[]', space=smem, size = 0x4, offset = 0x4, fixed_abs, tag = 'smem constant byte address 0x4 - core index']
  #allocation1 [shape = 'u32[144,128]{1,0:T(1,128)}', space=vmem, size = 0x12000, scoped, tag = 'internal scratch']
  #allocation2 [shape = 'f32[16,16,32]{2,1,0:T(8,128)}', space=vmem, size = 0x20000, scoped, tag = 'scratch operand']
  %s0 = inlined_call_operand.vmem [shape: f32[2,16,16,32], index: 0, kind: input, shape index: {}]
  %s1 = inlined_call_operand.vmem [shape: f32[1,32], index: 1, kind: input, shape index: {}]
  %s2 = inlined_call_operand.vmem [shape: f32[1,32], index: 2, kind: input, shape index: {}]
  %s3 = inlined_call_operand.vmem [shape: bf16[1,32,128], index: 3, kind: input, shape index: {}]
  %s4 = inlined_call_operand.vmem [shape: f32[2,256,128], index: 4, kind: output, shape index: {}]
  %s5 = sld [smem:[#allocation0]]
  $region49: #{model.3} parent=0
    _
  %s7 = ssub.s32 1, %s5
  %s8 = scalar_select 0, %s7, %s5
  loop: start=0, step=1, limit=4
  $region2: #{model.3} parent=0 // loop_pre_header
    _
  $region3: #{model.3} parent=0 // loop_header
    %s10 = sphi 0, %s14
    %p11 = scmp.ge.s32.totalorder %s10, 4
    %s20 = sphi 0, %s22
    %s23 = sphi 0, %s20
    %s24 = sphi 0, %s23
    %s40 = sphi 0, %s24
    %s44 = sphi 0, %s44
    %s46 = sphi 0, %s44
    %s47 = sphi 0, %s46
    %s61 = sphi 0, %s47
    %s65 = sphi 0, %s65
    %s67 = sphi 0, %s65
    %s68 = sphi 0, %s67
    %s82 = sphi 0, %s68
    %s86 = sphi 0, %s86
    %s88 = sphi 0, %s86
    %s89 = sphi 0, %s88
    %s103 = sphi 0, %s89
    %s109 = sphi 0, %s111
    %s112 = sphi 0, %s109
    %s113 = sphi 0, %s112
    %s129 = sphi 0, %s113
  $region4: #{model.3} parent=0 // loop_header_branch
    %13 = sbr.rel (%p11) target = $region8
  $region5: #{model.3} parent=0 // loop_body
    %s15 = ssub.s32 %s10, 1
    %s16 = ssub.s32 %s10, 2
    %s17 = sadd.s32 %s10, 1
    %s18 = ssub.s32 %s10, %s17
    %p19 = scmp.eq.s32.totalorder %s18, 0
    %s21 = sadd.s32 %s20, 1
    %s22 = scalar_select %p19, %s20, %s21
    %p25 = pneg %p19
    %p26 = scmp.eq.s32.totalorder %s10, 1
    %p27 = por %p25, %p26
    %p28 = scmp.ne.s32.totalorder %s20, %s23
    %p29 = scmp.eq.s32.totalorder %s10, 0
    %p30 = por %p28, %p29
    %p31 = scmp.ne.s32.totalorder %s20, %s23
    %p32 = scmp.eq.s32.totalorder %s15, 1
    %p33 = por %p31, %p32
    %p34 = scmp.ne.s32.totalorder %s23, %s24
    %p35 = scmp.eq.s32.totalorder %s15, 0
    %p36 = por %p34, %p35
    %p37 = scmp.ne.s32.totalorder %s23, %s24
    %p38 = scmp.eq.s32.totalorder %s16, 1
    %p39 = por %p37, %p38
    %p41 = scmp.ne.s32.totalorder %s24, %s40
    %p42 = scmp.eq.s32.totalorder %s16, 0
    %p43 = por %p41, %p42
    %s45 = sadd.s32 %s44, 1
    %p48 = scmp.eq.s32.totalorder %s10, 1
    %p49 = scmp.ne.s32.totalorder %s44, %s46
    %p50 = scmp.eq.s32.totalorder %s10, 0
    %p51 = por %p49, %p50
    %p52 = scmp.ne.s32.totalorder %s44, %s46
    %p53 = scmp.eq.s32.totalorder %s15, 1
    %p54 = por %p52, %p53
    %p55 = scmp.ne.s32.totalorder %s46, %s47
    %p56 = scmp.eq.s32.totalorder %s15, 0
    %p57 = por %p55, %p56
    %p58 = scmp.ne.s32.totalorder %s46, %s47
    %p59 = scmp.eq.s32.totalorder %s16, 1
    %p60 = por %p58, %p59
    %p62 = scmp.ne.s32.totalorder %s47, %s61
    %p63 = scmp.eq.s32.totalorder %s16, 0
    %p64 = por %p62, %p63
    %s66 = sadd.s32 %s65, 1
    %p69 = scmp.eq.s32.totalorder %s10, 1
    %p70 = scmp.ne.s32.totalorder %s65, %s67
    %p71 = scmp.eq.s32.totalorder %s10, 0
    %p72 = por %p70, %p71
    %p73 = scmp.ne.s32.totalorder %s65, %s67
    %p74 = scmp.eq.s32.totalorder %s15, 1
    %p75 = por %p73, %p74
    %p76 = scmp.ne.s32.totalorder %s67, %s68
    %p77 = scmp.eq.s32.totalorder %s15, 0
    %p78 = por %p76, %p77
    %p79 = scmp.ne.s32.totalorder %s67, %s68
    %p80 = scmp.eq.s32.totalorder %s16, 1
    %p81 = por %p79, %p80
    %p83 = scmp.ne.s32.totalorder %s68, %s82
    %p84 = scmp.eq.s32.totalorder %s16, 0
    %p85 = por %p83, %p84
    %s87 = sadd.s32 %s86, 1
    %p90 = scmp.eq.s32.totalorder %s10, 1
    %p91 = scmp.ne.s32.totalorder %s86, %s88
    %p92 = scmp.eq.s32.totalorder %s10, 0
    %p93 = por %p91, %p92
    %p94 = scmp.ne.s32.totalorder %s86, %s88
    %p95 = scmp.eq.s32.totalorder %s15, 1
    %p96 = por %p94, %p95
    %p97 = scmp.ne.s32.totalorder %s88, %s89
    %p98 = scmp.eq.s32.totalorder %s15, 0
    %p99 = por %p97, %p98
    %p100 = scmp.ne.s32.totalorder %s88, %s89
    %p101 = scmp.eq.s32.totalorder %s16, 1
    %p102 = por %p100, %p101
    %p104 = scmp.ne.s32.totalorder %s89, %s103
    %p105 = scmp.eq.s32.totalorder %s16, 0
    %p106 = por %p104, %p105
    %s107 = ssub.s32 %s10, %s17
    %p108 = scmp.eq.s32.totalorder %s107, 0
    %s110 = sadd.s32 %s109, 1
    %s111 = scalar_select %p108, %s109, %s110
    %p114 = pneg %p108
    %p115 = scmp.eq.s32.totalorder %s10, 1
    %p116 = por %p114, %p115
    %p117 = scmp.ne.s32.totalorder %s109, %s112
    %p118 = scmp.eq.s32.totalorder %s10, 0
    %p119 = por %p117, %p118
    %p120 = scmp.ne.s32.totalorder %s109, %s112
    %p121 = scmp.eq.s32.totalorder %s15, 1
    %p122 = por %p120, %p121
    %p123 = scmp.ne.s32.totalorder %s112, %s113
    %p124 = scmp.eq.s32.totalorder %s15, 0
    %p125 = por %p123, %p124
    %p126 = scmp.ne.s32.totalorder %s112, %s113
    %p127 = scmp.eq.s32.totalorder %s16, 1
    %p128 = por %p126, %p127
    %p130 = scmp.ne.s32.totalorder %s113, %s129
    %p131 = scmp.eq.s32.totalorder %s16, 0
    %p132 = por %p130, %p131
    %p133 = scmp.le.s32.totalorder 1, %s10
    %p134 = scmp.lt.s32.totalorder %s10, 3
    %p135 = pnand %p133, %p134
    %p136 = pneg %p135
    // Predicated region
    $region9: #{model.3} parent=5 // pred_check
      _
    $region10: #{model.3} parent=5 // pred_check_branch
      %138 = sbr.rel (%p135) target = $region12
    $region11: #{model.3} parent=5 // pred_region
      %s139 = ssub.s32 %s10, 1
      // Predicated region
      $region13: #{model.3} parent=11 // pred_check
        %p140 = pneg %p57
      $region14: #{model.3} parent=11 // pred_check_branch
        %142 = sbr.rel (%p140) target = $region16
      $region15: #{model.3} parent=11 // pred_region
        _
      $region16: #{model.3} parent=11 // pred_fallthru
        _
      // Predicated region
      $region17: #{model.3} parent=11 // pred_check
        %p143 = pneg %p78
      $region18: #{model.3} parent=11 // pred_check_branch
        %145 = sbr.rel (%p143) target = $region20
      $region19: #{model.3} parent=11 // pred_region
        _
      $region20: #{model.3} parent=11 // pred_fallthru
        _
      // Predicated region
      $region21: #{model.3} parent=11 // pred_check
        %p146 = pneg %p99
      $region22: #{model.3} parent=11 // pred_check_branch
        %148 = sbr.rel (%p146) target = $region24
      $region23: #{model.3} parent=11 // pred_region
        _
      $region24: #{model.3} parent=11 // pred_fallthru
        _
    $region12: #{model.3} parent=5 // pred_fallthru
      _
    %p149 = scmp.lt.s32.totalorder %s10, 2
    // Predicated region
    $region25: #{model.3} parent=5 // pred_check
      %p150 = pneg %p149
    $region26: #{model.3} parent=5 // pred_check_branch
      %152 = sbr.rel (%p150) target = $region28
    $region27: #{model.3} parent=5 // pred_region
      // Predicated region
      $region29: #{model.3} parent=27 // pred_check
        %p153 = pneg %p30
      $region30: #{model.3} parent=27 // pred_check_branch
        %155 = sbr.rel (%p153) target = $region32
      $region31: #{model.3} parent=27 // pred_region
        %p156 = scmp.lt.s32.totalorder %s10, 1
        %s157 = scalar_select %p156, %s10, 1
        %s158 = smul.addr %s157, 32
        %s159 = smul.addr %s158, 8
        %s160 = scalar_lea.vmem %s0, %s159
      $region32: #{model.3} parent=27 // pred_fallthru
        _
    $region28: #{model.3} parent=5 // pred_fallthru
      _
    %p161 = scmp.le.s32.totalorder 1, %s10
    %p162 = scmp.lt.s32.totalorder %s10, 3
    %p163 = pnand %p161, %p162
    %p164 = pneg %p163
    // Predicated region
    $region33: #{model.3} parent=5 // pred_check
      _
    $region34: #{model.3} parent=5 // pred_check_branch
      %166 = sbr.rel (%p163) target = $region36
    $region35: #{model.3} parent=5 // pred_region
      %s167 = ssub.s32 %s10, 1
      %p168 = scmp.lt.s32.totalorder %s15, 1
      %s169 = scalar_select %p168, %s15, 1
      %s170 = smul.addr %s169, 32
      %s171 = smul.addr %s170, 8
      %s172 = scalar_lea.vmem %s0, %s171
      %p173 = pneg %p36
      %p174 = pneg %p33
      %p175 = pneg %p57
      %p176 = pneg %p54
      %p177 = pneg %p78
      %p178 = pneg %p75
      %p179 = pneg %p99
      %p180 = pneg %p96
      %p181 = pneg %p125
      %p182 = pneg %p122
      %p183 = scmp.lt.s32.totalorder %s15, 1
      %s184 = scalar_select %p183, %s15, 1
      %s185 = smul.addr %s184, 32
      %s186 = smul.addr %s185, 8
      %s187 = scalar_lea.vmem %s4, %s186
      %p188 = scmp.lt.s32.totalorder %s15, 1
      %s189 = scalar_select %p188, %s15, 1
      %s190 = smul.addr %s189, 32
      %s191 = smul.addr %s190, 8
      %s192 = scalar_lea.vmem %s0, %s191
      %p193 = scmp.lt.s32.totalorder %s15, 1
      %s194 = scalar_select %p193, %s15, 1
      %s195 = smul.addr %s194, 32
      %s196 = smul.addr %s195, 8
      %s197 = scalar_lea.vmem %s4, %s196
      %v199 = vld [vmem:[%s192] sm:$0xff]
      %v200 = vld [vmem:[%s192 + $0x8] sm:$0xff]
      %v201 = vld [vmem:[%s192 + $0x10] sm:$0xff]
      %v202 = vld [vmem:[%s192 + $0x18] sm:$0xff]
      %v203 = vld [vmem:[%s192 + $0x20] sm:$0xff]
      %v204 = vld [vmem:[%s192 + $0x28] sm:$0xff]
      %v205 = vld [vmem:[%s192 + $0x30] sm:$0xff]
      %v206 = vld [vmem:[%s192 + $0x38] sm:$0xff]
      %v207 = vld [vmem:[%s192 + $0x40] sm:$0xff]
      %v208 = vld [vmem:[%s192 + $0x48] sm:$0xff]
      %v209 = vld [vmem:[%s192 + $0x50] sm:$0xff]
      %v210 = vld [vmem:[%s192 + $0x58] sm:$0xff]
      %v211 = vld [vmem:[%s192 + $0x60] sm:$0xff]
      %v212 = vld [vmem:[%s192 + $0x68] sm:$0xff]
      %v213 = vld [vmem:[%s192 + $0x70] sm:$0xff]
      %v214 = vld [vmem:[%s192 + $0x78] sm:$0xff]
      %v215 = vld [vmem:[%s192 + $0x80] sm:$0xff]
      %v216 = vld [vmem:[%s192 + $0x88] sm:$0xff]
      %v217 = vld [vmem:[%s192 + $0x90] sm:$0xff]
      %v218 = vld [vmem:[%s192 + $0x98] sm:$0xff]
      %v219 = vld [vmem:[%s192 + $0xa0] sm:$0xff]
      %v220 = vld [vmem:[%s192 + $0xa8] sm:$0xff]
      %v221 = vld [vmem:[%s192 + $0xb0] sm:$0xff]
      %v222 = vld [vmem:[%s192 + $0xb8] sm:$0xff]
      %v223 = vld [vmem:[%s192 + $0xc0] sm:$0xff]
      %v224 = vld [vmem:[%s192 + $0xc8] sm:$0xff]
      %v225 = vld [vmem:[%s192 + $0xd0] sm:$0xff]
      %v226 = vld [vmem:[%s192 + $0xd8] sm:$0xff]
      %v227 = vld [vmem:[%s192 + $0xe0] sm:$0xff]
      %v228 = vld [vmem:[%s192 + $0xe8] sm:$0xff]
      %v229 = vld [vmem:[%s192 + $0xf0] sm:$0xff]
      %v230 = vld [vmem:[%s192 + $0xf8] sm:$0xff]
      %v231 = vld [vmem:[%s1] sm:$0x1]
      %v233 = vlaneseq
      %v234 = vshrl.u32 %v233, 7
      %v235 = vsub.s32 0, %v234
      %v236 = vrot.slane %v231, %v235
      %v238 = vmul.f32 %v199, %v236
      %v239 = vmul.f32 %v200, %v236
      %v240 = vmul.f32 %v201, %v236
      %v241 = vmul.f32 %v202, %v236
      %v242 = vmul.f32 %v203, %v236
      %v243 = vmul.f32 %v204, %v236
      %v244 = vmul.f32 %v205, %v236
      %v245 = vmul.f32 %v206, %v236
      %v246 = vmul.f32 %v207, %v236
      %v247 = vmul.f32 %v208, %v236
      %v248 = vmul.f32 %v209, %v236
      %v249 = vmul.f32 %v210, %v236
      %v250 = vmul.f32 %v211, %v236
      %v251 = vmul.f32 %v212, %v236
      %v252 = vmul.f32 %v213, %v236
      %v253 = vmul.f32 %v214, %v236
      %v254 = vmul.f32 %v215, %v236
      %v255 = vmul.f32 %v216, %v236
      %v256 = vmul.f32 %v217, %v236
      %v257 = vmul.f32 %v218, %v236
      %v258 = vmul.f32 %v219, %v236
      %v259 = vmul.f32 %v220, %v236
      %v260 = vmul.f32 %v221, %v236
      %v261 = vmul.f32 %v222, %v236
      %v262 = vmul.f32 %v223, %v236
      %v263 = vmul.f32 %v224, %v236
      %v264 = vmul.f32 %v225, %v236
      %v265 = vmul.f32 %v226, %v236
      %v266 = vmul.f32 %v227, %v236
      %v267 = vmul.f32 %v228, %v236
      %v268 = vmul.f32 %v229, %v236
      %v269 = vmul.f32 %v230, %v236
      %v270 = vld [vmem:[%s2] sm:$0x1]
      %v272 = vlaneseq
      %v273 = vshrl.u32 %v272, 7
      %v274 = vsub.s32 0, %v273
      %v275 = vrot.slane %v270, %v274
      %v277 = vadd.f32 %v238, %v275
      %v278 = vadd.f32 %v239, %v275
      %v279 = vadd.f32 %v240, %v275
      %v280 = vadd.f32 %v241, %v275
      %v281 = vadd.f32 %v242, %v275
      %v282 = vadd.f32 %v243, %v275
      %v283 = vadd.f32 %v244, %v275
      %v284 = vadd.f32 %v245, %v275
      %v285 = vadd.f32 %v246, %v275
      %v286 = vadd.f32 %v247, %v275
      %v287 = vadd.f32 %v248, %v275
      %v288 = vadd.f32 %v249, %v275
      %v289 = vadd.f32 %v250, %v275
      %v290 = vadd.f32 %v251, %v275
      %v291 = vadd.f32 %v252, %v275
      %v292 = vadd.f32 %v253, %v275
      %v293 = vadd.f32 %v254, %v275
      %v294 = vadd.f32 %v255, %v275
      %v295 = vadd.f32 %v256, %v275
      %v296 = vadd.f32 %v257, %v275
      %v297 = vadd.f32 %v258, %v275
      %v298 = vadd.f32 %v259, %v275
      %v299 = vadd.f32 %v260, %v275
      %v300 = vadd.f32 %v261, %v275
      %v301 = vadd.f32 %v262, %v275
      %v302 = vadd.f32 %v263, %v275
      %v303 = vadd.f32 %v264, %v275
      %v304 = vadd.f32 %v265, %v275
      %v305 = vadd.f32 %v266, %v275
      %v306 = vadd.f32 %v267, %v275
      %v307 = vadd.f32 %v268, %v275
      %v308 = vadd.f32 %v269, %v275
      %v309 = vmax.f32 %v277, 0.0
      %v310 = vmax.f32 %v278, 0.0
      %v311 = vmax.f32 %v279, 0.0
      %v312 = vmax.f32 %v280, 0.0
      %v313 = vmax.f32 %v281, 0.0
      %v314 = vmax.f32 %v282, 0.0
      %v315 = vmax.f32 %v283, 0.0
      %v316 = vmax.f32 %v284, 0.0
      %v317 = vmax.f32 %v285, 0.0
      %v318 = vmax.f32 %v286, 0.0
      %v319 = vmax.f32 %v287, 0.0
      %v320 = vmax.f32 %v288, 0.0
      %v321 = vmax.f32 %v289, 0.0
      %v322 = vmax.f32 %v290, 0.0
      %v323 = vmax.f32 %v291, 0.0
      %v324 = vmax.f32 %v292, 0.0
      %v325 = vmax.f32 %v293, 0.0
      %v326 = vmax.f32 %v294, 0.0
      %v327 = vmax.f32 %v295, 0.0
      %v328 = vmax.f32 %v296, 0.0
      %v329 = vmax.f32 %v297, 0.0
      %v330 = vmax.f32 %v298, 0.0
      %v331 = vmax.f32 %v299, 0.0
      %v332 = vmax.f32 %v300, 0.0
      %v333 = vmax.f32 %v301, 0.0
      %v334 = vmax.f32 %v302, 0.0
      %v335 = vmax.f32 %v303, 0.0
      %v336 = vmax.f32 %v304, 0.0
      %v337 = vmax.f32 %v305, 0.0
      %v338 = vmax.f32 %v306, 0.0
      %v339 = vmax.f32 %v307, 0.0
      %v340 = vmax.f32 %v308, 0.0
      %vm341 = vcmask 261120
      %342 = vst.msk [vmem:[#allocation2] sm:$0xff] %vm341, %v309
      %343 = vst.msk [vmem:[#allocation2 + $0x8] sm:$0xff] %vm341, %v310
      %344 = vst.msk [vmem:[#allocation2 + $0x10] sm:$0xff] %vm341, %v311
      %345 = vst.msk [vmem:[#allocation2 + $0x18] sm:$0xff] %vm341, %v312
      %346 = vst.msk [vmem:[#allocation2 + $0x20] sm:$0xff] %vm341, %v313
      %347 = vst.msk [vmem:[#allocation2 + $0x28] sm:$0xff] %vm341, %v314
      %348 = vst.msk [vmem:[#allocation2 + $0x30] sm:$0xff] %vm341, %v315
      %349 = vst.msk [vmem:[#allocation2 + $0x38] sm:$0xff] %vm341, %v316
      %350 = vst.msk [vmem:[#allocation2 + $0x40] sm:$0xff] %vm341, %v317
      %351 = vst.msk [vmem:[#allocation2 + $0x48] sm:$0xff] %vm341, %v318
      %352 = vst.msk [vmem:[#allocation2 + $0x50] sm:$0xff] %vm341, %v319
      %353 = vst.msk [vmem:[#allocation2 + $0x58] sm:$0xff] %vm341, %v320
      %354 = vst.msk [vmem:[#allocation2 + $0x60] sm:$0xff] %vm341, %v321
      %355 = vst.msk [vmem:[#allocation2 + $0x68] sm:$0xff] %vm341, %v322
      %356 = vst.msk [vmem:[#allocation2 + $0x70] sm:$0xff] %vm341, %v323
      %357 = vst.msk [vmem:[#allocation2 + $0x78] sm:$0xff] %vm341, %v324
      %358 = vst.msk [vmem:[#allocation2 + $0x80] sm:$0xff] %vm341, %v325
      %359 = vst.msk [vmem:[#allocation2 + $0x88] sm:$0xff] %vm341, %v326
      %360 = vst.msk [vmem:[#allocation2 + $0x90] sm:$0xff] %vm341, %v327
      %361 = vst.msk [vmem:[#allocation2 + $0x98] sm:$0xff] %vm341, %v328
      %362 = vst.msk [vmem:[#allocation2 + $0xa0] sm:$0xff] %vm341, %v329
      %363 = vst.msk [vmem:[#allocation2 + $0xa8] sm:$0xff] %vm341, %v330
      %364 = vst.msk [vmem:[#allocation2 + $0xb0] sm:$0xff] %vm341, %v331
      %365 = vst.msk [vmem:[#allocation2 + $0xb8] sm:$0xff] %vm341, %v332
      %366 = vst.msk [vmem:[#allocation2 + $0xc0] sm:$0xff] %vm341, %v333
      %367 = vst.msk [vmem:[#allocation2 + $0xc8] sm:$0xff] %vm341, %v334
      %368 = vst.msk [vmem:[#allocation2 + $0xd0] sm:$0xff] %vm341, %v335
      %369 = vst.msk [vmem:[#allocation2 + $0xd8] sm:$0xff] %vm341, %v336
      %370 = vst.msk [vmem:[#allocation2 + $0xe0] sm:$0xff] %vm341, %v337
      %371 = vst.msk [vmem:[#allocation2 + $0xe8] sm:$0xff] %vm341, %v338
      %372 = vst.msk [vmem:[#allocation2 + $0xf0] sm:$0xff] %vm341, %v339
      %373 = vst.msk [vmem:[#allocation2 + $0xf8] sm:$0xff] %vm341, %v340
      %v374 = vld [vmem:[#allocation2] sm:$0xff]
      %v375 = vld [vmem:[#allocation2 + $0x8] sm:$0xff]
      %v376 = vld [vmem:[#allocation2 + $0x10] sm:$0xff]
      %v377 = vld [vmem:[#allocation2 + $0x18] sm:$0xff]
      %v378 = vld [vmem:[#allocation2 + $0x20] sm:$0xff]
      %v379 = vld [vmem:[#allocation2 + $0x28] sm:$0xff]
      %v380 = vld [vmem:[#allocation2 + $0x30] sm:$0xff]
      %v381 = vld [vmem:[#allocation2 + $0x38] sm:$0xff]
      %v382 = vld [vmem:[#allocation2 + $0x40] sm:$0xff]
      %v383 = vld [vmem:[#allocation2 + $0x48] sm:$0xff]
      %v384 = vld [vmem:[#allocation2 + $0x50] sm:$0xff]
      %v385 = vld [vmem:[#allocation2 + $0x58] sm:$0xff]
      %v386 = vld [vmem:[#allocation2 + $0x60] sm:$0xff]
      %v387 = vld [vmem:[#allocation2 + $0x68] sm:$0xff]
      %v388 = vld [vmem:[#allocation2 + $0x70] sm:$0xff]
      %v389 = vld [vmem:[#allocation2 + $0x78] sm:$0xff]
      %v390 = vld [vmem:[#allocation2 + $0x80] sm:$0xff]
      %v391 = vld [vmem:[#allocation2 + $0x88] sm:$0xff]
      %v392 = vld [vmem:[#allocation2 + $0x90] sm:$0xff]
      %v393 = vld [vmem:[#allocation2 + $0x98] sm:$0xff]
      %v394 = vld [vmem:[#allocation2 + $0xa0] sm:$0xff]
      %v395 = vld [vmem:[#allocation2 + $0xa8] sm:$0xff]
      %v396 = vld [vmem:[#allocation2 + $0xb0] sm:$0xff]
      %v397 = vld [vmem:[#allocation2 + $0xb8] sm:$0xff]
      %v398 = vld [vmem:[#allocation2 + $0xc0] sm:$0xff]
      %v399 = vld [vmem:[#allocation2 + $0xc8] sm:$0xff]
      %v400 = vld [vmem:[#allocation2 + $0xd0] sm:$0xff]
      %v401 = vld [vmem:[#allocation2 + $0xd8] sm:$0xff]
      %v402 = vld [vmem:[#allocation2 + $0xe0] sm:$0xff]
      %v403 = vld [vmem:[#allocation2 + $0xe8] sm:$0xff]
      %v404 = vld [vmem:[#allocation2 + $0xf0] sm:$0xff]
      %v405 = vld [vmem:[#allocation2 + $0xf8] sm:$0xff]
      %v406 = vpack.c.bf16 %v375, %v374
      %v407 = vpack.c.bf16 %v377, %v376
      %v408 = vpack.c.bf16 %v379, %v378
      %v409 = vpack.c.bf16 %v381, %v380
      %v410 = vpack.c.bf16 %v383, %v382
      %v411 = vpack.c.bf16 %v385, %v384
      %v412 = vpack.c.bf16 %v387, %v386
      %v413 = vpack.c.bf16 %v389, %v388
      %v414 = vpack.c.bf16 %v391, %v390
      %v415 = vpack.c.bf16 %v393, %v392
      %v416 = vpack.c.bf16 %v395, %v394
      %v417 = vpack.c.bf16 %v397, %v396
      %v418 = vpack.c.bf16 %v399, %v398
      %v419 = vpack.c.bf16 %v401, %v400
      %v420 = vpack.c.bf16 %v403, %v402
      %v421 = vpack.c.bf16 %v405, %v404
      %v422 = vld [vmem:[%s3] sm:$0xf]
      %v423 = vld [vmem:[%s3 + $0x4] sm:$0xf]
      %v424 = vld [vmem:[%s3 + $0x8] sm:$0xf]
      %v425 = vld [vmem:[%s3 + $0xc] sm:$0xf]
      %v430 = vunpack.c.l.b16 %v422
      %v431 = vunpack.c.l.b16 %v423
      %v432 = vunpack.c.l.b16 %v424
      %v433 = vunpack.c.l.b16 %v425
      %v434 = vpack.c.b16 %v431, %v430
      %v435 = vpack.c.b16 %v433, %v432
      %v439 = vsel %vm341, %v406, 0
      %v442 = vsel %vm341, %v407, 0
      %v445 = vsel %vm341, %v408, 0
      %v448 = vsel %vm341, %v409, 0
      %v451 = vsel %vm341, %v410, 0
      %v454 = vsel %vm341, %v411, 0
      %v457 = vsel %vm341, %v412, 0
      %v460 = vsel %vm341, %v413, 0
      %v463 = vsel %vm341, %v414, 0
      %v466 = vsel %vm341, %v415, 0
      %v469 = vsel %vm341, %v416, 0
      %v472 = vsel %vm341, %v417, 0
      %v475 = vsel %vm341, %v418, 0
      %v478 = vsel %vm341, %v419, 0
      %v481 = vsel %vm341, %v420, 0
      %v484 = vsel %vm341, %v421, 0
      %486 = vmatprep.subr.bf16.mxu0 0
      %487 = vmatpush1.bf16.msra.mxu0 %v434
      %488 = vmatprep.subr.bf16.mxu0 0
      %489 = vmatpush1.bf16.msra.mxu0 %v435
      %490 = vmatprep.subr.bf16.mxu0 0
      %491 = vmatpush1.bf16.msra.mxu0 0
      %492 = vmatprep.subr.bf16.mxu0 0
      %493 = vmatpush1.bf16.msra.mxu0 0
      %494 = vmatprep.subr.bf16.mxu0 0
      %495 = vmatpush1.bf16.msra.mxu0 0
      %496 = vmatprep.subr.bf16.mxu0 0
      %497 = vmatpush1.bf16.msra.mxu0 0
      %498 = vmatprep.subr.bf16.mxu0 0
      %499 = vmatpush1.bf16.msra.mxu0 0
      %500 = vmatprep.subr.bf16.mxu0 0
      %501 = vmatpush1.bf16.msra.mxu0 0
      %502 = vmatprep.subr.bf16.mxu0 0
      %503 = vmatpush1.bf16.msra.mxu0 0
      %504 = vmatprep.subr.bf16.mxu0 0
      %505 = vmatpush1.bf16.msra.mxu0 0
      %506 = vmatprep.subr.bf16.mxu0 0
      %507 = vmatpush1.bf16.msra.mxu0 0
      %508 = vmatprep.subr.bf16.mxu0 0
      %509 = vmatpush1.bf16.msra.mxu0 0
      %510 = vmatprep.subr.bf16.mxu0 0
      %511 = vmatpush1.bf16.msra.mxu0 0
      %512 = vmatprep.subr.bf16.mxu0 0
      %513 = vmatpush1.bf16.msra.mxu0 0
      %514 = vmatprep.subr.bf16.mxu0 0
      %515 = vmatpush1.bf16.msra.mxu0 0
      %516 = vmatprep.subr.bf16.mxu0 0
      %517 = vmatpush1.bf16.msra.mxu0 0
      %518 = vmatprep.mubr.bf16.mxu0 0
      %519 = vmatmul.mubr.bf16.gmra.mrb[0].mxu0 %v439
      %v520 = vpop.f32.mrb[0].mxu0
      %v521 = vadd.f32 0.0, %v520
      %v522 = vpop.f32.mrb[0].mxu0
      %v523 = vpop.f32.mrb[0].mxu0
      %v524 = vadd.f32 0.0, %v523
      %v525 = vpop.f32.mrb[0].mxu0
      %526 = vmatprep.mubr.bf16.mxu0 0
      %527 = vmatmul.mubr.bf16.gmra.mrb[0].mxu0 %v442
      %v528 = vpop.f32.mrb[0].mxu0
      %v529 = vadd.f32 0.0, %v528
      %v530 = vpop.f32.mrb[0].mxu0
      %v531 = vpop.f32.mrb[0].mxu0
      %v532 = vadd.f32 0.0, %v531
      %v533 = vpop.f32.mrb[0].mxu0
      %534 = vmatprep.mubr.bf16.mxu0 0
      %535 = vmatmul.mubr.bf16.gmra.mrb[0].mxu0 %v445
      %v536 = vpop.f32.mrb[0].mxu0
      %v537 = vadd.f32 0.0, %v536
      %v538 = vpop.f32.mrb[0].mxu0
      %v539 = vpop.f32.mrb[0].mxu0
      %v540 = vadd.f32 0.0, %v539
      %v541 = vpop.f32.mrb[0].mxu0
      %542 = vmatprep.mubr.bf16.mxu0 0
      %543 = vmatmul.mubr.bf16.gmra.mrb[0].mxu0 %v448
      %v544 = vpop.f32.mrb[0].mxu0
      %v545 = vadd.f32 0.0, %v544
      %v546 = vpop.f32.mrb[0].mxu0
      %v547 = vpop.f32.mrb[0].mxu0
      %v548 = vadd.f32 0.0, %v547
      %v549 = vpop.f32.mrb[0].mxu0
      %550 = vmatprep.mubr.bf16.mxu0 0
      %551 = vmatmul.mubr.bf16.gmra.mrb[0].mxu0 %v451
      %v552 = vpop.f32.mrb[0].mxu0
      %v553 = vadd.f32 0.0, %v552
      %v554 = vpop.f32.mrb[0].mxu0
      %v555 = vpop.f32.mrb[0].mxu0
      %v556 = vadd.f32 0.0, %v555
      %v557 = vpop.f32.mrb[0].mxu0
      %558 = vmatprep.mubr.bf16.mxu0 0
      %559 = vmatmul.mubr.bf16.gmra.mrb[0].mxu0 %v454
      %v560 = vpop.f32.mrb[0].mxu0
      %v561 = vadd.f32 0.0, %v560
      %v562 = vpop.f32.mrb[0].mxu0
      %v563 = vpop.f32.mrb[0].mxu0
      %v564 = vadd.f32 0.0, %v563
      %v565 = vpop.f32.mrb[0].mxu0
      %566 = vmatprep.mubr.bf16.mxu0 0
      %567 = vmatmul.mubr.bf16.gmra.mrb[0].mxu0 %v457
      %v568 = vpop.f32.mrb[0].mxu0
      %v569 = vadd.f32 0.0, %v568
      %v570 = vpop.f32.mrb[0].mxu0
      %v571 = vpop.f32.mrb[0].mxu0
      %v572 = vadd.f32 0.0, %v571
      %v573 = vpop.f32.mrb[0].mxu0
      %574 = vmatprep.mubr.bf16.mxu0 0
      %575 = vmatmul.mubr.bf16.gmra.mrb[0].mxu0 %v460
      %v576 = vpop.f32.mrb[0].mxu0
      %v577 = vadd.f32 0.0, %v576
      %v578 = vpop.f32.mrb[0].mxu0
      %v579 = vpop.f32.mrb[0].mxu0
      %v580 = vadd.f32 0.0, %v579
      %v581 = vpop.f32.mrb[0].mxu0
      %582 = vmatprep.mubr.bf16.mxu0 0
      %583 = vmatmul.mubr.bf16.gmra.mrb[0].mxu0 %v463
      %v584 = vpop.f32.mrb[0].mxu0
      %v585 = vadd.f32 0.0, %v584
      %v586 = vpop.f32.mrb[0].mxu0
      %v587 = vpop.f32.mrb[0].mxu0
      %v588 = vadd.f32 0.0, %v587
      %v589 = vpop.f32.mrb[0].mxu0
      %590 = vmatprep.mubr.bf16.mxu0 0
      %591 = vmatmul.mubr.bf16.gmra.mrb[0].mxu0 %v466
      %v592 = vpop.f32.mrb[0].mxu0
      %v593 = vadd.f32 0.0, %v592
      %v594 = vpop.f32.mrb[0].mxu0
      %v595 = vpop.f32.mrb[0].mxu0
      %v596 = vadd.f32 0.0, %v595
      %v597 = vpop.f32.mrb[0].mxu0
      %598 = vmatprep.mubr.bf16.mxu0 0
      %599 = vmatmul.mubr.bf16.gmra.mrb[0].mxu0 %v469
      %v600 = vpop.f32.mrb[0].mxu0
      %v601 = vadd.f32 0.0, %v600
      %v602 = vpop.f32.mrb[0].mxu0
      %v603 = vpop.f32.mrb[0].mxu0
      %v604 = vadd.f32 0.0, %v603
      %v605 = vpop.f32.mrb[0].mxu0
      %606 = vmatprep.mubr.bf16.mxu0 0
      %607 = vmatmul.mubr.bf16.gmra.mrb[0].mxu0 %v472
      %v608 = vpop.f32.mrb[0].mxu0
      %v609 = vadd.f32 0.0, %v608
      %v610 = vpop.f32.mrb[0].mxu0
      %v611 = vpop.f32.mrb[0].mxu0
      %v612 = vadd.f32 0.0, %v611
      %v613 = vpop.f32.mrb[0].mxu0
      %614 = vmatprep.mubr.bf16.mxu0 0
      %615 = vmatmul.mubr.bf16.gmra.mrb[0].mxu0 %v475
      %v616 = vpop.f32.mrb[0].mxu0
      %v617 = vadd.f32 0.0, %v616
      %v618 = vpop.f32.mrb[0].mxu0
      %v619 = vpop.f32.mrb[0].mxu0
      %v620 = vadd.f32 0.0, %v619
      %v621 = vpop.f32.mrb[0].mxu0
      %622 = vmatprep.mubr.bf16.mxu0 0
      %623 = vmatmul.mubr.bf16.gmra.mrb[0].mxu0 %v478
      %v624 = vpop.f32.mrb[0].mxu0
      %v625 = vadd.f32 0.0, %v624
      %v626 = vpop.f32.mrb[0].mxu0
      %v627 = vpop.f32.mrb[0].mxu0
      %v628 = vadd.f32 0.0, %v627
      %v629 = vpop.f32.mrb[0].mxu0
      %630 = vmatprep.mubr.bf16.mxu0 0
      %631 = vmatmul.mubr.bf16.gmra.mrb[0].mxu0 %v481
      %v632 = vpop.f32.mrb[0].mxu0
      %v633 = vadd.f32 0.0, %v632
      %v634 = vpop.f32.mrb[0].mxu0
      %v635 = vpop.f32.mrb[0].mxu0
      %v636 = vadd.f32 0.0, %v635
      %v637 = vpop.f32.mrb[0].mxu0
      %638 = vmatprep.mubr.bf16.mxu0 0
      %639 = vmatmul.mubr.bf16.gmra.mrb[0].mxu0 %v484
      %v640 = vpop.f32.mrb[0].mxu0
      %v641 = vadd.f32 0.0, %v640
      %v642 = vpop.f32.mrb[0].mxu0
      %v643 = vpop.f32.mrb[0].mxu0
      %v644 = vadd.f32 0.0, %v643
      %v645 = vpop.f32.mrb[0].mxu0
      %646 = vdwg.mxu0
      %647 = vst [vmem:[%s197] sm:$0xff] %v521
      %648 = vst [vmem:[%s197 + $0x8] sm:$0xff] %v524
      %649 = vst [vmem:[%s197 + $0x10] sm:$0xff] %v529
      %650 = vst [vmem:[%s197 + $0x18] sm:$0xff] %v532
      %651 = vst [vmem:[%s197 + $0x20] sm:$0xff] %v537
      %652 = vst [vmem:[%s197 + $0x28] sm:$0xff] %v540
      %653 = vst [vmem:[%s197 + $0x30] sm:$0xff] %v545
      %654 = vst [vmem:[%s197 + $0x38] sm:$0xff] %v548
      %655 = vst [vmem:[%s197 + $0x40] sm:$0xff] %v553
      %656 = vst [vmem:[%s197 + $0x48] sm:$0xff] %v556
      %657 = vst [vmem:[%s197 + $0x50] sm:$0xff] %v561
      %658 = vst [vmem:[%s197 + $0x58] sm:$0xff] %v564
      %659 = vst [vmem:[%s197 + $0x60] sm:$0xff] %v569
      %660 = vst [vmem:[%s197 + $0x68] sm:$0xff] %v572
      %661 = vst [vmem:[%s197 + $0x70] sm:$0xff] %v577
      %662 = vst [vmem:[%s197 + $0x78] sm:$0xff] %v580
      %663 = vst [vmem:[%s197 + $0x80] sm:$0xff] %v585
      %664 = vst [vmem:[%s197 + $0x88] sm:$0xff] %v588
      %665 = vst [vmem:[%s197 + $0x90] sm:$0xff] %v593
      %666 = vst [vmem:[%s197 + $0x98] sm:$0xff] %v596
      %667 = vst [vmem:[%s197 + $0xa0] sm:$0xff] %v601
      %668 = vst [vmem:[%s197 + $0xa8] sm:$0xff] %v604
      %669 = vst [vmem:[%s197 + $0xb0] sm:$0xff] %v609
      %670 = vst [vmem:[%s197 + $0xb8] sm:$0xff] %v612
      %671 = vst [vmem:[%s197 + $0xc0] sm:$0xff] %v617
      %672 = vst [vmem:[%s197 + $0xc8] sm:$0xff] %v620
      %673 = vst [vmem:[%s197 + $0xd0] sm:$0xff] %v625
      %674 = vst [vmem:[%s197 + $0xd8] sm:$0xff] %v628
      %675 = vst [vmem:[%s197 + $0xe0] sm:$0xff] %v633
      %676 = vst [vmem:[%s197 + $0xe8] sm:$0xff] %v636
      %677 = vst [vmem:[%s197 + $0xf0] sm:$0xff] %v641
      %678 = vst [vmem:[%s197 + $0xf8] sm:$0xff] %v644
      %p679 = scmp.lt.s32.totalorder %s15, 1
      %s680 = scalar_select %p679, %s15, 1
      %s681 = smul.addr %s680, 32
      %s682 = smul.addr %s681, 8
      %s683 = scalar_lea.vmem %s4, %s682
      // Predicated region
      $region37: #{model.3} parent=35 // pred_check
        %p684 = pneg %p122
      $region38: #{model.3} parent=35 // pred_check_branch
        %686 = sbr.rel (%p684) target = $region40
      $region39: #{model.3} parent=35 // pred_region
        _
      $region40: #{model.3} parent=35 // pred_fallthru
        _
    $region36: #{model.3} parent=5 // pred_fallthru
      _
    %p687 = scmp.le.s32.totalorder 2, %s10
    // Predicated region
    $region41: #{model.3} parent=5 // pred_check
      %p688 = pneg %p687
    $region42: #{model.3} parent=5 // pred_check_branch
      %690 = sbr.rel (%p688) target = $region44
    $region43: #{model.3} parent=5 // pred_region
      %s691 = ssub.s32 %s10, 2
      // Predicated region
      $region45: #{model.3} parent=43 // pred_check
        %p692 = pneg %p128
      $region46: #{model.3} parent=43 // pred_check_branch
        %694 = sbr.rel (%p692) target = $region48
      $region47: #{model.3} parent=43 // pred_region
        %p695 = scmp.lt.s32.totalorder %s16, 1
        %s696 = scalar_select %p695, %s16, 1
        %s697 = smul.addr %s696, 32
        %s698 = smul.addr %s697, 8
        %s699 = scalar_lea.vmem %s4, %s698
      $region48: #{model.3} parent=43 // pred_fallthru
        _
    $region44: #{model.3} parent=5 // pred_fallthru
      _
  $region6: #{model.3} parent=0 // loop_footer
    %s14 = sadd.s32 1, %s10
  $region7: #{model.3} parent=0 // loop_footer_branch
    %9 = sbr.rel target = $region3
  $region8: #{model.3} parent=0 // loop_exit
    _

// kernel: model.2
$region0: #{model.2}
  #allocation0 [shape = 'u32[]', space=smem, size = 0x4, offset = 0x4, fixed_abs, tag = 'smem constant byte address 0x4 - core index']
  #allocation1 [shape = 'u32[144,128]{1,0:T(1,128)}', space=vmem, size = 0x12000, scoped, tag = 'internal scratch']
  #allocation2 [shape = 'f32[18,18,4]{2,1,0:T(8,128)}', space=vmem, size = 0x36000, scoped, tag = 'scratch operand']
  %s0 = inlined_call_operand.vmem [shape: f32[2,16,16,4], index: 0, kind: input, shape index: {}]
  %s1 = inlined_call_operand.vmem [shape: f32[1,4], index: 1, kind: input, shape index: {}]
  %s2 = inlined_call_operand.vmem [shape: f32[1,4], index: 2, kind: input, shape index: {}]
  %s3 = inlined_call_operand.vmem [shape: bf16[9,4,128], index: 3, kind: input, shape index: {}]
  %s4 = inlined_call_operand.vmem [shape: f32[2,256,128], index: 4, kind: output, shape index: {}]
  %s5 = sld [smem:[#allocation0]]
  $region49: #{model.2} parent=0
    _
  %s7 = ssub.s32 1, %s5
  %s8 = scalar_select 0, %s7, %s5
  loop: start=0, step=1, limit=4
  $region2: #{model.2} parent=0 // loop_pre_header
    _
  $region3: #{model.2} parent=0 // loop_header
    %s10 = sphi 0, %s14
    %p11 = scmp.ge.s32.totalorder %s10, 4
    %s20 = sphi 0, %s22
    %s23 = sphi 0, %s20
    %s24 = sphi 0, %s23
    %s40 = sphi 0, %s24
    %s44 = sphi 0, %s44
    %s46 = sphi 0, %s44
    %s47 = sphi 0, %s46
    %s61 = sphi 0, %s47
    %s65 = sphi 0, %s65
    %s67 = sphi 0, %s65
    %s68 = sphi 0, %s67
    %s82 = sphi 0, %s68
    %s86 = sphi 0, %s86
    %s88 = sphi 0, %s86
    %s89 = sphi 0, %s88
    %s103 = sphi 0, %s89
    %s109 = sphi 0, %s111
    %s112 = sphi 0, %s109
    %s113 = sphi 0, %s112
    %s129 = sphi 0, %s113
  $region4: #{model.2} parent=0 // loop_header_branch
    %13 = sbr.rel (%p11) target = $region8
  $region5: #{model.2} parent=0 // loop_body
    %s15 = ssub.s32 %s10, 1
    %s16 = ssub.s32 %s10, 2
    %s17 = sadd.s32 %s10, 1
    %s18 = ssub.s32 %s10, %s17
    %p19 = scmp.eq.s32.totalorder %s18, 0
    %s21 = sadd.s32 %s20, 1
    %s22 = scalar_select %p19, %s20, %s21
    %p25 = pneg %p19
    %p26 = scmp.eq.s32.totalorder %s10, 1
    %p27 = por %p25, %p26
    %p28 = scmp.ne.s32.totalorder %s20, %s23
    %p29 = scmp.eq.s32.totalorder %s10, 0
    %p30 = por %p28, %p29
    %p31 = scmp.ne.s32.totalorder %s20, %s23
    %p32 = scmp.eq.s32.totalorder %s15, 1
    %p33 = por %p31, %p32
    %p34 = scmp.ne.s32.totalorder %s23, %s24
    %p35 = scmp.eq.s32.totalorder %s15, 0
    %p36 = por %p34, %p35
    %p37 = scmp.ne.s32.totalorder %s23, %s24
    %p38 = scmp.eq.s32.totalorder %s16, 1
    %p39 = por %p37, %p38
    %p41 = scmp.ne.s32.totalorder %s24, %s40
    %p42 = scmp.eq.s32.totalorder %s16, 0
    %p43 = por %p41, %p42
    %s45 = sadd.s32 %s44, 1
    %p48 = scmp.eq.s32.totalorder %s10, 1
    %p49 = scmp.ne.s32.totalorder %s44, %s46
    %p50 = scmp.eq.s32.totalorder %s10, 0
    %p51 = por %p49, %p50
    %p52 = scmp.ne.s32.totalorder %s44, %s46
    %p53 = scmp.eq.s32.totalorder %s15, 1
    %p54 = por %p52, %p53
    %p55 = scmp.ne.s32.totalorder %s46, %s47
    %p56 = scmp.eq.s32.totalorder %s15, 0
    %p57 = por %p55, %p56
    %p58 = scmp.ne.s32.totalorder %s46, %s47
    %p59 = scmp.eq.s32.totalorder %s16, 1
    %p60 = por %p58, %p59
    %p62 = scmp.ne.s32.totalorder %s47, %s61
    %p63 = scmp.eq.s32.totalorder %s16, 0
    %p64 = por %p62, %p63
    %s66 = sadd.s32 %s65, 1
    %p69 = scmp.eq.s32.totalorder %s10, 1
    %p70 = scmp.ne.s32.totalorder %s65, %s67
    %p71 = scmp.eq.s32.totalorder %s10, 0
    %p72 = por %p70, %p71
    %p73 = scmp.ne.s32.totalorder %s65, %s67
    %p74 = scmp.eq.s32.totalorder %s15, 1
    %p75 = por %p73, %p74
    %p76 = scmp.ne.s32.totalorder %s67, %s68
    %p77 = scmp.eq.s32.totalorder %s15, 0
    %p78 = por %p76, %p77
    %p79 = scmp.ne.s32.totalorder %s67, %s68
    %p80 = scmp.eq.s32.totalorder %s16, 1
    %p81 = por %p79, %p80
    %p83 = scmp.ne.s32.totalorder %s68, %s82
    %p84 = scmp.eq.s32.totalorder %s16, 0
    %p85 = por %p83, %p84
    %s87 = sadd.s32 %s86, 1
    %p90 = scmp.eq.s32.totalorder %s10, 1
    %p91 = scmp.ne.s32.totalorder %s86, %s88
    %p92 = scmp.eq.s32.totalorder %s10, 0
    %p93 = por %p91, %p92
    %p94 = scmp.ne.s32.totalorder %s86, %s88
    %p95 = scmp.eq.s32.totalorder %s15, 1
    %p96 = por %p94, %p95
    %p97 = scmp.ne.s32.totalorder %s88, %s89
    %p98 = scmp.eq.s32.totalorder %s15, 0
    %p99 = por %p97, %p98
    %p100 = scmp.ne.s32.totalorder %s88, %s89
    %p101 = scmp.eq.s32.totalorder %s16, 1
    %p102 = por %p100, %p101
    %p104 = scmp.ne.s32.totalorder %s89, %s103
    %p105 = scmp.eq.s32.totalorder %s16, 0
    %p106 = por %p104, %p105
    %s107 = ssub.s32 %s10, %s17
    %p108 = scmp.eq.s32.totalorder %s107, 0
    %s110 = sadd.s32 %s109, 1
    %s111 = scalar_select %p108, %s109, %s110
    %p114 = pneg %p108
    %p115 = scmp.eq.s32.totalorder %s10, 1
    %p116 = por %p114, %p115
    %p117 = scmp.ne.s32.totalorder %s109, %s112
    %p118 = scmp.eq.s32.totalorder %s10, 0
    %p119 = por %p117, %p118
    %p120 = scmp.ne.s32.totalorder %s109, %s112
    %p121 = scmp.eq.s32.totalorder %s15, 1
    %p122 = por %p120, %p121
    %p123 = scmp.ne.s32.totalorder %s112, %s113
    %p124 = scmp.eq.s32.totalorder %s15, 0
    %p125 = por %p123, %p124
    %p126 = scmp.ne.s32.totalorder %s112, %s113
    %p127 = scmp.eq.s32.totalorder %s16, 1
    %p128 = por %p126, %p127
    %p130 = scmp.ne.s32.totalorder %s113, %s129
    %p131 = scmp.eq.s32.totalorder %s16, 0
    %p132 = por %p130, %p131
    %p133 = scmp.le.s32.totalorder 1, %s10
    %p134 = scmp.lt.s32.totalorder %s10, 3
    %p135 = pnand %p133, %p134
    %p136 = pneg %p135
    // Predicated region
    $region9: #{model.2} parent=5 // pred_check
      _
    $region10: #{model.2} parent=5 // pred_check_branch
      %138 = sbr.rel (%p135) target = $region12
    $region11: #{model.2} parent=5 // pred_region
      %s139 = ssub.s32 %s10, 1
      // Predicated region
      $region13: #{model.2} parent=11 // pred_check
        %p140 = pneg %p57
      $region14: #{model.2} parent=11 // pred_check_branch
        %142 = sbr.rel (%p140) target = $region16
      $region15: #{model.2} parent=11 // pred_region
        _
      $region16: #{model.2} parent=11 // pred_fallthru
        _
      // Predicated region
      $region17: #{model.2} parent=11 // pred_check
        %p143 = pneg %p78
      $region18: #{model.2} parent=11 // pred_check_branch
        %145 = sbr.rel (%p143) target = $region20
      $region19: #{model.2} parent=11 // pred_region
        _
      $region20: #{model.2} parent=11 // pred_fallthru
        _
      // Predicated region
      $region21: #{model.2} parent=11 // pred_check
        %p146 = pneg %p99
      $region22: #{model.2} parent=11 // pred_check_branch
        %148 = sbr.rel (%p146) target = $region24
      $region23: #{model.2} parent=11 // pred_region
        _
      $region24: #{model.2} parent=11 // pred_fallthru
        _
    $region12: #{model.2} parent=5 // pred_fallthru
      _
    %p149 = scmp.lt.s32.totalorder %s10, 2
    // Predicated region
    $region25: #{model.2} parent=5 // pred_check
      %p150 = pneg %p149
    $region26: #{model.2} parent=5 // pred_check_branch
      %152 = sbr.rel (%p150) target = $region28
    $region27: #{model.2} parent=5 // pred_region
      // Predicated region
      $region29: #{model.2} parent=27 // pred_check
        %p153 = pneg %p30
      $region30: #{model.2} parent=27 // pred_check_branch
        %155 = sbr.rel (%p153) target = $region32
      $region31: #{model.2} parent=27 // pred_region
        %p156 = scmp.lt.s32.totalorder %s10, 1
        %s157 = scalar_select %p156, %s10, 1
        %s158 = smul.addr %s157, 32
        %s159 = smul.addr %s158, 8
        %s160 = scalar_lea.vmem %s0, %s159
      $region32: #{model.2} parent=27 // pred_fallthru
        _
    $region28: #{model.2} parent=5 // pred_fallthru
      _
    %p161 = scmp.le.s32.totalorder 1, %s10
    %p162 = scmp.lt.s32.totalorder %s10, 3
    %p163 = pnand %p161, %p162
    %p164 = pneg %p163
    // Predicated region
    $region33: #{model.2} parent=5 // pred_check
      _
    $region34: #{model.2} parent=5 // pred_check_branch
      %166 = sbr.rel (%p163) target = $region36
    $region35: #{model.2} parent=5 // pred_region
      %s167 = ssub.s32 %s10, 1
      %p168 = scmp.lt.s32.totalorder %s15, 1
      %s169 = scalar_select %p168, %s15, 1
      %s170 = smul.addr %s169, 32
      %s171 = smul.addr %s170, 8
      %s172 = scalar_lea.vmem %s0, %s171
      %p173 = pneg %p36
      %p174 = pneg %p33
      %p175 = pneg %p57
      %p176 = pneg %p54
      %p177 = pneg %p78
      %p178 = pneg %p75
      %p179 = pneg %p99
      %p180 = pneg %p96
      %p181 = pneg %p125
      %p182 = pneg %p122
      %p183 = scmp.lt.s32.totalorder %s15, 1
      %s184 = scalar_select %p183, %s15, 1
      %s185 = smul.addr %s184, 32
      %s186 = smul.addr %s185, 8
      %s187 = scalar_lea.vmem %s4, %s186
      %p188 = scmp.lt.s32.totalorder %s15, 1
      %s189 = scalar_select %p188, %s15, 1
      %s190 = smul.addr %s189, 32
      %s191 = smul.addr %s190, 8
      %s192 = scalar_lea.vmem %s0, %s191
      %p193 = scmp.lt.s32.totalorder %s15, 1
      %s194 = scalar_select %p193, %s15, 1
      %s195 = smul.addr %s194, 32
      %s196 = smul.addr %s195, 8
      %s197 = scalar_lea.vmem %s4, %s196
      %v199 = vld [vmem:[%s192] sm:$0xff]
      %v200 = vld [vmem:[%s192 + $0x8] sm:$0xff]
      %v201 = vld [vmem:[%s192 + $0x10] sm:$0xff]
      %v202 = vld [vmem:[%s192 + $0x18] sm:$0xff]
      %v203 = vld [vmem:[%s192 + $0x20] sm:$0xff]
      %v204 = vld [vmem:[%s192 + $0x28] sm:$0xff]
      %v205 = vld [vmem:[%s192 + $0x30] sm:$0xff]
      %v206 = vld [vmem:[%s192 + $0x38] sm:$0xff]
      %v207 = vld [vmem:[%s192 + $0x40] sm:$0xff]
      %v208 = vld [vmem:[%s192 + $0x48] sm:$0xff]
      %v209 = vld [vmem:[%s192 + $0x50] sm:$0xff]
      %v210 = vld [vmem:[%s192 + $0x58] sm:$0xff]
      %v211 = vld [vmem:[%s192 + $0x60] sm:$0xff]
      %v212 = vld [vmem:[%s192 + $0x68] sm:$0xff]
      %v213 = vld [vmem:[%s192 + $0x70] sm:$0xff]
      %v214 = vld [vmem:[%s192 + $0x78] sm:$0xff]
      %v215 = vld [vmem:[%s192 + $0x80] sm:$0xff]
      %v216 = vld [vmem:[%s192 + $0x88] sm:$0xff]
      %v217 = vld [vmem:[%s192 + $0x90] sm:$0xff]
      %v218 = vld [vmem:[%s192 + $0x98] sm:$0xff]
      %v219 = vld [vmem:[%s192 + $0xa0] sm:$0xff]
      %v220 = vld [vmem:[%s192 + $0xa8] sm:$0xff]
      %v221 = vld [vmem:[%s192 + $0xb0] sm:$0xff]
      %v222 = vld [vmem:[%s192 + $0xb8] sm:$0xff]
      %v223 = vld [vmem:[%s192 + $0xc0] sm:$0xff]
      %v224 = vld [vmem:[%s192 + $0xc8] sm:$0xff]
      %v225 = vld [vmem:[%s192 + $0xd0] sm:$0xff]
      %v226 = vld [vmem:[%s192 + $0xd8] sm:$0xff]
      %v227 = vld [vmem:[%s192 + $0xe0] sm:$0xff]
      %v228 = vld [vmem:[%s192 + $0xe8] sm:$0xff]
      %v229 = vld [vmem:[%s192 + $0xf0] sm:$0xff]
      %v230 = vld [vmem:[%s192 + $0xf8] sm:$0xff]
      %v231 = vld [vmem:[%s1] sm:$0x1]
      %v233 = vlaneseq
      %v234 = vshrl.u32 %v233, 7
      %v235 = vsub.s32 0, %v234
      %v236 = vrot.slane %v231, %v235
      %v238 = vmul.f32 %v199, %v236
      %v239 = vmul.f32 %v200, %v236
      %v240 = vmul.f32 %v201, %v236
      %v241 = vmul.f32 %v202, %v236
      %v242 = vmul.f32 %v203, %v236
      %v243 = vmul.f32 %v204, %v236
      %v244 = vmul.f32 %v205, %v236
      %v245 = vmul.f32 %v206, %v236
      %v246 = vmul.f32 %v207, %v236
      %v247 = vmul.f32 %v208, %v236
      %v248 = vmul.f32 %v209, %v236
      %v249 = vmul.f32 %v210, %v236
      %v250 = vmul.f32 %v211, %v236
      %v251 = vmul.f32 %v212, %v236
      %v252 = vmul.f32 %v213, %v236
      %v253 = vmul.f32 %v214, %v236
      %v254 = vmul.f32 %v215, %v236
      %v255 = vmul.f32 %v216, %v236
      %v256 = vmul.f32 %v217, %v236
      %v257 = vmul.f32 %v218, %v236
      %v258 = vmul.f32 %v219, %v236
      %v259 = vmul.f32 %v220, %v236
      %v260 = vmul.f32 %v221, %v236
      %v261 = vmul.f32 %v222, %v236
      %v262 = vmul.f32 %v223, %v236
      %v263 = vmul.f32 %v224, %v236
      %v264 = vmul.f32 %v225, %v236
      %v265 = vmul.f32 %v226, %v236
      %v266 = vmul.f32 %v227, %v236
      %v267 = vmul.f32 %v228, %v236
      %v268 = vmul.f32 %v229, %v236
      %v269 = vmul.f32 %v230, %v236
      %v270 = vld [vmem:[%s2] sm:$0x1]
      %v272 = vlaneseq
      %v273 = vshrl.u32 %v272, 7
      %v274 = vsub.s32 0, %v273
      %v275 = vrot.slane %v270, %v274
      %v277 = vadd.f32 %v238, %v275
      %v278 = vadd.f32 %v239, %v275
      %v279 = vadd.f32 %v240, %v275
      %v280 = vadd.f32 %v241, %v275
      %v281 = vadd.f32 %v242, %v275
      %v282 = vadd.f32 %v243, %v275
      %v283 = vadd.f32 %v244, %v275
      %v284 = vadd.f32 %v245, %v275
      %v285 = vadd.f32 %v246, %v275
      %v286 = vadd.f32 %v247, %v275
      %v287 = vadd.f32 %v248, %v275
      %v288 = vadd.f32 %v249, %v275
      %v289 = vadd.f32 %v250, %v275
      %v290 = vadd.f32 %v251, %v275
      %v291 = vadd.f32 %v252, %v275
      %v292 = vadd.f32 %v253, %v275
      %v293 = vadd.f32 %v254, %v275
      %v294 = vadd.f32 %v255, %v275
      %v295 = vadd.f32 %v256, %v275
      %v296 = vadd.f32 %v257, %v275
      %v297 = vadd.f32 %v258, %v275
      %v298 = vadd.f32 %v259, %v275
      %v299 = vadd.f32 %v260, %v275
      %v300 = vadd.f32 %v261, %v275
      %v301 = vadd.f32 %v262, %v275
      %v302 = vadd.f32 %v263, %v275
      %v303 = vadd.f32 %v264, %v275
      %v304 = vadd.f32 %v265, %v275
      %v305 = vadd.f32 %v266, %v275
      %v306 = vadd.f32 %v267, %v275
      %v307 = vadd.f32 %v268, %v275
      %v308 = vadd.f32 %v269, %v275
      %v309 = vmax.f32 %v277, 0.0
      %v310 = vmax.f32 %v278, 0.0
      %v311 = vmax.f32 %v279, 0.0
      %v312 = vmax.f32 %v280, 0.0
      %v313 = vmax.f32 %v281, 0.0
      %v314 = vmax.f32 %v282, 0.0
      %v315 = vmax.f32 %v283, 0.0
      %v316 = vmax.f32 %v284, 0.0
      %v317 = vmax.f32 %v285, 0.0
      %v318 = vmax.f32 %v286, 0.0
      %v319 = vmax.f32 %v287, 0.0
      %v320 = vmax.f32 %v288, 0.0
      %v321 = vmax.f32 %v289, 0.0
      %v322 = vmax.f32 %v290, 0.0
      %v323 = vmax.f32 %v291, 0.0
      %v324 = vmax.f32 %v292, 0.0
      %v325 = vmax.f32 %v293, 0.0
      %v326 = vmax.f32 %v294, 0.0
      %v327 = vmax.f32 %v295, 0.0
      %v328 = vmax.f32 %v296, 0.0
      %v329 = vmax.f32 %v297, 0.0
      %v330 = vmax.f32 %v298, 0.0
      %v331 = vmax.f32 %v299, 0.0
      %v332 = vmax.f32 %v300, 0.0
      %v333 = vmax.f32 %v301, 0.0
      %v334 = vmax.f32 %v302, 0.0
      %v335 = vmax.f32 %v303, 0.0
      %v336 = vmax.f32 %v304, 0.0
      %v337 = vmax.f32 %v305, 0.0
      %v338 = vmax.f32 %v306, 0.0
      %v339 = vmax.f32 %v307, 0.0
      %v340 = vmax.f32 %v308, 0.0
      %vm341 = vcmask 31744
      %342 = vst.msk [vmem:[#allocation2] sm:$0xff] %vm341, 0.0
      %343 = vst.msk [vmem:[#allocation2 + $0x8] sm:$0xff] %vm341, 0.0
      %vm344 = vcmask 25600
      %345 = vst.msk [vmem:[#allocation2 + $0x10] sm:$0x3] %vm344, 0.0
      %346 = vst.msk [vmem:[#allocation2 + $0x18] sm:$0xff] %vm341, 0.0
      %347 = vst.msk [vmem:[#allocation2 + $0x20] sm:$0xff] %vm341, 0.0
      %348 = vst.msk [vmem:[#allocation2 + $0x28] sm:$0x3] %vm344, 0.0
      %349 = vst.msk [vmem:[#allocation2 + $0x30] sm:$0xff] %vm341, 0.0
      %350 = vst.msk [vmem:[#allocation2 + $0x38] sm:$0xff] %vm341, 0.0
      %351 = vst.msk [vmem:[#allocation2 + $0x40] sm:$0x3] %vm344, 0.0
      %352 = vst.msk [vmem:[#allocation2 + $0x48] sm:$0xff] %vm341, 0.0
      %353 = vst.msk [vmem:[#allocation2 + $0x50] sm:$0xff] %vm341, 0.0
      %354 = vst.msk [vmem:[#allocation2 + $0x58] sm:$0x3] %vm344, 0.0
      %355 = vst.msk [vmem:[#allocation2 + $0x60] sm:$0xff] %vm341, 0.0
      %356 = vst.msk [vmem:[#allocation2 + $0x68] sm:$0xff] %vm341, 0.0
      %357 = vst.msk [vmem:[#allocation2 + $0x70] sm:$0x3] %vm344, 0.0
      %358 = vst.msk [vmem:[#allocation2 + $0x78] sm:$0xff] %vm341, 0.0
      %359 = vst.msk [vmem:[#allocation2 + $0x80] sm:$0xff] %vm341, 0.0
      %360 = vst.msk [vmem:[#allocation2 + $0x88] sm:$0x3] %vm344, 0.0
      %361 = vst.msk [vmem:[#allocation2 + $0x90] sm:$0xff] %vm341, 0.0
      %362 = vst.msk [vmem:[#allocation2 + $0x98] sm:$0xff] %vm341, 0.0
      %363 = vst.msk [vmem:[#allocation2 + $0xa0] sm:$0x3] %vm344, 0.0
      %364 = vst.msk [vmem:[#allocation2 + $0xa8] sm:$0xff] %vm341, 0.0
      %365 = vst.msk [vmem:[#allocation2 + $0xb0] sm:$0xff] %vm341, 0.0
      %366 = vst.msk [vmem:[#allocation2 + $0xb8] sm:$0x3] %vm344, 0.0
      %367 = vst.msk [vmem:[#allocation2 + $0xc0] sm:$0xff] %vm341, 0.0
      %368 = vst.msk [vmem:[#allocation2 + $0xc8] sm:$0xff] %vm341, 0.0
      %369 = vst.msk [vmem:[#allocation2 + $0xd0] sm:$0x3] %vm344, 0.0
      %370 = vst.msk [vmem:[#allocation2 + $0xd8] sm:$0xff] %vm341, 0.0
      %371 = vst.msk [vmem:[#allocation2 + $0xe0] sm:$0xff] %vm341, 0.0
      %372 = vst.msk [vmem:[#allocation2 + $0xe8] sm:$0x3] %vm344, 0.0
      %373 = vst.msk [vmem:[#allocation2 + $0xf0] sm:$0xff] %vm341, 0.0
      %374 = vst.msk [vmem:[#allocation2 + $0xf8] sm:$0xff] %vm341, 0.0
      %375 = vst.msk [vmem:[#allocation2 + $0x100] sm:$0x3] %vm344, 0.0
      %376 = vst.msk [vmem:[#allocation2 + $0x108] sm:$0xff] %vm341, 0.0
      %377 = vst.msk [vmem:[#allocation2 + $0x110] sm:$0xff] %vm341, 0.0
      %378 = vst.msk [vmem:[#allocation2 + $0x118] sm:$0x3] %vm344, 0.0
      %379 = vst.msk [vmem:[#allocation2 + $0x120] sm:$0xff] %vm341, 0.0
      %380 = vst.msk [vmem:[#allocation2 + $0x128] sm:$0xff] %vm341, 0.0
      %381 = vst.msk [vmem:[#allocation2 + $0x130] sm:$0x3] %vm344, 0.0
      %382 = vst.msk [vmem:[#allocation2 + $0x138] sm:$0xff] %vm341, 0.0
      %383 = vst.msk [vmem:[#allocation2 + $0x140] sm:$0xff] %vm341, 0.0
      %384 = vst.msk [vmem:[#allocation2 + $0x148] sm:$0x3] %vm344, 0.0
      %385 = vst.msk [vmem:[#allocation2 + $0x150] sm:$0xff] %vm341, 0.0
      %386 = vst.msk [vmem:[#allocation2 + $0x158] sm:$0xff] %vm341, 0.0
      %387 = vst.msk [vmem:[#allocation2 + $0x160] sm:$0x3] %vm344, 0.0
      %388 = vst.msk [vmem:[#allocation2 + $0x168] sm:$0xff] %vm341, 0.0
      %389 = vst.msk [vmem:[#allocation2 + $0x170] sm:$0xff] %vm341, 0.0
      %390 = vst.msk [vmem:[#allocation2 + $0x178] sm:$0x3] %vm344, 0.0
      %391 = vst.msk [vmem:[#allocation2 + $0x180] sm:$0xff] %vm341, 0.0
      %392 = vst.msk [vmem:[#allocation2 + $0x188] sm:$0xff] %vm341, 0.0
      %393 = vst.msk [vmem:[#allocation2 + $0x190] sm:$0x3] %vm344, 0.0
      %394 = vst.msk [vmem:[#allocation2 + $0x198] sm:$0xff] %vm341, 0.0
      %395 = vst.msk [vmem:[#allocation2 + $0x1a0] sm:$0xff] %vm341, 0.0
      %396 = vst.msk [vmem:[#allocation2 + $0x1a8] sm:$0x3] %vm344, 0.0
      %s397 = scalar_lea.vmem [#allocation2], 24
      %398 = vst.msk [vmem:[%s397 + $0x1] sm:$0xff] %vm341, %v309
      %399 = vst.msk [vmem:[%s397 + $0x9] sm:$0xff] %vm341, %v310
      %400 = vst.msk [vmem:[%s397 + $0x19] sm:$0xff] %vm341, %v311
      %401 = vst.msk [vmem:[%s397 + $0x21] sm:$0xff] %vm341, %v312
      %402 = vst.msk [vmem:[%s397 + $0x31] sm:$0xff] %vm341, %v313
      %403 = vst.msk [vmem:[%s397 + $0x39] sm:$0xff] %vm341, %v314
      %404 = vst.msk [vmem:[%s397 + $0x49] sm:$0xff] %vm341, %v315
      %405 = vst.msk [vmem:[%s397 + $0x51] sm:$0xff] %vm341, %v316
      %406 = vst.msk [vmem:[%s397 + $0x61] sm:$0xff] %vm341, %v317
      %407 = vst.msk [vmem:[%s397 + $0x69] sm:$0xff] %vm341, %v318
      %408 = vst.msk [vmem:[%s397 + $0x79] sm:$0xff] %vm341, %v319
      %409 = vst.msk [vmem:[%s397 + $0x81] sm:$0xff] %vm341, %v320
      %410 = vst.msk [vmem:[%s397 + $0x91] sm:$0xff] %vm341, %v321
      %411 = vst.msk [vmem:[%s397 + $0x99] sm:$0xff] %vm341, %v322
      %412 = vst.msk [vmem:[%s397 + $0xa9] sm:$0xff] %vm341, %v323
      %413 = vst.msk [vmem:[%s397 + $0xb1] sm:$0xff] %vm341, %v324
      %414 = vst.msk [vmem:[%s397 + $0xc1] sm:$0xff] %vm341, %v325
      %415 = vst.msk [vmem:[%s397 + $0xc9] sm:$0xff] %vm341, %v326
      %416 = vst.msk [vmem:[%s397 + $0xd9] sm:$0xff] %vm341, %v327
      %417 = vst.msk [vmem:[%s397 + $0xe1] sm:$0xff] %vm341, %v328
      %418 = vst.msk [vmem:[%s397 + $0xf1] sm:$0xff] %vm341, %v329
      %419 = vst.msk [vmem:[%s397 + $0xf9] sm:$0xff] %vm341, %v330
      %420 = vst.msk [vmem:[%s397 + $0x109] sm:$0xff] %vm341, %v331
      %421 = vst.msk [vmem:[%s397 + $0x111] sm:$0xff] %vm341, %v332
      %422 = vst.msk [vmem:[%s397 + $0x121] sm:$0xff] %vm341, %v333
      %423 = vst.msk [vmem:[%s397 + $0x129] sm:$0xff] %vm341, %v334
      %424 = vst.msk [vmem:[%s397 + $0x139] sm:$0xff] %vm341, %v335
      %425 = vst.msk [vmem:[%s397 + $0x141] sm:$0xff] %vm341, %v336
      %426 = vst.msk [vmem:[%s397 + $0x151] sm:$0xff] %vm341, %v337
      %427 = vst.msk [vmem:[%s397 + $0x159] sm:$0xff] %vm341, %v338
      %428 = vst.msk [vmem:[%s397 + $0x169] sm:$0xff] %vm341, %v339
      %429 = vst.msk [vmem:[%s397 + $0x171] sm:$0xff] %vm341, %v340
      %v430 = vld [vmem:[#allocation2] sm:$0xff]
      %v431 = vld [vmem:[#allocation2 + $0x8] sm:$0xff]
      %v432 = vld [vmem:[#allocation2 + $0x18] sm:$0xff]
      %v433 = vld [vmem:[#allocation2 + $0x20] sm:$0xff]
      %v434 = vld [vmem:[#allocation2 + $0x30] sm:$0xff]
      %v435 = vld [vmem:[#allocation2 + $0x38] sm:$0xff]
      %v436 = vld [vmem:[#allocation2 + $0x48] sm:$0xff]
      %v437 = vld [vmem:[#allocation2 + $0x50] sm:$0xff]
      %v438 = vld [vmem:[#allocation2 + $0x60] sm:$0xff]
      %v439 = vld [vmem:[#allocation2 + $0x68] sm:$0xff]
      %v440 = vld [vmem:[#allocation2 + $0x78] sm:$0xff]
      %v441 = vld [vmem:[#allocation2 + $0x80] sm:$0xff]
      %v442 = vld [vmem:[#allocation2 + $0x90] sm:$0xff]
      %v443 = vld [vmem:[#allocation2 + $0x98] sm:$0xff]
      %v444 = vld [vmem:[#allocation2 + $0xa8] sm:$0xff]
      %v445 = vld [vmem:[#allocation2 + $0xb0] sm:$0xff]
      %v446 = vld [vmem:[#allocation2 + $0xc0] sm:$0xff]
      %v447 = vld [vmem:[#allocation2 + $0xc8] sm:$0xff]
      %v448 = vld [vmem:[#allocation2 + $0xd8] sm:$0xff]
      %v449 = vld [vmem:[#allocation2 + $0xe0] sm:$0xff]
      %v450 = vld [vmem:[#allocation2 + $0xf0] sm:$0xff]
      %v451 = vld [vmem:[#allocation2 + $0xf8] sm:$0xff]
      %v452 = vld [vmem:[#allocation2 + $0x108] sm:$0xff]
      %v453 = vld [vmem:[#allocation2 + $0x110] sm:$0xff]
      %v454 = vld [vmem:[#allocation2 + $0x120] sm:$0xff]
      %v455 = vld [vmem:[#allocation2 + $0x128] sm:$0xff]
      %v456 = vld [vmem:[#allocation2 + $0x138] sm:$0xff]
      %v457 = vld [vmem:[#allocation2 + $0x140] sm:$0xff]
      %v458 = vld [vmem:[#allocation2 + $0x150] sm:$0xff]
      %v459 = vld [vmem:[#allocation2 + $0x158] sm:$0xff]
      %v460 = vld [vmem:[#allocation2 + $0x168] sm:$0xff]
      %v461 = vld [vmem:[#allocation2 + $0x170] sm:$0xff]
      %v462 = vpack.c.bf16 %v431, %v430
      %v463 = vpack.c.bf16 %v433, %v432
      %v464 = vpack.c.bf16 %v435, %v434
      %v465 = vpack.c.bf16 %v437, %v436
      %v466 = vpack.c.bf16 %v439, %v438
      %v467 = vpack.c.bf16 %v441, %v440
      %v468 = vpack.c.bf16 %v443, %v442
      %v469 = vpack.c.bf16 %v445, %v444
      %v470 = vpack.c.bf16 %v447, %v446
      %v471 = vpack.c.bf16 %v449, %v448
      %v472 = vpack.c.bf16 %v451, %v450
      %v473 = vpack.c.bf16 %v453, %v452
      %v474 = vpack.c.bf16 %v455, %v454
      %v475 = vpack.c.bf16 %v457, %v456
      %v476 = vpack.c.bf16 %v459, %v458
      %v477 = vpack.c.bf16 %v461, %v460
      %v478 = vld [vmem:[%s3] sm:$0x3]
      %v479 = vld [vmem:[#allocation2 + $0x1] sm:$0xff]
      %v480 = vld [vmem:[#allocation2 + $0x9] sm:$0xff]
      %v481 = vld [vmem:[#allocation2 + $0x19] sm:$0xff]
      %v482 = vld [vmem:[#allocation2 + $0x21] sm:$0xff]
      %v483 = vld [vmem:[#allocation2 + $0x31] sm:$0xff]
      %v484 = vld [vmem:[#allocation2 + $0x39] sm:$0xff]
      %v485 = vld [vmem:[#allocation2 + $0x49] sm:$0xff]
      %v486 = vld [vmem:[#allocation2 + $0x51] sm:$0xff]
      %v487 = vld [vmem:[#allocation2 + $0x61] sm:$0xff]
      %v488 = vld [vmem:[#allocation2 + $0x69] sm:$0xff]
      %v489 = vld [vmem:[#allocation2 + $0x79] sm:$0xff]
      %v490 = vld [vmem:[#allocation2 + $0x81] sm:$0xff]
      %v491 = vld [vmem:[#allocation2 + $0x91] sm:$0xff]
      %v492 = vld [vmem:[#allocation2 + $0x99] sm:$0xff]
      %v493 = vld [vmem:[#allocation2 + $0xa9] sm:$0xff]
      %v494 = vld [vmem:[#allocation2 + $0xb1] sm:$0xff]
      %v495 = vld [vmem:[#allocation2 + $0xc1] sm:$0xff]
      %v496 = vld [vmem:[#allocation2 + $0xc9] sm:$0xff]
      %v497 = vld [vmem:[#allocation2 + $0xd9] sm:$0xff]
      %v498 = vld [vmem:[#allocation2 + $0xe1] sm:$0xff]
      %v499 = vld [vmem:[#allocation2 + $0xf1] sm:$0xff]
      %v500 = vld [vmem:[#allocation2 + $0xf9] sm:$0xff]
      %v501 = vld [vmem:[#allocation2 + $0x109] sm:$0xff]
      %v502 = vld [vmem:[#allocation2 + $0x111] sm:$0xff]
      %v503 = vld [vmem:[#allocation2 + $0x121] sm:$0xff]
      %v504 = vld [vmem:[#allocation2 + $0x129] sm:$0xff]
      %v505 = vld [vmem:[#allocation2 + $0x139] sm:$0xff]
      %v506 = vld [vmem:[#allocation2 + $0x141] sm:$0xff]
      %v507 = vld [vmem:[#allocation2 + $0x151] sm:$0xff]
      %v508 = vld [vmem:[#allocation2 + $0x159] sm:$0xff]
      %v509 = vld [vmem:[#allocation2 + $0x169] sm:$0xff]
      %v510 = vld [vmem:[#allocation2 + $0x171] sm:$0xff]
      %v511 = vpack.c.bf16 %v480, %v479
      %v512 = vpack.c.bf16 %v482, %v481
      %v513 = vpack.c.bf16 %v484, %v483
      %v514 = vpack.c.bf16 %v486, %v485
      %v515 = vpack.c.bf16 %v488, %v487
      %v516 = vpack.c.bf16 %v490, %v489
      %v517 = vpack.c.bf16 %v492, %v491
      %v518 = vpack.c.bf16 %v494, %v493
      %v519 = vpack.c.bf16 %v496, %v495
      %v520 = vpack.c.bf16 %v498, %v497
      %v521 = vpack.c.bf16 %v500, %v499
      %v522 = vpack.c.bf16 %v502, %v501
      %v523 = vpack.c.bf16 %v504, %v503
      %v524 = vpack.c.bf16 %v506, %v505
      %v525 = vpack.c.bf16 %v508, %v507
      %v526 = vpack.c.bf16 %v510, %v509
      %s527 = scalar_lea.vmem %s3, 2
      %v528 = vld [vmem:[%s527] sm:$0x3]
      %v530 = vsel %vm341, %v511, 0
      %v533 = vsel %vm341, %v512, 0
      %v536 = vsel %vm341, %v513, 0
      %v539 = vsel %vm341, %v514, 0
      %v542 = vsel %vm341, %v515, 0
      %v545 = vsel %vm341, %v516, 0
      %v548 = vsel %vm341, %v517, 0
      %v551 = vsel %vm341, %v518, 0
      %v554 = vsel %vm341, %v519, 0
      %v557 = vsel %vm341, %v520, 0
      %v560 = vsel %vm341, %v521, 0
      %v563 = vsel %vm341, %v522, 0
      %v566 = vsel %vm341, %v523, 0
      %v569 = vsel %vm341, %v524, 0
      %v572 = vsel %vm341, %v525, 0
      %v575 = vsel %vm341, %v526, 0
      %vm577 = vcmask 1041408
      %v579 = vsel %vm577, %v528, 0
      %581 = vmatprep.subr.bf16.mxu0 0
      %582 = vmatpush1.bf16.msra.mxu0 %v579
      %583 = vmatprep.subr.bf16.mxu0 0
      %584 = vmatpush1.bf16.msra.mxu0 0
      %585 = vmatprep.subr.bf16.mxu0 0
      %586 = vmatpush1.bf16.msra.mxu0 0
      %587 = vmatprep.subr.bf16.mxu0 0
      %588 = vmatpush1.bf16.msra.mxu0 0
      %589 = vmatprep.subr.bf16.mxu0 0
      %590 = vmatpush1.bf16.msra.mxu0 0
      %591 = vmatprep.subr.bf16.mxu0 0
      %592 = vmatpush1.bf16.msra.mxu0 0
      %593 = vmatprep.subr.bf16.mxu0 0
      %594 = vmatpush1.bf16.msra.mxu0 0
      %595 = vmatprep.subr.bf16.mxu0 0
      %596 = vmatpush1.bf16.msra.mxu0 0
      %597 = vmatprep.subr.bf16.mxu0 0
      %598 = vmatpush1.bf16.msra.mxu0 0
      %599 = vmatprep.subr.bf16.mxu0 0
      %600 = vmatpush1.bf16.msra.mxu0 0
      %601 = vmatprep.subr.bf16.mxu0 0
      %602 = vmatpush1.bf16.msra.mxu0 0
      %603 = vmatprep.subr.bf16.mxu0 0
      %604 = vmatpush1.bf16.msra.mxu0 0
      %605 = vmatprep.subr.bf16.mxu0 0
      %606 = vmatpush1.bf16.msra.mxu0 0
      %607 = vmatprep.subr.bf16.mxu0 0
      %608 = vmatpush1.bf16.msra.mxu0 0
      %609 = vmatprep.subr.bf16.mxu0 0
      %610 = vmatpush1.bf16.msra.mxu0 0
      %611 = vmatprep.subr.bf16.mxu0 0
      %612 = vmatpush1.bf16.msra.mxu0 0
      %613 = vmatprep.mubr.bf16.mxu0 0
      %614 = vmatmul.mubr.bf16.gmra.mrb[0].mxu0 %v530
      %v615 = vpop.f32.mrb[0].mxu0
      %v616 = vadd.f32 0.0, %v615
      %v617 = vpop.f32.mrb[0].mxu0
      %v618 = vpop.f32.mrb[0].mxu0
      %v619 = vadd.f32 0.0, %v618
      %v620 = vpop.f32.mrb[0].mxu0
      %621 = vmatprep.mubr.bf16.mxu0 0
      %622 = vmatmul.mubr.bf16.gmra.mrb[0].mxu0 %v533
      %v623 = vpop.f32.mrb[0].mxu0
      %v624 = vadd.f32 0.0, %v623
      %v625 = vpop.f32.mrb[0].mxu0
      %v626 = vpop.f32.mrb[0].mxu0
      %v627 = vadd.f32 0.0, %v626
      %v628 = vpop.f32.mrb[0].mxu0
      %629 = vmatprep.mubr.bf16.mxu0 0
      %630 = vmatmul.mubr.bf16.gmra.mrb[0].mxu0 %v536
      %v631 = vpop.f32.mrb[0].mxu0
      %v632 = vadd.f32 0.0, %v631
      %v633 = vpop.f32.mrb[0].mxu0
      %v634 = vpop.f32.mrb[0].mxu0
      %v635 = vadd.f32 0.0, %v634
      %v636 = vpop.f32.mrb[0].mxu0
      %637 = vmatprep.mubr.bf16.mxu0 0
      %638 = vmatmul.mubr.bf16.gmra.mrb[0].mxu0 %v539
      %v639 = vpop.f32.mrb[0].mxu0
      %v640 = vadd.f32 0.0, %v639
      %v641 = vpop.f32.mrb[0].mxu0
      %v642 = vpop.f32.mrb[0].mxu0
      %v643 = vadd.f32 0.0, %v642
      %v644 = vpop.f32.mrb[0].mxu0
      %645 = vmatprep.mubr.bf16.mxu0 0
      %646 = vmatmul.mubr.bf16.gmra.mrb[0].mxu0 %v542
      %v647 = vpop.f32.mrb[0].mxu0
      %v648 = vadd.f32 0.0, %v647
      %v649 = vpop.f32.mrb[0].mxu0
      %v650 = vpop.f32.mrb[0].mxu0
      %v651 = vadd.f32 0.0, %v650
      %v652 = vpop.f32.mrb[0].mxu0
      %653 = vmatprep.mubr.bf16.mxu0 0
      %654 = vmatmul.mubr.bf16.gmra.mrb[0].mxu0 %v545
      %v655 = vpop.f32.mrb[0].mxu0
      %v656 = vadd.f32 0.0, %v655
      %v657 = vpop.f32.mrb[0].mxu0
      %v658 = vpop.f32.mrb[0].mxu0
      %v659 = vadd.f32 0.0, %v658
      %v660 = vpop.f32.mrb[0].mxu0
      %661 = vmatprep.mubr.bf16.mxu0 0
      %662 = vmatmul.mubr.bf16.gmra.mrb[0].mxu0 %v548
      %v663 = vpop.f32.mrb[0].mxu0
      %v664 = vadd.f32 0.0, %v663
      %v665 = vpop.f32.mrb[0].mxu0
      %v666 = vpop.f32.mrb[0].mxu0
      %v667 = vadd.f32 0.0, %v666
      %v668 = vpop.f32.mrb[0].mxu0
      %669 = vmatprep.mubr.bf16.mxu0 0
      %670 = vmatmul.mubr.bf16.gmra.mrb[0].mxu0 %v551
      %v671 = vpop.f32.mrb[0].mxu0
      %v672 = vadd.f32 0.0, %v671
      %v673 = vpop.f32.mrb[0].mxu0
      %v674 = vpop.f32.mrb[0].mxu0
      %v675 = vadd.f32 0.0, %v674
      %v676 = vpop.f32.mrb[0].mxu0
      %677 = vmatprep.mubr.bf16.mxu0 0
      %678 = vmatmul.mubr.bf16.gmra.mrb[0].mxu0 %v554
      %v679 = vpop.f32.mrb[0].mxu0
      %v680 = vadd.f32 0.0, %v679
      %v681 = vpop.f32.mrb[0].mxu0
      %v682 = vpop.f32.mrb[0].mxu0
      %v683 = vadd.f32 0.0, %v682
      %v684 = vpop.f32.mrb[0].mxu0
      %685 = vmatprep.mubr.bf16.mxu0 0
      %686 = vmatmul.mubr.bf16.gmra.mrb[0].mxu0 %v557
      %v687 = vpop.f32.mrb[0].mxu0
      %v688 = vadd.f32 0.0, %v687
      %v689 = vpop.f32.mrb[0].mxu0
      %v690 = vpop.f32.mrb[0].mxu0
      %v691 = vadd.f32 0.0, %v690
      %v692 = vpop.f32.mrb[0].mxu0
      %693 = vmatprep.mubr.bf16.mxu0 0
      %694 = vmatmul.mubr.bf16.gmra.mrb[0].mxu0 %v560
      %v695 = vpop.f32.mrb[0].mxu0
      %v696 = vadd.f32 0.0, %v695
      %v697 = vpop.f32.mrb[0].mxu0
      %v698 = vpop.f32.mrb[0].mxu0
      %v699 = vadd.f32 0.0, %v698
      %v700 = vpop.f32.mrb[0].mxu0
      %701 = vmatprep.mubr.bf16.mxu0 0
      %702 = vmatmul.mubr.bf16.gmra.mrb[0].mxu0 %v563
      %v703 = vpop.f32.mrb[0].mxu0
      %v704 = vadd.f32 0.0, %v703
      %v705 = vpop.f32.mrb[0].mxu0
      %v706 = vpop.f32.mrb[0].mxu0
      %v707 = vadd.f32 0.0, %v706
      %v708 = vpop.f32.mrb[0].mxu0
      %709 = vmatprep.mubr.bf16.mxu0 0
      %710 = vmatmul.mubr.bf16.gmra.mrb[0].mxu0 %v566
      %v711 = vpop.f32.mrb[0].mxu0
      %v712 = vadd.f32 0.0, %v711
      %v713 = vpop.f32.mrb[0].mxu0
      %v714 = vpop.f32.mrb[0].mxu0
      %v715 = vadd.f32 0.0, %v714
      %v716 = vpop.f32.mrb[0].mxu0
      %717 = vmatprep.mubr.bf16.mxu0 0
      %718 = vmatmul.mubr.bf16.gmra.mrb[0].mxu0 %v569
      %v719 = vpop.f32.mrb[0].mxu0
      %v720 = vadd.f32 0.0, %v719
      %v721 = vpop.f32.mrb[0].mxu0
      %v722 = vpop.f32.mrb[0].mxu0
      %v723 = vadd.f32 0.0, %v722
      %v724 = vpop.f32.mrb[0].mxu0
      %725 = vmatprep.mubr.bf16.mxu0 0
      %726 = vmatmul.mubr.bf16.gmra.mrb[0].mxu0 %v572
      %v727 = vpop.f32.mrb[0].mxu0
      %v728 = vadd.f32 0.0, %v727
      %v729 = vpop.f32.mrb[0].mxu0
      %v730 = vpop.f32.mrb[0].mxu0
      %v731 = vadd.f32 0.0, %v730
      %v732 = vpop.f32.mrb[0].mxu0
      %733 = vmatprep.mubr.bf16.mxu0 0
      %734 = vmatmul.mubr.bf16.gmra.mrb[0].mxu0 %v575
      %v735 = vpop.f32.mrb[0].mxu0
      %v736 = vadd.f32 0.0, %v735
      %v737 = vpop.f32.mrb[0].mxu0
      %v738 = vpop.f32.mrb[0].mxu0
      %v739 = vadd.f32 0.0, %v738
      %v740 = vpop.f32.mrb[0].mxu0
      %741 = vdwg.mxu0
      %v743 = vsel %vm341, %v462, 0
      %v746 = vsel %vm341, %v463, 0
      %v749 = vsel %vm341, %v464, 0
      %v752 = vsel %vm341, %v465, 0
      %v755 = vsel %vm341, %v466, 0
      %v758 = vsel %vm341, %v467, 0
      %v761 = vsel %vm341, %v468, 0
      %v764 = vsel %vm341, %v469, 0
      %v767 = vsel %vm341, %v470, 0
      %v770 = vsel %vm341, %v471, 0
      %v773 = vsel %vm341, %v472, 0
      %v776 = vsel %vm341, %v473, 0
      %v779 = vsel %vm341, %v474, 0
      %v782 = vsel %vm341, %v475, 0
      %v785 = vsel %vm341, %v476, 0
      %v788 = vsel %vm341, %v477, 0
      %v791 = vsel %vm577, %v478, 0
      %793 = vmatprep.subr.bf16.mxu0 0
      %794 = vmatpush1.bf16.msra.mxu0 %v791
      %795 = vmatprep.subr.bf16.mxu0 0
      %796 = vmatpush1.bf16.msra.mxu0 0
      %797 = vmatprep.subr.bf16.mxu0 0
      %798 = vmatpush1.bf16.msra.mxu0 0
      %799 = vmatprep.subr.bf16.mxu0 0
      %800 = vmatpush1.bf16.msra.mxu0 0
      %801 = vmatprep.subr.bf16.mxu0 0
      %802 = vmatpush1.bf16.msra.mxu0 0
      %803 = vmatprep.subr.bf16.mxu0 0
      %804 = vmatpush1.bf16.msra.mxu0 0
      %805 = vmatprep.subr.bf16.mxu0 0
      %806 = vmatpush1.bf16.msra.mxu0 0
      %807 = vmatprep.subr.bf16.mxu0 0
      %808 = vmatpush1.bf16.msra.mxu0 0
      %809 = vmatprep.subr.bf16.mxu0 0
      %810 = vmatpush1.bf16.msra.mxu0 0
      %811 = vmatprep.subr.bf16.mxu0 0
      %812 = vmatpush1.bf16.msra.mxu0 0
      %813 = vmatprep.subr.bf16.mxu0 0
      %814 = vmatpush1.bf16.msra.mxu0 0
      %815 = vmatprep.subr.bf16.mxu0 0
      %816 = vmatpush1.bf16.msra.mxu0 0
      %817 = vmatprep.subr.bf16.mxu0 0
      %818 = vmatpush1.bf16.msra.mxu0 0
      %819 = vmatprep.subr.bf16.mxu0 0
      %820 = vmatpush1.bf16.msra.mxu0 0
      %821 = vmatprep.subr.bf16.mxu0 0
      %822 = vmatpush1.bf16.msra.mxu0 0
      %823 = vmatprep.subr.bf16.mxu0 0
      %824 = vmatpush1.bf16.msra.mxu0 0
      %825 = vmatprep.mubr.bf16.mxu0 0
      %826 = vmatmul.mubr.bf16.gmra.mrb[0].mxu0 %v743
      %v827 = vpop.f32.mrb[0].mxu0
      %v828 = vadd.f32 %v616, %v827
      %v829 = vpop.f32.mrb[0].mxu0
      %v830 = vpop.f32.mrb[0].mxu0
      %v831 = vadd.f32 %v619, %v830
      %v832 = vpop.f32.mrb[0].mxu0
      %833 = vmatprep.mubr.bf16.mxu0 0
      %834 = vmatmul.mubr.bf16.gmra.mrb[0].mxu0 %v746
      %v835 = vpop.f32.mrb[0].mxu0
      %v836 = vadd.f32 %v624, %v835
      %v837 = vpop.f32.mrb[0].mxu0
      %v838 = vpop.f32.mrb[0].mxu0
      %v839 = vadd.f32 %v627, %v838
      %v840 = vpop.f32.mrb[0].mxu0
      %841 = vmatprep.mubr.bf16.mxu0 0
      %842 = vmatmul.mubr.bf16.gmra.mrb[0].mxu0 %v749
      %v843 = vpop.f32.mrb[0].mxu0
      %v844 = vadd.f32 %v632, %v843
      %v845 = vpop.f32.mrb[0].mxu0
      %v846 = vpop.f32.mrb[0].mxu0
      %v847 = vadd.f32 %v635, %v846
      %v848 = vpop.f32.mrb[0].mxu0
      %849 = vmatprep.mubr.bf16.mxu0 0
      %850 = vmatmul.mubr.bf16.gmra.mrb[0].mxu0 %v752
      %v851 = vpop.f32.mrb[0].mxu0
      %v852 = vadd.f32 %v640, %v851
      %v853 = vpop.f32.mrb[0].mxu0
      %v854 = vpop.f32.mrb[0].mxu0
      %v855 = vadd.f32 %v643, %v854
      %v856 = vpop.f32.mrb[0].mxu0
      %857 = vmatprep.mubr.bf16.mxu0 0
      %858 = vmatmul.mubr.bf16.gmra.mrb[0].mxu0 %v755
      %v859 = vpop.f32.mrb[0].mxu0
      %v860 = vadd.f32 %v648, %v859
      %v861 = vpop.f32.mrb[0].mxu0
      %v862 = vpop.f32.mrb[0].mxu0
      %v863 = vadd.f32 %v651, %v862
      %v864 = vpop.f32.mrb[0].mxu0
      %865 = vmatprep.mubr.bf16.mxu0 0
      %866 = vmatmul.mubr.bf16.gmra.mrb[0].mxu0 %v758
      %v867 = vpop.f32.mrb[0].mxu0
      %v868 = vadd.f32 %v656, %v867
      %v869 = vpop.f32.mrb[0].mxu0
      %v870 = vpop.f32.mrb[0].mxu0
      %v871 = vadd.f32 %v659, %v870
      %v872 = vpop.f32.mrb[0].mxu0
      %873 = vmatprep.mubr.bf16.mxu0 0
      %874 = vmatmul.mubr.bf16.gmra.mrb[0].mxu0 %v761
      %v875 = vpop.f32.mrb[0].mxu0
      %v876 = vadd.f32 %v664, %v875
      %v877 = vpop.f32.mrb[0].mxu0
      %v878 = vpop.f32.mrb[0].mxu0
      %v879 = vadd.f32 %v667, %v878
      %v880 = vpop.f32.mrb[0].mxu0
      %881 = vmatprep.mubr.bf16.mxu0 0
      %882 = vmatmul.mubr.bf16.gmra.mrb[0].mxu0 %v764
      %v883 = vpop.f32.mrb[0].mxu0
      %v884 = vadd.f32 %v672, %v883
      %v885 = vpop.f32.mrb[0].mxu0
      %v886 = vpop.f32.mrb[0].mxu0
      %v887 = vadd.f32 %v675, %v886
      %v888 = vpop.f32.mrb[0].mxu0
      %889 = vmatprep.mubr.bf16.mxu0 0
      %890 = vmatmul.mubr.bf16.gmra.mrb[0].mxu0 %v767
      %v891 = vpop.f32.mrb[0].mxu0
      %v892 = vadd.f32 %v680, %v891
      %v893 = vpop.f32.mrb[0].mxu0
      %v894 = vpop.f32.mrb[0].mxu0
      %v895 = vadd.f32 %v683, %v894
      %v896 = vpop.f32.mrb[0].mxu0
      %897 = vmatprep.mubr.bf16.mxu0 0
      %898 = vmatmul.mubr.bf16.gmra.mrb[0].mxu0 %v770
      %v899 = vpop.f32.mrb[0].mxu0
      %v900 = vadd.f32 %v688, %v899
      %v901 = vpop.f32.mrb[0].mxu0
      %v902 = vpop.f32.mrb[0].mxu0
      %v903 = vadd.f32 %v691, %v902
      %v904 = vpop.f32.mrb[0].mxu0
      %905 = vmatprep.mubr.bf16.mxu0 0
      %906 = vmatmul.mubr.bf16.gmra.mrb[0].mxu0 %v773
      %v907 = vpop.f32.mrb[0].mxu0
      %v908 = vadd.f32 %v696, %v907
      %v909 = vpop.f32.mrb[0].mxu0
      %v910 = vpop.f32.mrb[0].mxu0
      %v911 = vadd.f32 %v699, %v910
      %v912 = vpop.f32.mrb[0].mxu0
      %913 = vmatprep.mubr.bf16.mxu0 0
      %914 = vmatmul.mubr.bf16.gmra.mrb[0].mxu0 %v776
      %v915 = vpop.f32.mrb[0].mxu0
      %v916 = vadd.f32 %v704, %v915
      %v917 = vpop.f32.mrb[0].mxu0
      %v918 = vpop.f32.mrb[0].mxu0
      %v919 = vadd.f32 %v707, %v918
      %v920 = vpop.f32.mrb[0].mxu0
      %921 = vmatprep.mubr.bf16.mxu0 0
      %922 = vmatmul.mubr.bf16.gmra.mrb[0].mxu0 %v779
      %v923 = vpop.f32.mrb[0].mxu0
      %v924 = vadd.f32 %v712, %v923
      %v925 = vpop.f32.mrb[0].mxu0
      %v926 = vpop.f32.mrb[0].mxu0
      %v927 = vadd.f32 %v715, %v926
      %v928 = vpop.f32.mrb[0].mxu0
      %929 = vmatprep.mubr.bf16.mxu0 0
      %930 = vmatmul.mubr.bf16.gmra.mrb[0].mxu0 %v782
      %v931 = vpop.f32.mrb[0].mxu0
      %v932 = vadd.f32 %v720, %v931
      %v933 = vpop.f32.mrb[0].mxu0
      %v934 = vpop.f32.mrb[0].mxu0
      %v935 = vadd.f32 %v723, %v934
      %v936 = vpop.f32.mrb[0].mxu0
      %937 = vmatprep.mubr.bf16.mxu0 0
      %938 = vmatmul.mubr.bf16.gmra.mrb[0].mxu0 %v785
      %v939 = vpop.f32.mrb[0].mxu0
      %v940 = vadd.f32 %v728, %v939
      %v941 = vpop.f32.mrb[0].mxu0
      %v942 = vpop.f32.mrb[0].mxu0
      %v943 = vadd.f32 %v731, %v942
      %v944 = vpop.f32.mrb[0].mxu0
      %945 = vmatprep.mubr.bf16.mxu0 0
      %946 = vmatmul.mubr.bf16.gmra.mrb[0].mxu0 %v788
      %v947 = vpop.f32.mrb[0].mxu0
      %v948 = vadd.f32 %v736, %v947
      %v949 = vpop.f32.mrb[0].mxu0
      %v950 = vpop.f32.mrb[0].mxu0
      %v951 = vadd.f32 %v739, %v950
      %v952 = vpop.f32.mrb[0].mxu0
      %953 = vdwg.mxu0
      %v954 = vld [vmem:[#allocation2 + $0x2] sm:$0xff]
      %v955 = vld [vmem:[#allocation2 + $0xa] sm:$0xff]
      %v956 = vld [vmem:[#allocation2 + $0x1a] sm:$0xff]
      %v957 = vld [vmem:[#allocation2 + $0x22] sm:$0xff]
      %v958 = vld [vmem:[#allocation2 + $0x32] sm:$0xff]
      %v959 = vld [vmem:[#allocation2 + $0x3a] sm:$0xff]
      %v960 = vld [vmem:[#allocation2 + $0x4a] sm:$0xff]
      %v961 = vld [vmem:[#allocation2 + $0x52] sm:$0xff]
      %v962 = vld [vmem:[#allocation2 + $0x62] sm:$0xff]
      %v963 = vld [vmem:[#allocation2 + $0x6a] sm:$0xff]
      %v964 = vld [vmem:[#allocation2 + $0x7a] sm:$0xff]
      %v965 = vld [vmem:[#allocation2 + $0x82] sm:$0xff]
      %v966 = vld [vmem:[#allocation2 + $0x92] sm:$0xff]
      %v967 = vld [vmem:[#allocation2 + $0x9a] sm:$0xff]
      %v968 = vld [vmem:[#allocation2 + $0xaa] sm:$0xff]
      %v969 = vld [vmem:[#allocation2 + $0xb2] sm:$0xff]
      %v970 = vld [vmem:[#allocation2 + $0xc2] sm:$0xff]
      %v971 = vld [vmem:[#allocation2 + $0xca] sm:$0xff]
      %v972 = vld [vmem:[#allocation2 + $0xda] sm:$0xff]
      %v973 = vld [vmem:[#allocation2 + $0xe2] sm:$0xff]
      %v974 = vld [vmem:[#allocation2 + $0xf2] sm:$0xff]
      %v975 = vld [vmem:[#allocation2 + $0xfa] sm:$0xff]
      %v976 = vld [vmem:[#allocation2 + $0x10a] sm:$0xff]
      %v977 = vld [vmem:[#allocation2 + $0x112] sm:$0xff]
      %v978 = vld [vmem:[#allocation2 + $0x122] sm:$0xff]
      %v979 = vld [vmem:[#allocation2 + $0x12a] sm:$0xff]
      %v980 = vld [vmem:[#allocation2 + $0x13a] sm:$0xff]
      %v981 = vld [vmem:[#allocation2 + $0x142] sm:$0xff]
      %v982 = vld [vmem:[#allocation2 + $0x152] sm:$0xff]
      %v983 = vld [vmem:[#allocation2 + $0x15a] sm:$0xff]
      %v984 = vld [vmem:[#allocation2 + $0x16a] sm:$0xff]
      %v985 = vld [vmem:[#allocation2 + $0x172] sm:$0xff]
      %v986 = vpack.c.bf16 %v955, %v954
      %v987 = vpack.c.bf16 %v957, %v956
      %v988 = vpack.c.bf16 %v959, %v958
      %v989 = vpack.c.bf16 %v961, %v960
      %v990 = vpack.c.bf16 %v963, %v962
      %v991 = vpack.c.bf16 %v965, %v964
      %v992 = vpack.c.bf16 %v967, %v966
      %v993 = vpack.c.bf16 %v969, %v968
      %v994 = vpack.c.bf16 %v971, %v970
      %v995 = vpack.c.bf16 %v973, %v972
      %v996 = vpack.c.bf16 %v975, %v974
      %v997 = vpack.c.bf16 %v977, %v976
      %v998 = vpack.c.bf16 %v979, %v978
      %v999 = vpack.c.bf16 %v981, %v980
      %v1000 = vpack.c.bf16 %v983, %v982
      %v1001 = vpack.c.bf16 %v985, %v984
      %s1002 = scalar_lea.vmem %s3, 4
      %v1003 = vld [vmem:[%s1002] sm:$0x3]
      %v1005 = vsel %vm341, %v986, 0
      %v1008 = vsel %vm341, %v987, 0
      %v1011 = vsel %vm341, %v988, 0
      %v1014 = vsel %vm341, %v989, 0
      %v1017 = vsel %vm341, %v990, 0
      %v1020 = vsel %vm341, %v991, 0
      %v1023 = vsel %vm341, %v992, 0
      %v1026 = vsel %vm341, %v993, 0
      %v1029 = vsel %vm341, %v994, 0
      %v1032 = vsel %vm341, %v995, 0
      %v1035 = vsel %vm341, %v996, 0
      %v1038 = vsel %vm341, %v997, 0
      %v1041 = vsel %vm341, %v998, 0
      %v1044 = vsel %vm341, %v999, 0
      %v1047 = vsel %vm341, %v1000, 0
      %v1050 = vsel %vm341, %v1001, 0
      %v1053 = vsel %vm577, %v1003, 0
      %1055 = vmatprep.subr.bf16.mxu0 0
      %1056 = vmatpush1.bf16.msra.mxu0 %v1053
      %1057 = vmatprep.subr.bf16.mxu0 0
      %1058 = vmatpush1.bf16.msra.mxu0 0
      %1059 = vmatprep.subr.bf16.mxu0 0
      %1060 = vmatpush1.bf16.msra.mxu0 0
      %1061 = vmatprep.subr.bf16.mxu0 0
      %1062 = vmatpush1.bf16.msra.mxu0 0
      %1063 = vmatprep.subr.bf16.mxu0 0
      %1064 = vmatpush1.bf16.msra.mxu0 0
      %1065 = vmatprep.subr.bf16.mxu0 0
      %1066 = vmatpush1.bf16.msra.mxu0 0
      %1067 = vmatprep.subr.bf16.mxu0 0
      %1068 = vmatpush1.bf16.msra.mxu0 0
      %1069 = vmatprep.subr.bf16.mxu0 0
      %1070 = vmatpush1.bf16.msra.mxu0 0
      %1071 = vmatprep.subr.bf16.mxu0 0
      %1072 = vmatpush1.bf16.msra.mxu0 0
      %1073 = vmatprep.subr.bf16.mxu0 0
      %1074 = vmatpush1.bf16.msra.mxu0 0
      %1075 = vmatprep.subr.bf16.mxu0 0
      %1076 = vmatpush1.bf16.msra.mxu0 0
      %1077 = vmatprep.subr.bf16.mxu0 0
      %1078 = vmatpush1.bf16.msra.mxu0 0
      %1079 = vmatprep.subr.bf16.mxu0 0
      %1080 = vmatpush1.bf16.msra.mxu0 0
      %1081 = vmatprep.subr.bf16.mxu0 0
      %1082 = vmatpush1.bf16.msra.mxu0 0
      %1083 = vmatprep.subr.bf16.mxu0 0
      %1084 = vmatpush1.bf16.msra.mxu0 0
      %1085 = vmatprep.subr.bf16.mxu0 0
      %1086 = vmatpush1.bf16.msra.mxu0 0
      %1087 = vmatprep.mubr.bf16.mxu0 0
      %1088 = vmatmul.mubr.bf16.gmra.mrb[0].mxu0 %v1005
      %v1089 = vpop.f32.mrb[0].mxu0
      %v1090 = vadd.f32 0.0, %v1089
      %v1091 = vpop.f32.mrb[0].mxu0
      %v1092 = vpop.f32.mrb[0].mxu0
      %v1093 = vadd.f32 0.0, %v1092
      %v1094 = vpop.f32.mrb[0].mxu0
      %1095 = vmatprep.mubr.bf16.mxu0 0
      %1096 = vmatmul.mubr.bf16.gmra.mrb[0].mxu0 %v1008
      %v1097 = vpop.f32.mrb[0].mxu0
      %v1098 = vadd.f32 0.0, %v1097
      %v1099 = vpop.f32.mrb[0].mxu0
      %v1100 = vpop.f32.mrb[0].mxu0
      %v1101 = vadd.f32 0.0, %v1100
      %v1102 = vpop.f32.mrb[0].mxu0
      %1103 = vmatprep.mubr.bf16.mxu0 0
      %1104 = vmatmul.mubr.bf16.gmra.mrb[0].mxu0 %v1011
      %v1105 = vpop.f32.mrb[0].mxu0
      %v1106 = vadd.f32 0.0, %v1105
      %v1107 = vpop.f32.mrb[0].mxu0
      %v1108 = vpop.f32.mrb[0].mxu0
      %v1109 = vadd.f32 0.0, %v1108
      %v1110 = vpop.f32.mrb[0].mxu0
      %1111 = vmatprep.mubr.bf16.mxu0 0
      %1112 = vmatmul.mubr.bf16.gmra.mrb[0].mxu0 %v1014
      %v1113 = vpop.f32.mrb[0].mxu0
      %v1114 = vadd.f32 0.0, %v1113
      %v1115 = vpop.f32.mrb[0].mxu0
      %v1116 = vpop.f32.mrb[0].mxu0
      %v1117 = vadd.f32 0.0, %v1116
      %v1118 = vpop.f32.mrb[0].mxu0
      %1119 = vmatprep.mubr.bf16.mxu0 0
      %1120 = vmatmul.mubr.bf16.gmra.mrb[0].mxu0 %v1017
      %v1121 = vpop.f32.mrb[0].mxu0
      %v1122 = vadd.f32 0.0, %v1121
      %v1123 = vpop.f32.mrb[0].mxu0
      %v1124 = vpop.f32.mrb[0].mxu0
      %v1125 = vadd.f32 0.0, %v1124
      %v1126 = vpop.f32.mrb[0].mxu0
      %1127 = vmatprep.mubr.bf16.mxu0 0
      %1128 = vmatmul.mubr.bf16.gmra.mrb[0].mxu0 %v1020
      %v1129 = vpop.f32.mrb[0].mxu0
      %v1130 = vadd.f32 0.0, %v1129
      %v1131 = vpop.f32.mrb[0].mxu0
      %v1132 = vpop.f32.mrb[0].mxu0
      %v1133 = vadd.f32 0.0, %v1132
      %v1134 = vpop.f32.mrb[0].mxu0
      %1135 = vmatprep.mubr.bf16.mxu0 0
      %1136 = vmatmul.mubr.bf16.gmra.mrb[0].mxu0 %v1023
      %v1137 = vpop.f32.mrb[0].mxu0
      %v1138 = vadd.f32 0.0, %v1137
      %v1139 = vpop.f32.mrb[0].mxu0
      %v1140 = vpop.f32.mrb[0].mxu0
      %v1141 = vadd.f32 0.0, %v1140
      %v1142 = vpop.f32.mrb[0].mxu0
      %1143 = vmatprep.mubr.bf16.mxu0 0
      %1144 = vmatmul.mubr.bf16.gmra.mrb[0].mxu0 %v1026
      %v1145 = vpop.f32.mrb[0].mxu0
      %v1146 = vadd.f32 0.0, %v1145
      %v1147 = vpop.f32.mrb[0].mxu0
      %v1148 = vpop.f32.mrb[0].mxu0
      %v1149 = vadd.f32 0.0, %v1148
      %v1150 = vpop.f32.mrb[0].mxu0
      %1151 = vmatprep.mubr.bf16.mxu0 0
      %1152 = vmatmul.mubr.bf16.gmra.mrb[0].mxu0 %v1029
      %v1153 = vpop.f32.mrb[0].mxu0
      %v1154 = vadd.f32 0.0, %v1153
      %v1155 = vpop.f32.mrb[0].mxu0
      %v1156 = vpop.f32.mrb[0].mxu0
      %v1157 = vadd.f32 0.0, %v1156
      %v1158 = vpop.f32.mrb[0].mxu0
      %1159 = vmatprep.mubr.bf16.mxu0 0
      %1160 = vmatmul.mubr.bf16.gmra.mrb[0].mxu0 %v1032
      %v1161 = vpop.f32.mrb[0].mxu0
      %v1162 = vadd.f32 0.0, %v1161
      %v1163 = vpop.f32.mrb[0].mxu0
      %v1164 = vpop.f32.mrb[0].mxu0
      %v1165 = vadd.f32 0.0, %v1164
      %v1166 = vpop.f32.mrb[0].mxu0
      %1167 = vmatprep.mubr.bf16.mxu0 0
      %1168 = vmatmul.mubr.bf16.gmra.mrb[0].mxu0 %v1035
      %v1169 = vpop.f32.mrb[0].mxu0
      %v1170 = vadd.f32 0.0, %v1169
      %v1171 = vpop.f32.mrb[0].mxu0
      %v1172 = vpop.f32.mrb[0].mxu0
      %v1173 = vadd.f32 0.0, %v1172
      %v1174 = vpop.f32.mrb[0].mxu0
      %1175 = vmatprep.mubr.bf16.mxu0 0
      %1176 = vmatmul.mubr.bf16.gmra.mrb[0].mxu0 %v1038
      %v1177 = vpop.f32.mrb[0].mxu0
      %v1178 = vadd.f32 0.0, %v1177
      %v1179 = vpop.f32.mrb[0].mxu0
      %v1180 = vpop.f32.mrb[0].mxu0
      %v1181 = vadd.f32 0.0, %v1180
      %v1182 = vpop.f32.mrb[0].mxu0
      %1183 = vmatprep.mubr.bf16.mxu0 0
      %1184 = vmatmul.mubr.bf16.gmra.mrb[0].mxu0 %v1041
      %v1185 = vpop.f32.mrb[0].mxu0
      %v1186 = vadd.f32 0.0, %v1185
      %v1187 = vpop.f32.mrb[0].mxu0
      %v1188 = vpop.f32.mrb[0].mxu0
      %v1189 = vadd.f32 0.0, %v1188
      %v1190 = vpop.f32.mrb[0].mxu0
      %1191 = vmatprep.mubr.bf16.mxu0 0
      %1192 = vmatmul.mubr.bf16.gmra.mrb[0].mxu0 %v1044
      %v1193 = vpop.f32.mrb[0].mxu0
      %v1194 = vadd.f32 0.0, %v1193
      %v1195 = vpop.f32.mrb[0].mxu0
      %v1196 = vpop.f32.mrb[0].mxu0
      %v1197 = vadd.f32 0.0, %v1196
      %v1198 = vpop.f32.mrb[0].mxu0
      %1199 = vmatprep.mubr.bf16.mxu0 0
      %1200 = vmatmul.mubr.bf16.gmra.mrb[0].mxu0 %v1047
      %v1201 = vpop.f32.mrb[0].mxu0
      %v1202 = vadd.f32 0.0, %v1201
      %v1203 = vpop.f32.mrb[0].mxu0
      %v1204 = vpop.f32.mrb[0].mxu0
      %v1205 = vadd.f32 0.0, %v1204
      %v1206 = vpop.f32.mrb[0].mxu0
      %1207 = vmatprep.mubr.bf16.mxu0 0
      %1208 = vmatmul.mubr.bf16.gmra.mrb[0].mxu0 %v1050
      %v1209 = vpop.f32.mrb[0].mxu0
      %v1210 = vadd.f32 0.0, %v1209
      %v1211 = vpop.f32.mrb[0].mxu0
      %v1212 = vpop.f32.mrb[0].mxu0
      %v1213 = vadd.f32 0.0, %v1212
      %v1214 = vpop.f32.mrb[0].mxu0
      %1215 = vdwg.mxu0
      %v1216 = vadd.f32 %v828, %v1090
      %v1217 = vadd.f32 %v831, %v1093
      %v1218 = vadd.f32 %v836, %v1098
      %v1219 = vadd.f32 %v839, %v1101
      %v1220 = vadd.f32 %v844, %v1106
      %v1221 = vadd.f32 %v847, %v1109
      %v1222 = vadd.f32 %v852, %v1114
      %v1223 = vadd.f32 %v855, %v1117
      %v1224 = vadd.f32 %v860, %v1122
      %v1225 = vadd.f32 %v863, %v1125
      %v1226 = vadd.f32 %v868, %v1130
      %v1227 = vadd.f32 %v871, %v1133
      %v1228 = vadd.f32 %v876, %v1138
      %v1229 = vadd.f32 %v879, %v1141
      %v1230 = vadd.f32 %v884, %v1146
      %v1231 = vadd.f32 %v887, %v1149
      %v1232 = vadd.f32 %v892, %v1154
      %v1233 = vadd.f32 %v895, %v1157
      %v1234 = vadd.f32 %v900, %v1162
      %v1235 = vadd.f32 %v903, %v1165
      %v1236 = vadd.f32 %v908, %v1170
      %v1237 = vadd.f32 %v911, %v1173
      %v1238 = vadd.f32 %v916, %v1178
      %v1239 = vadd.f32 %v919, %v1181
      %v1240 = vadd.f32 %v924, %v1186
      %v1241 = vadd.f32 %v927, %v1189
      %v1242 = vadd.f32 %v932, %v1194
      %v1243 = vadd.f32 %v935, %v1197
      %v1244 = vadd.f32 %v940, %v1202
      %v1245 = vadd.f32 %v943, %v1205
      %v1246 = vadd.f32 %v948, %v1210
      %v1247 = vadd.f32 %v951, %v1213
      %v1248 = vld [vmem:[%s397] sm:$0xff]
      %v1249 = vld [vmem:[%s397 + $0x8] sm:$0xff]
      %v1250 = vld [vmem:[%s397 + $0x18] sm:$0xff]
      %v1251 = vld [vmem:[%s397 + $0x20] sm:$0xff]
      %v1252 = vld [vmem:[%s397 + $0x30] sm:$0xff]
      %v1253 = vld [vmem:[%s397 + $0x38] sm:$0xff]
      %v1254 = vld [vmem:[%s397 + $0x48] sm:$0xff]
      %v1255 = vld [vmem:[%s397 + $0x50] sm:$0xff]
      %v1256 = vld [vmem:[%s397 + $0x60] sm:$0xff]
      %v1257 = vld [vmem:[%s397 + $0x68] sm:$0xff]
      %v1258 = vld [vmem:[%s397 + $0x78] sm:$0xff]
      %v1259 = vld [vmem:[%s397 + $0x80] sm:$0xff]
      %v1260 = vld [vmem:[%s397 + $0x90] sm:$0xff]
      %v1261 = vld [vmem:[%s397 + $0x98] sm:$0xff]
      %v1262 = vld [vmem:[%s397 + $0xa8] sm:$0xff]
      %v1263 = vld [vmem:[%s397 + $0xb0] sm:$0xff]
      %v1264 = vld [vmem:[%s397 + $0xc0] sm:$0xff]
      %v1265 = vld [vmem:[%s397 + $0xc8] sm:$0xff]
      %v1266 = vld [vmem:[%s397 + $0xd8] sm:$0xff]
      %v1267 = vld [vmem:[%s397 + $0xe0] sm:$0xff]
      %v1268 = vld [vmem:[%s397 + $0xf0] sm:$0xff]
      %v1269 = vld [vmem:[%s397 + $0xf8] sm:$0xff]
      %v1270 = vld [vmem:[%s397 + $0x108] sm:$0xff]
      %v1271 = vld [vmem:[%s397 + $0x110] sm:$0xff]
      %v1272 = vld [vmem:[%s397 + $0x120] sm:$0xff]
      %v1273 = vld [vmem:[%s397 + $0x128] sm:$0xff]
      %v1274 = vld [vmem:[%s397 + $0x138] sm:$0xff]
      %v1275 = vld [vmem:[%s397 + $0x140] sm:$0xff]
      %v1276 = vld [vmem:[%s397 + $0x150] sm:$0xff]
      %v1277 = vld [vmem:[%s397 + $0x158] sm:$0xff]
      %v1278 = vld [vmem:[%s397 + $0x168] sm:$0xff]
      %v1279 = vld [vmem:[%s397 + $0x170] sm:$0xff]
      %v1280 = vpack.c.bf16 %v1249, %v1248
      %v1281 = vpack.c.bf16 %v1251, %v1250
      %v1282 = vpack.c.bf16 %v1253, %v1252
      %v1283 = vpack.c.bf16 %v1255, %v1254
      %v1284 = vpack.c.bf16 %v1257, %v1256
      %v1285 = vpack.c.bf16 %v1259, %v1258
      %v1286 = vpack.c.bf16 %v1261, %v1260
      %v1287 = vpack.c.bf16 %v1263, %v1262
      %v1288 = vpack.c.bf16 %v1265, %v1264
      %v1289 = vpack.c.bf16 %v1267, %v1266
      %v1290 = vpack.c.bf16 %v1269, %v1268
      %v1291 = vpack.c.bf16 %v1271, %v1270
      %v1292 = vpack.c.bf16 %v1273, %v1272
      %v1293 = vpack.c.bf16 %v1275, %v1274
      %v1294 = vpack.c.bf16 %v1277, %v1276
      %v1295 = vpack.c.bf16 %v1279, %v1278
      %s1296 = scalar_lea.vmem %s3, 6
      %v1297 = vld [vmem:[%s1296] sm:$0x3]
      %v1299 = vsel %vm341, %v1280, 0
      %v1302 = vsel %vm341, %v1281, 0
      %v1305 = vsel %vm341, %v1282, 0
      %v1308 = vsel %vm341, %v1283, 0
      %v1311 = vsel %vm341, %v1284, 0
      %v1314 = vsel %vm341, %v1285, 0
      %v1317 = vsel %vm341, %v1286, 0
      %v1320 = vsel %vm341, %v1287, 0
      %v1323 = vsel %vm341, %v1288, 0
      %v1326 = vsel %vm341, %v1289, 0
      %v1329 = vsel %vm341, %v1290, 0
      %v1332 = vsel %vm341, %v1291, 0
      %v1335 = vsel %vm341, %v1292, 0
      %v1338 = vsel %vm341, %v1293, 0
      %v1341 = vsel %vm341, %v1294, 0
      %v1344 = vsel %vm341, %v1295, 0
      %v1347 = vsel %vm577, %v1297, 0
      %1349 = vmatprep.subr.bf16.mxu0 0
      %1350 = vmatpush1.bf16.msra.mxu0 %v1347
      %1351 = vmatprep.subr.bf16.mxu0 0
      %1352 = vmatpush1.bf16.msra.mxu0 0
      %1353 = vmatprep.subr.bf16.mxu0 0
      %1354 = vmatpush1.bf16.msra.mxu0 0
      %1355 = vmatprep.subr.bf16.mxu0 0
      %1356 = vmatpush1.bf16.msra.mxu0 0
      %1357 = vmatprep.subr.bf16.mxu0 0
      %1358 = vmatpush1.bf16.msra.mxu0 0
      %1359 = vmatprep.subr.bf16.mxu0 0
      %1360 = vmatpush1.bf16.msra.mxu0 0
      %1361 = vmatprep.subr.bf16.mxu0 0
      %1362 = vmatpush1.bf16.msra.mxu0 0
      %1363 = vmatprep.subr.bf16.mxu0 0
      %1364 = vmatpush1.bf16.msra.mxu0 0
      %1365 = vmatprep.subr.bf16.mxu0 0
      %1366 = vmatpush1.bf16.msra.mxu0 0
      %1367 = vmatprep.subr.bf16.mxu0 0
      %1368 = vmatpush1.bf16.msra.mxu0 0
      %1369 = vmatprep.subr.bf16.mxu0 0
      %1370 = vmatpush1.bf16.msra.mxu0 0
      %1371 = vmatprep.subr.bf16.mxu0 0
      %1372 = vmatpush1.bf16.msra.mxu0 0
      %1373 = vmatprep.subr.bf16.mxu0 0
      %1374 = vmatpush1.bf16.msra.mxu0 0
      %1375 = vmatprep.subr.bf16.mxu0 0
      %1376 = vmatpush1.bf16.msra.mxu0 0
      %1377 = vmatprep.subr.bf16.mxu0 0
      %1378 = vmatpush1.bf16.msra.mxu0 0
      %1379 = vmatprep.subr.bf16.mxu0 0
      %1380 = vmatpush1.bf16.msra.mxu0 0
      %1381 = vmatprep.mubr.bf16.mxu0 0
      %1382 = vmatmul.mubr.bf16.gmra.mrb[0].mxu0 %v1299
      %v1383 = vpop.f32.mrb[0].mxu0
      %v1384 = vadd.f32 0.0, %v1383
      %v1385 = vpop.f32.mrb[0].mxu0
      %v1386 = vpop.f32.mrb[0].mxu0
      %v1387 = vadd.f32 0.0, %v1386
      %v1388 = vpop.f32.mrb[0].mxu0
      %1389 = vmatprep.mubr.bf16.mxu0 0
      %1390 = vmatmul.mubr.bf16.gmra.mrb[0].mxu0 %v1302
      %v1391 = vpop.f32.mrb[0].mxu0
      %v1392 = vadd.f32 0.0, %v1391
      %v1393 = vpop.f32.mrb[0].mxu0
      %v1394 = vpop.f32.mrb[0].mxu0
      %v1395 = vadd.f32 0.0, %v1394
      %v1396 = vpop.f32.mrb[0].mxu0
      %1397 = vmatprep.mubr.bf16.mxu0 0
      %1398 = vmatmul.mubr.bf16.gmra.mrb[0].mxu0 %v1305
      %v1399 = vpop.f32.mrb[0].mxu0
      %v1400 = vadd.f32 0.0, %v1399
      %v1401 = vpop.f32.mrb[0].mxu0
      %v1402 = vpop.f32.mrb[0].mxu0
      %v1403 = vadd.f32 0.0, %v1402
      %v1404 = vpop.f32.mrb[0].mxu0
      %1405 = vmatprep.mubr.bf16.mxu0 0
      %1406 = vmatmul.mubr.bf16.gmra.mrb[0].mxu0 %v1308
      %v1407 = vpop.f32.mrb[0].mxu0
      %v1408 = vadd.f32 0.0, %v1407
      %v1409 = vpop.f32.mrb[0].mxu0
      %v1410 = vpop.f32.mrb[0].mxu0
      %v1411 = vadd.f32 0.0, %v1410
      %v1412 = vpop.f32.mrb[0].mxu0
      %1413 = vmatprep.mubr.bf16.mxu0 0
      %1414 = vmatmul.mubr.bf16.gmra.mrb[0].mxu0 %v1311
      %v1415 = vpop.f32.mrb[0].mxu0
      %v1416 = vadd.f32 0.0, %v1415
      %v1417 = vpop.f32.mrb[0].mxu0
      %v1418 = vpop.f32.mrb[0].mxu0
      %v1419 = vadd.f32 0.0, %v1418
      %v1420 = vpop.f32.mrb[0].mxu0
      %1421 = vmatprep.mubr.bf16.mxu0 0
      %1422 = vmatmul.mubr.bf16.gmra.mrb[0].mxu0 %v1314
      %v1423 = vpop.f32.mrb[0].mxu0
      %v1424 = vadd.f32 0.0, %v1423
      %v1425 = vpop.f32.mrb[0].mxu0
      %v1426 = vpop.f32.mrb[0].mxu0
      %v1427 = vadd.f32 0.0, %v1426
      %v1428 = vpop.f32.mrb[0].mxu0
      %1429 = vmatprep.mubr.bf16.mxu0 0
      %1430 = vmatmul.mubr.bf16.gmra.mrb[0].mxu0 %v1317
      %v1431 = vpop.f32.mrb[0].mxu0
      %v1432 = vadd.f32 0.0, %v1431
      %v1433 = vpop.f32.mrb[0].mxu0
      %v1434 = vpop.f32.mrb[0].mxu0
      %v1435 = vadd.f32 0.0, %v1434
      %v1436 = vpop.f32.mrb[0].mxu0
      %1437 = vmatprep.mubr.bf16.mxu0 0
      %1438 = vmatmul.mubr.bf16.gmra.mrb[0].mxu0 %v1320
      %v1439 = vpop.f32.mrb[0].mxu0
      %v1440 = vadd.f32 0.0, %v1439
      %v1441 = vpop.f32.mrb[0].mxu0
      %v1442 = vpop.f32.mrb[0].mxu0
      %v1443 = vadd.f32 0.0, %v1442
      %v1444 = vpop.f32.mrb[0].mxu0
      %1445 = vmatprep.mubr.bf16.mxu0 0
      %1446 = vmatmul.mubr.bf16.gmra.mrb[0].mxu0 %v1323
      %v1447 = vpop.f32.mrb[0].mxu0
      %v1448 = vadd.f32 0.0, %v1447
      %v1449 = vpop.f32.mrb[0].mxu0
      %v1450 = vpop.f32.mrb[0].mxu0
      %v1451 = vadd.f32 0.0, %v1450
      %v1452 = vpop.f32.mrb[0].mxu0
      %1453 = vmatprep.mubr.bf16.mxu0 0
      %1454 = vmatmul.mubr.bf16.gmra.mrb[0].mxu0 %v1326
      %v1455 = vpop.f32.mrb[0].mxu0
      %v1456 = vadd.f32 0.0, %v1455
      %v1457 = vpop.f32.mrb[0].mxu0
      %v1458 = vpop.f32.mrb[0].mxu0
      %v1459 = vadd.f32 0.0, %v1458
      %v1460 = vpop.f32.mrb[0].mxu0
      %1461 = vmatprep.mubr.bf16.mxu0 0
      %1462 = vmatmul.mubr.bf16.gmra.mrb[0].mxu0 %v1329
      %v1463 = vpop.f32.mrb[0].mxu0
      %v1464 = vadd.f32 0.0, %v1463
      %v1465 = vpop.f32.mrb[0].mxu0
      %v1466 = vpop.f32.mrb[0].mxu0
      %v1467 = vadd.f32 0.0, %v1466
      %v1468 = vpop.f32.mrb[0].mxu0
      %1469 = vmatprep.mubr.bf16.mxu0 0
      %1470 = vmatmul.mubr.bf16.gmra.mrb[0].mxu0 %v1332
      %v1471 = vpop.f32.mrb[0].mxu0
      %v1472 = vadd.f32 0.0, %v1471
      %v1473 = vpop.f32.mrb[0].mxu0
      %v1474 = vpop.f32.mrb[0].mxu0
      %v1475 = vadd.f32 0.0, %v1474
      %v1476 = vpop.f32.mrb[0].mxu0
      %1477 = vmatprep.mubr.bf16.mxu0 0
      %1478 = vmatmul.mubr.bf16.gmra.mrb[0].mxu0 %v1335
      %v1479 = vpop.f32.mrb[0].mxu0
      %v1480 = vadd.f32 0.0, %v1479
      %v1481 = vpop.f32.mrb[0].mxu0
      %v1482 = vpop.f32.mrb[0].mxu0
      %v1483 = vadd.f32 0.0, %v1482
      %v1484 = vpop.f32.mrb[0].mxu0
      %1485 = vmatprep.mubr.bf16.mxu0 0
      %1486 = vmatmul.mubr.bf16.gmra.mrb[0].mxu0 %v1338
      %v1487 = vpop.f32.mrb[0].mxu0
      %v1488 = vadd.f32 0.0, %v1487
      %v1489 = vpop.f32.mrb[0].mxu0
      %v1490 = vpop.f32.mrb[0].mxu0
      %v1491 = vadd.f32 0.0, %v1490
      %v1492 = vpop.f32.mrb[0].mxu0
      %1493 = vmatprep.mubr.bf16.mxu0 0
      %1494 = vmatmul.mubr.bf16.gmra.mrb[0].mxu0 %v1341
      %v1495 = vpop.f32.mrb[0].mxu0
      %v1496 = vadd.f32 0.0, %v1495
      %v1497 = vpop.f32.mrb[0].mxu0
      %v1498 = vpop.f32.mrb[0].mxu0
      %v1499 = vadd.f32 0.0, %v1498
      %v1500 = vpop.f32.mrb[0].mxu0
      %1501 = vmatprep.mubr.bf16.mxu0 0
      %1502 = vmatmul.mubr.bf16.gmra.mrb[0].mxu0 %v1344
      %v1503 = vpop.f32.mrb[0].mxu0
      %v1504 = vadd.f32 0.0, %v1503
      %v1505 = vpop.f32.mrb[0].mxu0
      %v1506 = vpop.f32.mrb[0].mxu0
      %v1507 = vadd.f32 0.0, %v1506
      %v1508 = vpop.f32.mrb[0].mxu0
      %1509 = vdwg.mxu0
      %v1510 = vadd.f32 %v1216, %v1384
      %v1511 = vadd.f32 %v1217, %v1387
      %v1512 = vadd.f32 %v1218, %v1392
      %v1513 = vadd.f32 %v1219, %v1395
      %v1514 = vadd.f32 %v1220, %v1400
      %v1515 = vadd.f32 %v1221, %v1403
      %v1516 = vadd.f32 %v1222, %v1408
      %v1517 = vadd.f32 %v1223, %v1411
      %v1518 = vadd.f32 %v1224, %v1416
      %v1519 = vadd.f32 %v1225, %v1419
      %v1520 = vadd.f32 %v1226, %v1424
      %v1521 = vadd.f32 %v1227, %v1427
      %v1522 = vadd.f32 %v1228, %v1432
      %v1523 = vadd.f32 %v1229, %v1435
      %v1524 = vadd.f32 %v1230, %v1440
      %v1525 = vadd.f32 %v1231, %v1443
      %v1526 = vadd.f32 %v1232, %v1448
      %v1527 = vadd.f32 %v1233, %v1451
      %v1528 = vadd.f32 %v1234, %v1456
      %v1529 = vadd.f32 %v1235, %v1459
      %v1530 = vadd.f32 %v1236, %v1464
      %v1531 = vadd.f32 %v1237, %v1467
      %v1532 = vadd.f32 %v1238, %v1472
      %v1533 = vadd.f32 %v1239, %v1475
      %v1534 = vadd.f32 %v1240, %v1480
      %v1535 = vadd.f32 %v1241, %v1483
      %v1536 = vadd.f32 %v1242, %v1488
      %v1537 = vadd.f32 %v1243, %v1491
      %v1538 = vadd.f32 %v1244, %v1496
      %v1539 = vadd.f32 %v1245, %v1499
      %v1540 = vadd.f32 %v1246, %v1504
      %v1541 = vadd.f32 %v1247, %v1507
      %v1542 = vld [vmem:[%s397 + $0x1] sm:$0xff]
      %v1543 = vld [vmem:[%s397 + $0x9] sm:$0xff]
      %v1544 = vld [vmem:[%s397 + $0x19] sm:$0xff]
      %v1545 = vld [vmem:[%s397 + $0x21] sm:$0xff]
      %v1546 = vld [vmem:[%s397 + $0x31] sm:$0xff]
      %v1547 = vld [vmem:[%s397 + $0x39] sm:$0xff]
      %v1548 = vld [vmem:[%s397 + $0x49] sm:$0xff]
      %v1549 = vld [vmem:[%s397 + $0x51] sm:$0xff]
      %v1550 = vld [vmem:[%s397 + $0x61] sm:$0xff]
      %v1551 = vld [vmem:[%s397 + $0x69] sm:$0xff]
      %v1552 = vld [vmem:[%s397 + $0x79] sm:$0xff]
      %v1553 = vld [vmem:[%s397 + $0x81] sm:$0xff]
      %v1554 = vld [vmem:[%s397 + $0x91] sm:$0xff]
      %v1555 = vld [vmem:[%s397 + $0x99] sm:$0xff]
      %v1556 = vld [vmem:[%s397 + $0xa9] sm:$0xff]
      %v1557 = vld [vmem:[%s397 + $0xb1] sm:$0xff]
      %v1558 = vld [vmem:[%s397 + $0xc1] sm:$0xff]
      %v1559 = vld [vmem:[%s397 + $0xc9] sm:$0xff]
      %v1560 = vld [vmem:[%s397 + $0xd9] sm:$0xff]
      %v1561 = vld [vmem:[%s397 + $0xe1] sm:$0xff]
      %v1562 = vld [vmem:[%s397 + $0xf1] sm:$0xff]
      %v1563 = vld [vmem:[%s397 + $0xf9] sm:$0xff]
      %v1564 = vld [vmem:[%s397 + $0x109] sm:$0xff]
      %v1565 = vld [vmem:[%s397 + $0x111] sm:$0xff]
      %v1566 = vld [vmem:[%s397 + $0x121] sm:$0xff]
      %v1567 = vld [vmem:[%s397 + $0x129] sm:$0xff]
      %v1568 = vld [vmem:[%s397 + $0x139] sm:$0xff]
      %v1569 = vld [vmem:[%s397 + $0x141] sm:$0xff]
      %v1570 = vld [vmem:[%s397 + $0x151] sm:$0xff]
      %v1571 = vld [vmem:[%s397 + $0x159] sm:$0xff]
      %v1572 = vld [vmem:[%s397 + $0x169] sm:$0xff]
      %v1573 = vld [vmem:[%s397 + $0x171] sm:$0xff]
      %v1574 = vpack.c.bf16 %v1543, %v1542
      %v1575 = vpack.c.bf16 %v1545, %v1544
      %v1576 = vpack.c.bf16 %v1547, %v1546
      %v1577 = vpack.c.bf16 %v1549, %v1548
      %v1578 = vpack.c.bf16 %v1551, %v1550
      %v1579 = vpack.c.bf16 %v1553, %v1552
      %v1580 = vpack.c.bf16 %v1555, %v1554
      %v1581 = vpack.c.bf16 %v1557, %v1556
      %v1582 = vpack.c.bf16 %v1559, %v1558
      %v1583 = vpack.c.bf16 %v1561, %v1560
      %v1584 = vpack.c.bf16 %v1563, %v1562
      %v1585 = vpack.c.bf16 %v1565, %v1564
      %v1586 = vpack.c.bf16 %v1567, %v1566
      %v1587 = vpack.c.bf16 %v1569, %v1568
      %v1588 = vpack.c.bf16 %v1571, %v1570
      %v1589 = vpack.c.bf16 %v1573, %v1572
      %s1590 = scalar_lea.vmem %s3, 8
      %v1591 = vld [vmem:[%s1590] sm:$0x3]
      %v1593 = vsel %vm341, %v1574, 0
      %v1596 = vsel %vm341, %v1575, 0
      %v1599 = vsel %vm341, %v1576, 0
      %v1602 = vsel %vm341, %v1577, 0
      %v1605 = vsel %vm341, %v1578, 0
      %v1608 = vsel %vm341, %v1579, 0
      %v1611 = vsel %vm341, %v1580, 0
      %v1614 = vsel %vm341, %v1581, 0
      %v1617 = vsel %vm341, %v1582, 0
      %v1620 = vsel %vm341, %v1583, 0
      %v1623 = vsel %vm341, %v1584, 0
      %v1626 = vsel %vm341, %v1585, 0
      %v1629 = vsel %vm341, %v1586, 0
      %v1632 = vsel %vm341, %v1587, 0
      %v1635 = vsel %vm341, %v1588, 0
      %v1638 = vsel %vm341, %v1589, 0
      %v1641 = vsel %vm577, %v1591, 0
      %1643 = vmatprep.subr.bf16.mxu0 0
      %1644 = vmatpush1.bf16.msra.mxu0 %v1641
      %1645 = vmatprep.subr.bf16.mxu0 0
      %1646 = vmatpush1.bf16.msra.mxu0 0
      %1647 = vmatprep.subr.bf16.mxu0 0
      %1648 = vmatpush1.bf16.msra.mxu0 0
      %1649 = vmatprep.subr.bf16.mxu0 0
      %1650 = vmatpush1.bf16.msra.mxu0 0
      %1651 = vmatprep.subr.bf16.mxu0 0
      %1652 = vmatpush1.bf16.msra.mxu0 0
      %1653 = vmatprep.subr.bf16.mxu0 0
      %1654 = vmatpush1.bf16.msra.mxu0 0
      %1655 = vmatprep.subr.bf16.mxu0 0
      %1656 = vmatpush1.bf16.msra.mxu0 0
      %1657 = vmatprep.subr.bf16.mxu0 0
      %1658 = vmatpush1.bf16.msra.mxu0 0
      %1659 = vmatprep.subr.bf16.mxu0 0
      %1660 = vmatpush1.bf16.msra.mxu0 0
      %1661 = vmatprep.subr.bf16.mxu0 0
      %1662 = vmatpush1.bf16.msra.mxu0 0
      %1663 = vmatprep.subr.bf16.mxu0 0
      %1664 = vmatpush1.bf16.msra.mxu0 0
      %1665 = vmatprep.subr.bf16.mxu0 0
      %1666 = vmatpush1.bf16.msra.mxu0 0
      %1667 = vmatprep.subr.bf16.mxu0 0
      %1668 = vmatpush1.bf16.msra.mxu0 0
      %1669 = vmatprep.subr.bf16.mxu0 0
      %1670 = vmatpush1.bf16.msra.mxu0 0
      %1671 = vmatprep.subr.bf16.mxu0 0
      %1672 = vmatpush1.bf16.msra.mxu0 0
      %1673 = vmatprep.subr.bf16.mxu0 0
      %1674 = vmatpush1.bf16.msra.mxu0 0
      %1675 = vmatprep.mubr.bf16.mxu0 0
      %1676 = vmatmul.mubr.bf16.gmra.mrb[0].mxu0 %v1593
      %v1677 = vpop.f32.mrb[0].mxu0
      %v1678 = vadd.f32 0.0, %v1677
      %v1679 = vpop.f32.mrb[0].mxu0
      %v1680 = vpop.f32.mrb[0].mxu0
      %v1681 = vadd.f32 0.0, %v1680
      %v1682 = vpop.f32.mrb[0].mxu0
      %1683 = vmatprep.mubr.bf16.mxu0 0
      %1684 = vmatmul.mubr.bf16.gmra.mrb[0].mxu0 %v1596
      %v1685 = vpop.f32.mrb[0].mxu0
      %v1686 = vadd.f32 0.0, %v1685
      %v1687 = vpop.f32.mrb[0].mxu0
      %v1688 = vpop.f32.mrb[0].mxu0
      %v1689 = vadd.f32 0.0, %v1688
      %v1690 = vpop.f32.mrb[0].mxu0
      %1691 = vmatprep.mubr.bf16.mxu0 0
      %1692 = vmatmul.mubr.bf16.gmra.mrb[0].mxu0 %v1599
      %v1693 = vpop.f32.mrb[0].mxu0
      %v1694 = vadd.f32 0.0, %v1693
      %v1695 = vpop.f32.mrb[0].mxu0
      %v1696 = vpop.f32.mrb[0].mxu0
      %v1697 = vadd.f32 0.0, %v1696
      %v1698 = vpop.f32.mrb[0].mxu0
      %1699 = vmatprep.mubr.bf16.mxu0 0
      %1700 = vmatmul.mubr.bf16.gmra.mrb[0].mxu0 %v1602
      %v1701 = vpop.f32.mrb[0].mxu0
      %v1702 = vadd.f32 0.0, %v1701
      %v1703 = vpop.f32.mrb[0].mxu0
      %v1704 = vpop.f32.mrb[0].mxu0
      %v1705 = vadd.f32 0.0, %v1704
      %v1706 = vpop.f32.mrb[0].mxu0
      %1707 = vmatprep.mubr.bf16.mxu0 0
      %1708 = vmatmul.mubr.bf16.gmra.mrb[0].mxu0 %v1605
      %v1709 = vpop.f32.mrb[0].mxu0
      %v1710 = vadd.f32 0.0, %v1709
      %v1711 = vpop.f32.mrb[0].mxu0
      %v1712 = vpop.f32.mrb[0].mxu0
      %v1713 = vadd.f32 0.0, %v1712
      %v1714 = vpop.f32.mrb[0].mxu0
      %1715 = vmatprep.mubr.bf16.mxu0 0
      %1716 = vmatmul.mubr.bf16.gmra.mrb[0].mxu0 %v1608
      %v1717 = vpop.f32.mrb[0].mxu0
      %v1718 = vadd.f32 0.0, %v1717
      %v1719 = vpop.f32.mrb[0].mxu0
      %v1720 = vpop.f32.mrb[0].mxu0
      %v1721 = vadd.f32 0.0, %v1720
      %v1722 = vpop.f32.mrb[0].mxu0
      %1723 = vmatprep.mubr.bf16.mxu0 0
      %1724 = vmatmul.mubr.bf16.gmra.mrb[0].mxu0 %v1611
      %v1725 = vpop.f32.mrb[0].mxu0
      %v1726 = vadd.f32 0.0, %v1725
      %v1727 = vpop.f32.mrb[0].mxu0
      %v1728 = vpop.f32.mrb[0].mxu0
      %v1729 = vadd.f32 0.0, %v1728
      %v1730 = vpop.f32.mrb[0].mxu0
      %1731 = vmatprep.mubr.bf16.mxu0 0
      %1732 = vmatmul.mubr.bf16.gmra.mrb[0].mxu0 %v1614
      %v1733 = vpop.f32.mrb[0].mxu0
      %v1734 = vadd.f32 0.0, %v1733
      %v1735 = vpop.f32.mrb[0].mxu0
      %v1736 = vpop.f32.mrb[0].mxu0
      %v1737 = vadd.f32 0.0, %v1736
      %v1738 = vpop.f32.mrb[0].mxu0
      %1739 = vmatprep.mubr.bf16.mxu0 0
      %1740 = vmatmul.mubr.bf16.gmra.mrb[0].mxu0 %v1617
      %v1741 = vpop.f32.mrb[0].mxu0
      %v1742 = vadd.f32 0.0, %v1741
      %v1743 = vpop.f32.mrb[0].mxu0
      %v1744 = vpop.f32.mrb[0].mxu0
      %v1745 = vadd.f32 0.0, %v1744
      %v1746 = vpop.f32.mrb[0].mxu0
      %1747 = vmatprep.mubr.bf16.mxu0 0
      %1748 = vmatmul.mubr.bf16.gmra.mrb[0].mxu0 %v1620
      %v1749 = vpop.f32.mrb[0].mxu0
      %v1750 = vadd.f32 0.0, %v1749
      %v1751 = vpop.f32.mrb[0].mxu0
      %v1752 = vpop.f32.mrb[0].mxu0
      %v1753 = vadd.f32 0.0, %v1752
      %v1754 = vpop.f32.mrb[0].mxu0
      %1755 = vmatprep.mubr.bf16.mxu0 0
      %1756 = vmatmul.mubr.bf16.gmra.mrb[0].mxu0 %v1623
      %v1757 = vpop.f32.mrb[0].mxu0
      %v1758 = vadd.f32 0.0, %v1757
      %v1759 = vpop.f32.mrb[0].mxu0
      %v1760 = vpop.f32.mrb[0].mxu0
      %v1761 = vadd.f32 0.0, %v1760
      %v1762 = vpop.f32.mrb[0].mxu0
      %1763 = vmatprep.mubr.bf16.mxu0 0
      %1764 = vmatmul.mubr.bf16.gmra.mrb[0].mxu0 %v1626
      %v1765 = vpop.f32.mrb[0].mxu0
      %v1766 = vadd.f32 0.0, %v1765
      %v1767 = vpop.f32.mrb[0].mxu0
      %v1768 = vpop.f32.mrb[0].mxu0
      %v1769 = vadd.f32 0.0, %v1768
      %v1770 = vpop.f32.mrb[0].mxu0
      %1771 = vmatprep.mubr.bf16.mxu0 0
      %1772 = vmatmul.mubr.bf16.gmra.mrb[0].mxu0 %v1629
      %v1773 = vpop.f32.mrb[0].mxu0
      %v1774 = vadd.f32 0.0, %v1773
      %v1775 = vpop.f32.mrb[0].mxu0
      %v1776 = vpop.f32.mrb[0].mxu0
      %v1777 = vadd.f32 0.0, %v1776
      %v1778 = vpop.f32.mrb[0].mxu0
      %1779 = vmatprep.mubr.bf16.mxu0 0
      %1780 = vmatmul.mubr.bf16.gmra.mrb[0].mxu0 %v1632
      %v1781 = vpop.f32.mrb[0].mxu0
      %v1782 = vadd.f32 0.0, %v1781
      %v1783 = vpop.f32.mrb[0].mxu0
      %v1784 = vpop.f32.mrb[0].mxu0
      %v1785 = vadd.f32 0.0, %v1784
      %v1786 = vpop.f32.mrb[0].mxu0
      %1787 = vmatprep.mubr.bf16.mxu0 0
      %1788 = vmatmul.mubr.bf16.gmra.mrb[0].mxu0 %v1635
      %v1789 = vpop.f32.mrb[0].mxu0
      %v1790 = vadd.f32 0.0, %v1789
      %v1791 = vpop.f32.mrb[0].mxu0
      %v1792 = vpop.f32.mrb[0].mxu0
      %v1793 = vadd.f32 0.0, %v1792
      %v1794 = vpop.f32.mrb[0].mxu0
      %1795 = vmatprep.mubr.bf16.mxu0 0
      %1796 = vmatmul.mubr.bf16.gmra.mrb[0].mxu0 %v1638
      %v1797 = vpop.f32.mrb[0].mxu0
      %v1798 = vadd.f32 0.0, %v1797
      %v1799 = vpop.f32.mrb[0].mxu0
      %v1800 = vpop.f32.mrb[0].mxu0
      %v1801 = vadd.f32 0.0, %v1800
      %v1802 = vpop.f32.mrb[0].mxu0
      %1803 = vdwg.mxu0
      %v1804 = vadd.f32 %v1510, %v1678
      %v1805 = vadd.f32 %v1511, %v1681
      %v1806 = vadd.f32 %v1512, %v1686
      %v1807 = vadd.f32 %v1513, %v1689
      %v1808 = vadd.f32 %v1514, %v1694
      %v1809 = vadd.f32 %v1515, %v1697
      %v1810 = vadd.f32 %v1516, %v1702
      %v1811 = vadd.f32 %v1517, %v1705
      %v1812 = vadd.f32 %v1518, %v1710
      %v1813 = vadd.f32 %v1519, %v1713
      %v1814 = vadd.f32 %v1520, %v1718
      %v1815 = vadd.f32 %v1521, %v1721
      %v1816 = vadd.f32 %v1522, %v1726
      %v1817 = vadd.f32 %v1523, %v1729
      %v1818 = vadd.f32 %v1524, %v1734
      %v1819 = vadd.f32 %v1525, %v1737
      %v1820 = vadd.f32 %v1526, %v1742
      %v1821 = vadd.f32 %v1527, %v1745
      %v1822 = vadd.f32 %v1528, %v1750
      %v1823 = vadd.f32 %v1529, %v1753
      %v1824 = vadd.f32 %v1530, %v1758
      %v1825 = vadd.f32 %v1531, %v1761
      %v1826 = vadd.f32 %v1532, %v1766
      %v1827 = vadd.f32 %v1533, %v1769
      %v1828 = vadd.f32 %v1534, %v1774
      %v1829 = vadd.f32 %v1535, %v1777
      %v1830 = vadd.f32 %v1536, %v1782
      %v1831 = vadd.f32 %v1537, %v1785
      %v1832 = vadd.f32 %v1538, %v1790
      %v1833 = vadd.f32 %v1539, %v1793
      %v1834 = vadd.f32 %v1540, %v1798
      %v1835 = vadd.f32 %v1541, %v1801
      %v1836 = vld [vmem:[%s397 + $0x2] sm:$0xff]
      %v1837 = vld [vmem:[%s397 + $0xa] sm:$0xff]
      %v1838 = vld [vmem:[%s397 + $0x1a] sm:$0xff]
      %v1839 = vld [vmem:[%s397 + $0x22] sm:$0xff]
      %v1840 = vld [vmem:[%s397 + $0x32] sm:$0xff]
      %v1841 = vld [vmem:[%s397 + $0x3a] sm:$0xff]
      %v1842 = vld [vmem:[%s397 + $0x4a] sm:$0xff]
      %v1843 = vld [vmem:[%s397 + $0x52] sm:$0xff]
      %v1844 = vld [vmem:[%s397 + $0x62] sm:$0xff]
      %v1845 = vld [vmem:[%s397 + $0x6a] sm:$0xff]
      %v1846 = vld [vmem:[%s397 + $0x7a] sm:$0xff]
      %v1847 = vld [vmem:[%s397 + $0x82] sm:$0xff]
      %v1848 = vld [vmem:[%s397 + $0x92] sm:$0xff]
      %v1849 = vld [vmem:[%s397 + $0x9a] sm:$0xff]
      %v1850 = vld [vmem:[%s397 + $0xaa] sm:$0xff]
      %v1851 = vld [vmem:[%s397 + $0xb2] sm:$0xff]
      %v1852 = vld [vmem:[%s397 + $0xc2] sm:$0xff]
      %v1853 = vld [vmem:[%s397 + $0xca] sm:$0xff]
      %v1854 = vld [vmem:[%s397 + $0xda] sm:$0xff]
      %v1855 = vld [vmem:[%s397 + $0xe2] sm:$0xff]
      %v1856 = vld [vmem:[%s397 + $0xf2] sm:$0xff]
      %v1857 = vld [vmem:[%s397 + $0xfa] sm:$0xff]
      %v1858 = vld [vmem:[%s397 + $0x10a] sm:$0xff]
      %v1859 = vld [vmem:[%s397 + $0x112] sm:$0xff]
      %v1860 = vld [vmem:[%s397 + $0x122] sm:$0xff]
      %v1861 = vld [vmem:[%s397 + $0x12a] sm:$0xff]
      %v1862 = vld [vmem:[%s397 + $0x13a] sm:$0xff]
      %v1863 = vld [vmem:[%s397 + $0x142] sm:$0xff]
      %v1864 = vld [vmem:[%s397 + $0x152] sm:$0xff]
      %v1865 = vld [vmem:[%s397 + $0x15a] sm:$0xff]
      %v1866 = vld [vmem:[%s397 + $0x16a] sm:$0xff]
      %v1867 = vld [vmem:[%s397 + $0x172] sm:$0xff]
      %v1868 = vpack.c.bf16 %v1837, %v1836
      %v1869 = vpack.c.bf16 %v1839, %v1838
      %v1870 = vpack.c.bf16 %v1841, %v1840
      %v1871 = vpack.c.bf16 %v1843, %v1842
      %v1872 = vpack.c.bf16 %v1845, %v1844
      %v1873 = vpack.c.bf16 %v1847, %v1846
      %v1874 = vpack.c.bf16 %v1849, %v1848
      %v1875 = vpack.c.bf16 %v1851, %v1850
      %v1876 = vpack.c.bf16 %v1853, %v1852
      %v1877 = vpack.c.bf16 %v1855, %v1854
      %v1878 = vpack.c.bf16 %v1857, %v1856
      %v1879 = vpack.c.bf16 %v1859, %v1858
      %v1880 = vpack.c.bf16 %v1861, %v1860
      %v1881 = vpack.c.bf16 %v1863, %v1862
      %v1882 = vpack.c.bf16 %v1865, %v1864
      %v1883 = vpack.c.bf16 %v1867, %v1866
      %s1884 = scalar_lea.vmem %s3, 10
      %v1885 = vld [vmem:[%s1884] sm:$0x3]
      %v1887 = vsel %vm341, %v1868, 0
      %v1890 = vsel %vm341, %v1869, 0
      %v1893 = vsel %vm341, %v1870, 0
      %v1896 = vsel %vm341, %v1871, 0
      %v1899 = vsel %vm341, %v1872, 0
      %v1902 = vsel %vm341, %v1873, 0
      %v1905 = vsel %vm341, %v1874, 0
      %v1908 = vsel %vm341, %v1875, 0
      %v1911 = vsel %vm341, %v1876, 0
      %v1914 = vsel %vm341, %v1877, 0
      %v1917 = vsel %vm341, %v1878, 0
      %v1920 = vsel %vm341, %v1879, 0
      %v1923 = vsel %vm341, %v1880, 0
      %v1926 = vsel %vm341, %v1881, 0
      %v1929 = vsel %vm341, %v1882, 0
      %v1932 = vsel %vm341, %v1883, 0
      %v1935 = vsel %vm577, %v1885, 0
      %1937 = vmatprep.subr.bf16.mxu0 0
      %1938 = vmatpush1.bf16.msra.mxu0 %v1935
      %1939 = vmatprep.subr.bf16.mxu0 0
      %1940 = vmatpush1.bf16.msra.mxu0 0
      %1941 = vmatprep.subr.bf16.mxu0 0
      %1942 = vmatpush1.bf16.msra.mxu0 0
      %1943 = vmatprep.subr.bf16.mxu0 0
      %1944 = vmatpush1.bf16.msra.mxu0 0
      %1945 = vmatprep.subr.bf16.mxu0 0
      %1946 = vmatpush1.bf16.msra.mxu0 0
      %1947 = vmatprep.subr.bf16.mxu0 0
      %1948 = vmatpush1.bf16.msra.mxu0 0
      %1949 = vmatprep.subr.bf16.mxu0 0
      %1950 = vmatpush1.bf16.msra.mxu0 0
      %1951 = vmatprep.subr.bf16.mxu0 0
      %1952 = vmatpush1.bf16.msra.mxu0 0
      %1953 = vmatprep.subr.bf16.mxu0 0
      %1954 = vmatpush1.bf16.msra.mxu0 0
      %1955 = vmatprep.subr.bf16.mxu0 0
      %1956 = vmatpush1.bf16.msra.mxu0 0
      %1957 = vmatprep.subr.bf16.mxu0 0
      %1958 = vmatpush1.bf16.msra.mxu0 0
      %1959 = vmatprep.subr.bf16.mxu0 0
      %1960 = vmatpush1.bf16.msra.mxu0 0
      %1961 = vmatprep.subr.bf16.mxu0 0
      %1962 = vmatpush1.bf16.msra.mxu0 0
      %1963 = vmatprep.subr.bf16.mxu0 0
      %1964 = vmatpush1.bf16.msra.mxu0 0
      %1965 = vmatprep.subr.bf16.mxu0 0
      %1966 = vmatpush1.bf16.msra.mxu0 0
      %1967 = vmatprep.subr.bf16.mxu0 0
      %1968 = vmatpush1.bf16.msra.mxu0 0
      %1969 = vmatprep.mubr.bf16.mxu0 0
      %1970 = vmatmul.mubr.bf16.gmra.mrb[0].mxu0 %v1887
      %v1971 = vpop.f32.mrb[0].mxu0
      %v1972 = vadd.f32 0.0, %v1971
      %v1973 = vpop.f32.mrb[0].mxu0
      %v1974 = vpop.f32.mrb[0].mxu0
      %v1975 = vadd.f32 0.0, %v1974
      %v1976 = vpop.f32.mrb[0].mxu0
      %1977 = vmatprep.mubr.bf16.mxu0 0
      %1978 = vmatmul.mubr.bf16.gmra.mrb[0].mxu0 %v1890
      %v1979 = vpop.f32.mrb[0].mxu0
      %v1980 = vadd.f32 0.0, %v1979
      %v1981 = vpop.f32.mrb[0].mxu0
      %v1982 = vpop.f32.mrb[0].mxu0
      %v1983 = vadd.f32 0.0, %v1982
      %v1984 = vpop.f32.mrb[0].mxu0
      %1985 = vmatprep.mubr.bf16.mxu0 0
      %1986 = vmatmul.mubr.bf16.gmra.mrb[0].mxu0 %v1893
      %v1987 = vpop.f32.mrb[0].mxu0
      %v1988 = vadd.f32 0.0, %v1987
      %v1989 = vpop.f32.mrb[0].mxu0
      %v1990 = vpop.f32.mrb[0].mxu0
      %v1991 = vadd.f32 0.0, %v1990
      %v1992 = vpop.f32.mrb[0].mxu0
      %1993 = vmatprep.mubr.bf16.mxu0 0
      %1994 = vmatmul.mubr.bf16.gmra.mrb[0].mxu0 %v1896
      %v1995 = vpop.f32.mrb[0].mxu0
      %v1996 = vadd.f32 0.0, %v1995
      %v1997 = vpop.f32.mrb[0].mxu0
      %v1998 = vpop.f32.mrb[0].mxu0
      %v1999 = vadd.f32 0.0, %v1998
      %v2000 = vpop.f32.mrb[0].mxu0
      %2001 = vmatprep.mubr.bf16.mxu0 0
      %2002 = vmatmul.mubr.bf16.gmra.mrb[0].mxu0 %v1899
      %v2003 = vpop.f32.mrb[0].mxu0
      %v2004 = vadd.f32 0.0, %v2003
      %v2005 = vpop.f32.mrb[0].mxu0
      %v2006 = vpop.f32.mrb[0].mxu0
      %v2007 = vadd.f32 0.0, %v2006
      %v2008 = vpop.f32.mrb[0].mxu0
      %2009 = vmatprep.mubr.bf16.mxu0 0
      %2010 = vmatmul.mubr.bf16.gmra.mrb[0].mxu0 %v1902
      %v2011 = vpop.f32.mrb[0].mxu0
      %v2012 = vadd.f32 0.0, %v2011
      %v2013 = vpop.f32.mrb[0].mxu0
      %v2014 = vpop.f32.mrb[0].mxu0
      %v2015 = vadd.f32 0.0, %v2014
      %v2016 = vpop.f32.mrb[0].mxu0
      %2017 = vmatprep.mubr.bf16.mxu0 0
      %2018 = vmatmul.mubr.bf16.gmra.mrb[0].mxu0 %v1905
      %v2019 = vpop.f32.mrb[0].mxu0
      %v2020 = vadd.f32 0.0, %v2019
      %v2021 = vpop.f32.mrb[0].mxu0
      %v2022 = vpop.f32.mrb[0].mxu0
      %v2023 = vadd.f32 0.0, %v2022
      %v2024 = vpop.f32.mrb[0].mxu0
      %2025 = vmatprep.mubr.bf16.mxu0 0
      %2026 = vmatmul.mubr.bf16.gmra.mrb[0].mxu0 %v1908
      %v2027 = vpop.f32.mrb[0].mxu0
      %v2028 = vadd.f32 0.0, %v2027
      %v2029 = vpop.f32.mrb[0].mxu0
      %v2030 = vpop.f32.mrb[0].mxu0
      %v2031 = vadd.f32 0.0, %v2030
      %v2032 = vpop.f32.mrb[0].mxu0
      %2033 = vmatprep.mubr.bf16.mxu0 0
      %2034 = vmatmul.mubr.bf16.gmra.mrb[0].mxu0 %v1911
      %v2035 = vpop.f32.mrb[0].mxu0
      %v2036 = vadd.f32 0.0, %v2035
      %v2037 = vpop.f32.mrb[0].mxu0
      %v2038 = vpop.f32.mrb[0].mxu0
      %v2039 = vadd.f32 0.0, %v2038
      %v2040 = vpop.f32.mrb[0].mxu0
      %2041 = vmatprep.mubr.bf16.mxu0 0
      %2042 = vmatmul.mubr.bf16.gmra.mrb[0].mxu0 %v1914
      %v2043 = vpop.f32.mrb[0].mxu0
      %v2044 = vadd.f32 0.0, %v2043
      %v2045 = vpop.f32.mrb[0].mxu0
      %v2046 = vpop.f32.mrb[0].mxu0
      %v2047 = vadd.f32 0.0, %v2046
      %v2048 = vpop.f32.mrb[0].mxu0
      %2049 = vmatprep.mubr.bf16.mxu0 0
      %2050 = vmatmul.mubr.bf16.gmra.mrb[0].mxu0 %v1917
      %v2051 = vpop.f32.mrb[0].mxu0
      %v2052 = vadd.f32 0.0, %v2051
      %v2053 = vpop.f32.mrb[0].mxu0
      %v2054 = vpop.f32.mrb[0].mxu0
      %v2055 = vadd.f32 0.0, %v2054
      %v2056 = vpop.f32.mrb[0].mxu0
      %2057 = vmatprep.mubr.bf16.mxu0 0
      %2058 = vmatmul.mubr.bf16.gmra.mrb[0].mxu0 %v1920
      %v2059 = vpop.f32.mrb[0].mxu0
      %v2060 = vadd.f32 0.0, %v2059
      %v2061 = vpop.f32.mrb[0].mxu0
      %v2062 = vpop.f32.mrb[0].mxu0
      %v2063 = vadd.f32 0.0, %v2062
      %v2064 = vpop.f32.mrb[0].mxu0
      %2065 = vmatprep.mubr.bf16.mxu0 0
      %2066 = vmatmul.mubr.bf16.gmra.mrb[0].mxu0 %v1923
      %v2067 = vpop.f32.mrb[0].mxu0
      %v2068 = vadd.f32 0.0, %v2067
      %v2069 = vpop.f32.mrb[0].mxu0
      %v2070 = vpop.f32.mrb[0].mxu0
      %v2071 = vadd.f32 0.0, %v2070
      %v2072 = vpop.f32.mrb[0].mxu0
      %2073 = vmatprep.mubr.bf16.mxu0 0
      %2074 = vmatmul.mubr.bf16.gmra.mrb[0].mxu0 %v1926
      %v2075 = vpop.f32.mrb[0].mxu0
      %v2076 = vadd.f32 0.0, %v2075
      %v2077 = vpop.f32.mrb[0].mxu0
      %v2078 = vpop.f32.mrb[0].mxu0
      %v2079 = vadd.f32 0.0, %v2078
      %v2080 = vpop.f32.mrb[0].mxu0
      %2081 = vmatprep.mubr.bf16.mxu0 0
      %2082 = vmatmul.mubr.bf16.gmra.mrb[0].mxu0 %v1929
      %v2083 = vpop.f32.mrb[0].mxu0
      %v2084 = vadd.f32 0.0, %v2083
      %v2085 = vpop.f32.mrb[0].mxu0
      %v2086 = vpop.f32.mrb[0].mxu0
      %v2087 = vadd.f32 0.0, %v2086
      %v2088 = vpop.f32.mrb[0].mxu0
      %2089 = vmatprep.mubr.bf16.mxu0 0
      %2090 = vmatmul.mubr.bf16.gmra.mrb[0].mxu0 %v1932
      %v2091 = vpop.f32.mrb[0].mxu0
      %v2092 = vadd.f32 0.0, %v2091
      %v2093 = vpop.f32.mrb[0].mxu0
      %v2094 = vpop.f32.mrb[0].mxu0
      %v2095 = vadd.f32 0.0, %v2094
      %v2096 = vpop.f32.mrb[0].mxu0
      %2097 = vdwg.mxu0
      %v2098 = vadd.f32 %v1804, %v1972
      %v2099 = vadd.f32 %v1805, %v1975
      %v2100 = vadd.f32 %v1806, %v1980
      %v2101 = vadd.f32 %v1807, %v1983
      %v2102 = vadd.f32 %v1808, %v1988
      %v2103 = vadd.f32 %v1809, %v1991
      %v2104 = vadd.f32 %v1810, %v1996
      %v2105 = vadd.f32 %v1811, %v1999
      %v2106 = vadd.f32 %v1812, %v2004
      %v2107 = vadd.f32 %v1813, %v2007
      %v2108 = vadd.f32 %v1814, %v2012
      %v2109 = vadd.f32 %v1815, %v2015
      %v2110 = vadd.f32 %v1816, %v2020
      %v2111 = vadd.f32 %v1817, %v2023
      %v2112 = vadd.f32 %v1818, %v2028
      %v2113 = vadd.f32 %v1819, %v2031
      %v2114 = vadd.f32 %v1820, %v2036
      %v2115 = vadd.f32 %v1821, %v2039
      %v2116 = vadd.f32 %v1822, %v2044
      %v2117 = vadd.f32 %v1823, %v2047
      %v2118 = vadd.f32 %v1824, %v2052
      %v2119 = vadd.f32 %v1825, %v2055
      %v2120 = vadd.f32 %v1826, %v2060
      %v2121 = vadd.f32 %v1827, %v2063
      %v2122 = vadd.f32 %v1828, %v2068
      %v2123 = vadd.f32 %v1829, %v2071
      %v2124 = vadd.f32 %v1830, %v2076
      %v2125 = vadd.f32 %v1831, %v2079
      %v2126 = vadd.f32 %v1832, %v2084
      %v2127 = vadd.f32 %v1833, %v2087
      %v2128 = vadd.f32 %v1834, %v2092
      %v2129 = vadd.f32 %v1835, %v2095
      %s2130 = scalar_lea.vmem [#allocation2], 48
      %v2131 = vld [vmem:[%s2130] sm:$0xff]
      %v2132 = vld [vmem:[%s2130 + $0x8] sm:$0xff]
      %v2133 = vld [vmem:[%s2130 + $0x18] sm:$0xff]
      %v2134 = vld [vmem:[%s2130 + $0x20] sm:$0xff]
      %v2135 = vld [vmem:[%s2130 + $0x30] sm:$0xff]
      %v2136 = vld [vmem:[%s2130 + $0x38] sm:$0xff]
      %v2137 = vld [vmem:[%s2130 + $0x48] sm:$0xff]
      %v2138 = vld [vmem:[%s2130 + $0x50] sm:$0xff]
      %v2139 = vld [vmem:[%s2130 + $0x60] sm:$0xff]
      %v2140 = vld [vmem:[%s2130 + $0x68] sm:$0xff]
      %v2141 = vld [vmem:[%s2130 + $0x78] sm:$0xff]
      %v2142 = vld [vmem:[%s2130 + $0x80] sm:$0xff]
      %v2143 = vld [vmem:[%s2130 + $0x90] sm:$0xff]
      %v2144 = vld [vmem:[%s2130 + $0x98] sm:$0xff]
      %v2145 = vld [vmem:[%s2130 + $0xa8] sm:$0xff]
      %v2146 = vld [vmem:[%s2130 + $0xb0] sm:$0xff]
      %v2147 = vld [vmem:[%s2130 + $0xc0] sm:$0xff]
      %v2148 = vld [vmem:[%s2130 + $0xc8] sm:$0xff]
      %v2149 = vld [vmem:[%s2130 + $0xd8] sm:$0xff]
      %v2150 = vld [vmem:[%s2130 + $0xe0] sm:$0xff]
      %v2151 = vld [vmem:[%s2130 + $0xf0] sm:$0xff]
      %v2152 = vld [vmem:[%s2130 + $0xf8] sm:$0xff]
      %v2153 = vld [vmem:[%s2130 + $0x108] sm:$0xff]
      %v2154 = vld [vmem:[%s2130 + $0x110] sm:$0xff]
      %v2155 = vld [vmem:[%s2130 + $0x120] sm:$0xff]
      %v2156 = vld [vmem:[%s2130 + $0x128] sm:$0xff]
      %v2157 = vld [vmem:[%s2130 + $0x138] sm:$0xff]
      %v2158 = vld [vmem:[%s2130 + $0x140] sm:$0xff]
      %v2159 = vld [vmem:[%s2130 + $0x150] sm:$0xff]
      %v2160 = vld [vmem:[%s2130 + $0x158] sm:$0xff]
      %v2161 = vld [vmem:[%s2130 + $0x168] sm:$0xff]
      %v2162 = vld [vmem:[%s2130 + $0x170] sm:$0xff]
      %v2163 = vpack.c.bf16 %v2132, %v2131
      %v2164 = vpack.c.bf16 %v2134, %v2133
      %v2165 = vpack.c.bf16 %v2136, %v2135
      %v2166 = vpack.c.bf16 %v2138, %v2137
      %v2167 = vpack.c.bf16 %v2140, %v2139
      %v2168 = vpack.c.bf16 %v2142, %v2141
      %v2169 = vpack.c.bf16 %v2144, %v2143
      %v2170 = vpack.c.bf16 %v2146, %v2145
      %v2171 = vpack.c.bf16 %v2148, %v2147
      %v2172 = vpack.c.bf16 %v2150, %v2149
      %v2173 = vpack.c.bf16 %v2152, %v2151
      %v2174 = vpack.c.bf16 %v2154, %v2153
      %v2175 = vpack.c.bf16 %v2156, %v2155
      %v2176 = vpack.c.bf16 %v2158, %v2157
      %v2177 = vpack.c.bf16 %v2160, %v2159
      %v2178 = vpack.c.bf16 %v2162, %v2161
      %s2179 = scalar_lea.vmem %s3, 12
      %v2180 = vld [vmem:[%s2179] sm:$0x3]
      %v2182 = vsel %vm341, %v2163, 0
      %v2185 = vsel %vm341, %v2164, 0
      %v2188 = vsel %vm341, %v2165, 0
      %v2191 = vsel %vm341, %v2166, 0
      %v2194 = vsel %vm341, %v2167, 0
      %v2197 = vsel %vm341, %v2168, 0
      %v2200 = vsel %vm341, %v2169, 0
      %v2203 = vsel %vm341, %v2170, 0
      %v2206 = vsel %vm341, %v2171, 0
      %v2209 = vsel %vm341, %v2172, 0
      %v2212 = vsel %vm341, %v2173, 0
      %v2215 = vsel %vm341, %v2174, 0
      %v2218 = vsel %vm341, %v2175, 0
      %v2221 = vsel %vm341, %v2176, 0
      %v2224 = vsel %vm341, %v2177, 0
      %v2227 = vsel %vm341, %v2178, 0
      %v2230 = vsel %vm577, %v2180, 0
      %2232 = vmatprep.subr.bf16.mxu0 0
      %2233 = vmatpush1.bf16.msra.mxu0 %v2230
      %2234 = vmatprep.subr.bf16.mxu0 0
      %2235 = vmatpush1.bf16.msra.mxu0 0
      %2236 = vmatprep.subr.bf16.mxu0 0
      %2237 = vmatpush1.bf16.msra.mxu0 0
      %2238 = vmatprep.subr.bf16.mxu0 0
      %2239 = vmatpush1.bf16.msra.mxu0 0
      %2240 = vmatprep.subr.bf16.mxu0 0
      %2241 = vmatpush1.bf16.msra.mxu0 0
      %2242 = vmatprep.subr.bf16.mxu0 0
      %2243 = vmatpush1.bf16.msra.mxu0 0
      %2244 = vmatprep.subr.bf16.mxu0 0
      %2245 = vmatpush1.bf16.msra.mxu0 0
      %2246 = vmatprep.subr.bf16.mxu0 0
      %2247 = vmatpush1.bf16.msra.mxu0 0
      %2248 = vmatprep.subr.bf16.mxu0 0
      %2249 = vmatpush1.bf16.msra.mxu0 0
      %2250 = vmatprep.subr.bf16.mxu0 0
      %2251 = vmatpush1.bf16.msra.mxu0 0
      %2252 = vmatprep.subr.bf16.mxu0 0
      %2253 = vmatpush1.bf16.msra.mxu0 0
      %2254 = vmatprep.subr.bf16.mxu0 0
      %2255 = vmatpush1.bf16.msra.mxu0 0
      %2256 = vmatprep.subr.bf16.mxu0 0
      %2257 = vmatpush1.bf16.msra.mxu0 0
      %2258 = vmatprep.subr.bf16.mxu0 0
      %2259 = vmatpush1.bf16.msra.mxu0 0
      %2260 = vmatprep.subr.bf16.mxu0 0
      %2261 = vmatpush1.bf16.msra.mxu0 0
      %2262 = vmatprep.subr.bf16.mxu0 0
      %2263 = vmatpush1.bf16.msra.mxu0 0
      %2264 = vmatprep.mubr.bf16.mxu0 0
      %2265 = vmatmul.mubr.bf16.gmra.mrb[0].mxu0 %v2182
      %v2266 = vpop.f32.mrb[0].mxu0
      %v2267 = vadd.f32 0.0, %v2266
      %v2268 = vpop.f32.mrb[0].mxu0
      %v2269 = vpop.f32.mrb[0].mxu0
      %v2270 = vadd.f32 0.0, %v2269
      %v2271 = vpop.f32.mrb[0].mxu0
      %2272 = vmatprep.mubr.bf16.mxu0 0
      %2273 = vmatmul.mubr.bf16.gmra.mrb[0].mxu0 %v2185
      %v2274 = vpop.f32.mrb[0].mxu0
      %v2275 = vadd.f32 0.0, %v2274
      %v2276 = vpop.f32.mrb[0].mxu0
      %v2277 = vpop.f32.mrb[0].mxu0
      %v2278 = vadd.f32 0.0, %v2277
      %v2279 = vpop.f32.mrb[0].mxu0
      %2280 = vmatprep.mubr.bf16.mxu0 0
      %2281 = vmatmul.mubr.bf16.gmra.mrb[0].mxu0 %v2188
      %v2282 = vpop.f32.mrb[0].mxu0
      %v2283 = vadd.f32 0.0, %v2282
      %v2284 = vpop.f32.mrb[0].mxu0
      %v2285 = vpop.f32.mrb[0].mxu0
      %v2286 = vadd.f32 0.0, %v2285
      %v2287 = vpop.f32.mrb[0].mxu0
      %2288 = vmatprep.mubr.bf16.mxu0 0
      %2289 = vmatmul.mubr.bf16.gmra.mrb[0].mxu0 %v2191
      %v2290 = vpop.f32.mrb[0].mxu0
      %v2291 = vadd.f32 0.0, %v2290
      %v2292 = vpop.f32.mrb[0].mxu0
      %v2293 = vpop.f32.mrb[0].mxu0
      %v2294 = vadd.f32 0.0, %v2293
      %v2295 = vpop.f32.mrb[0].mxu0
      %2296 = vmatprep.mubr.bf16.mxu0 0
      %2297 = vmatmul.mubr.bf16.gmra.mrb[0].mxu0 %v2194
      %v2298 = vpop.f32.mrb[0].mxu0
      %v2299 = vadd.f32 0.0, %v2298
      %v2300 = vpop.f32.mrb[0].mxu0
      %v2301 = vpop.f32.mrb[0].mxu0
      %v2302 = vadd.f32 0.0, %v2301
      %v2303 = vpop.f32.mrb[0].mxu0
      %2304 = vmatprep.mubr.bf16.mxu0 0
      %2305 = vmatmul.mubr.bf16.gmra.mrb[0].mxu0 %v2197
      %v2306 = vpop.f32.mrb[0].mxu0
      %v2307 = vadd.f32 0.0, %v2306
      %v2308 = vpop.f32.mrb[0].mxu0
      %v2309 = vpop.f32.mrb[0].mxu0
      %v2310 = vadd.f32 0.0, %v2309
      %v2311 = vpop.f32.mrb[0].mxu0
      %2312 = vmatprep.mubr.bf16.mxu0 0
      %2313 = vmatmul.mubr.bf16.gmra.mrb[0].mxu0 %v2200
      %v2314 = vpop.f32.mrb[0].mxu0
      %v2315 = vadd.f32 0.0, %v2314
      %v2316 = vpop.f32.mrb[0].mxu0
      %v2317 = vpop.f32.mrb[0].mxu0
      %v2318 = vadd.f32 0.0, %v2317
      %v2319 = vpop.f32.mrb[0].mxu0
      %2320 = vmatprep.mubr.bf16.mxu0 0
      %2321 = vmatmul.mubr.bf16.gmra.mrb[0].mxu0 %v2203
      %v2322 = vpop.f32.mrb[0].mxu0
      %v2323 = vadd.f32 0.0, %v2322
      %v2324 = vpop.f32.mrb[0].mxu0
      %v2325 = vpop.f32.mrb[0].mxu0
      %v2326 = vadd.f32 0.0, %v2325
      %v2327 = vpop.f32.mrb[0].mxu0
      %2328 = vmatprep.mubr.bf16.mxu0 0
      %2329 = vmatmul.mubr.bf16.gmra.mrb[0].mxu0 %v2206
      %v2330 = vpop.f32.mrb[0].mxu0
      %v2331 = vadd.f32 0.0, %v2330
      %v2332 = vpop.f32.mrb[0].mxu0
      %v2333 = vpop.f32.mrb[0].mxu0
      %v2334 = vadd.f32 0.0, %v2333
      %v2335 = vpop.f32.mrb[0].mxu0
      %2336 = vmatprep.mubr.bf16.mxu0 0
      %2337 = vmatmul.mubr.bf16.gmra.mrb[0].mxu0 %v2209
      %v2338 = vpop.f32.mrb[0].mxu0
      %v2339 = vadd.f32 0.0, %v2338
      %v2340 = vpop.f32.mrb[0].mxu0
      %v2341 = vpop.f32.mrb[0].mxu0
      %v2342 = vadd.f32 0.0, %v2341
      %v2343 = vpop.f32.mrb[0].mxu0
      %2344 = vmatprep.mubr.bf16.mxu0 0
      %2345 = vmatmul.mubr.bf16.gmra.mrb[0].mxu0 %v2212
      %v2346 = vpop.f32.mrb[0].mxu0
      %v2347 = vadd.f32 0.0, %v2346
      %v2348 = vpop.f32.mrb[0].mxu0
      %v2349 = vpop.f32.mrb[0].mxu0
      %v2350 = vadd.f32 0.0, %v2349
      %v2351 = vpop.f32.mrb[0].mxu0
      %2352 = vmatprep.mubr.bf16.mxu0 0
      %2353 = vmatmul.mubr.bf16.gmra.mrb[0].mxu0 %v2215
      %v2354 = vpop.f32.mrb[0].mxu0
      %v2355 = vadd.f32 0.0, %v2354
      %v2356 = vpop.f32.mrb[0].mxu0
      %v2357 = vpop.f32.mrb[0].mxu0
      %v2358 = vadd.f32 0.0, %v2357
      %v2359 = vpop.f32.mrb[0].mxu0
      %2360 = vmatprep.mubr.bf16.mxu0 0
      %2361 = vmatmul.mubr.bf16.gmra.mrb[0].mxu0 %v2218
      %v2362 = vpop.f32.mrb[0].mxu0
      %v2363 = vadd.f32 0.0, %v2362
      %v2364 = vpop.f32.mrb[0].mxu0
      %v2365 = vpop.f32.mrb[0].mxu0
      %v2366 = vadd.f32 0.0, %v2365
      %v2367 = vpop.f32.mrb[0].mxu0
      %2368 = vmatprep.mubr.bf16.mxu0 0
      %2369 = vmatmul.mubr.bf16.gmra.mrb[0].mxu0 %v2221
      %v2370 = vpop.f32.mrb[0].mxu0
      %v2371 = vadd.f32 0.0, %v2370
      %v2372 = vpop.f32.mrb[0].mxu0
      %v2373 = vpop.f32.mrb[0].mxu0
      %v2374 = vadd.f32 0.0, %v2373
      %v2375 = vpop.f32.mrb[0].mxu0
      %2376 = vmatprep.mubr.bf16.mxu0 0
      %2377 = vmatmul.mubr.bf16.gmra.mrb[0].mxu0 %v2224
      %v2378 = vpop.f32.mrb[0].mxu0
      %v2379 = vadd.f32 0.0, %v2378
      %v2380 = vpop.f32.mrb[0].mxu0
      %v2381 = vpop.f32.mrb[0].mxu0
      %v2382 = vadd.f32 0.0, %v2381
      %v2383 = vpop.f32.mrb[0].mxu0
      %2384 = vmatprep.mubr.bf16.mxu0 0
      %2385 = vmatmul.mubr.bf16.gmra.mrb[0].mxu0 %v2227
      %v2386 = vpop.f32.mrb[0].mxu0
      %v2387 = vadd.f32 0.0, %v2386
      %v2388 = vpop.f32.mrb[0].mxu0
      %v2389 = vpop.f32.mrb[0].mxu0
      %v2390 = vadd.f32 0.0, %v2389
      %v2391 = vpop.f32.mrb[0].mxu0
      %2392 = vdwg.mxu0
      %v2393 = vadd.f32 %v2098, %v2267
      %v2394 = vadd.f32 %v2099, %v2270
      %v2395 = vadd.f32 %v2100, %v2275
      %v2396 = vadd.f32 %v2101, %v2278
      %v2397 = vadd.f32 %v2102, %v2283
      %v2398 = vadd.f32 %v2103, %v2286
      %v2399 = vadd.f32 %v2104, %v2291
      %v2400 = vadd.f32 %v2105, %v2294
      %v2401 = vadd.f32 %v2106, %v2299
      %v2402 = vadd.f32 %v2107, %v2302
      %v2403 = vadd.f32 %v2108, %v2307
      %v2404 = vadd.f32 %v2109, %v2310
      %v2405 = vadd.f32 %v2110, %v2315
      %v2406 = vadd.f32 %v2111, %v2318
      %v2407 = vadd.f32 %v2112, %v2323
      %v2408 = vadd.f32 %v2113, %v2326
      %v2409 = vadd.f32 %v2114, %v2331
      %v2410 = vadd.f32 %v2115, %v2334
      %v2411 = vadd.f32 %v2116, %v2339
      %v2412 = vadd.f32 %v2117, %v2342
      %v2413 = vadd.f32 %v2118, %v2347
      %v2414 = vadd.f32 %v2119, %v2350
      %v2415 = vadd.f32 %v2120, %v2355
      %v2416 = vadd.f32 %v2121, %v2358
      %v2417 = vadd.f32 %v2122, %v2363
      %v2418 = vadd.f32 %v2123, %v2366
      %v2419 = vadd.f32 %v2124, %v2371
      %v2420 = vadd.f32 %v2125, %v2374
      %v2421 = vadd.f32 %v2126, %v2379
      %v2422 = vadd.f32 %v2127, %v2382
      %v2423 = vadd.f32 %v2128, %v2387
      %v2424 = vadd.f32 %v2129, %v2390
      %v2425 = vld [vmem:[%s2130 + $0x1] sm:$0xff]
      %v2426 = vld [vmem:[%s2130 + $0x9] sm:$0xff]
      %v2427 = vld [vmem:[%s2130 + $0x19] sm:$0xff]
      %v2428 = vld [vmem:[%s2130 + $0x21] sm:$0xff]
      %v2429 = vld [vmem:[%s2130 + $0x31] sm:$0xff]
      %v2430 = vld [vmem:[%s2130 + $0x39] sm:$0xff]
      %v2431 = vld [vmem:[%s2130 + $0x49] sm:$0xff]
      %v2432 = vld [vmem:[%s2130 + $0x51] sm:$0xff]
      %v2433 = vld [vmem:[%s2130 + $0x61] sm:$0xff]
      %v2434 = vld [vmem:[%s2130 + $0x69] sm:$0xff]
      %v2435 = vld [vmem:[%s2130 + $0x79] sm:$0xff]
      %v2436 = vld [vmem:[%s2130 + $0x81] sm:$0xff]
      %v2437 = vld [vmem:[%s2130 + $0x91] sm:$0xff]
      %v2438 = vld [vmem:[%s2130 + $0x99] sm:$0xff]
      %v2439 = vld [vmem:[%s2130 + $0xa9] sm:$0xff]
      %v2440 = vld [vmem:[%s2130 + $0xb1] sm:$0xff]
      %v2441 = vld [vmem:[%s2130 + $0xc1] sm:$0xff]
      %v2442 = vld [vmem:[%s2130 + $0xc9] sm:$0xff]
      %v2443 = vld [vmem:[%s2130 + $0xd9] sm:$0xff]
      %v2444 = vld [vmem:[%s2130 + $0xe1] sm:$0xff]
      %v2445 = vld [vmem:[%s2130 + $0xf1] sm:$0xff]
      %v2446 = vld [vmem:[%s2130 + $0xf9] sm:$0xff]
      %v2447 = vld [vmem:[%s2130 + $0x109] sm:$0xff]
      %v2448 = vld [vmem:[%s2130 + $0x111] sm:$0xff]
      %v2449 = vld [vmem:[%s2130 + $0x121] sm:$0xff]
      %v2450 = vld [vmem:[%s2130 + $0x129] sm:$0xff]
      %v2451 = vld [vmem:[%s2130 + $0x139] sm:$0xff]
      %v2452 = vld [vmem:[%s2130 + $0x141] sm:$0xff]
      %v2453 = vld [vmem:[%s2130 + $0x151] sm:$0xff]
      %v2454 = vld [vmem:[%s2130 + $0x159] sm:$0xff]
      %v2455 = vld [vmem:[%s2130 + $0x169] sm:$0xff]
      %v2456 = vld [vmem:[%s2130 + $0x171] sm:$0xff]
      %v2457 = vpack.c.bf16 %v2426, %v2425
      %v2458 = vpack.c.bf16 %v2428, %v2427
      %v2459 = vpack.c.bf16 %v2430, %v2429
      %v2460 = vpack.c.bf16 %v2432, %v2431
      %v2461 = vpack.c.bf16 %v2434, %v2433
      %v2462 = vpack.c.bf16 %v2436, %v2435
      %v2463 = vpack.c.bf16 %v2438, %v2437
      %v2464 = vpack.c.bf16 %v2440, %v2439
      %v2465 = vpack.c.bf16 %v2442, %v2441
      %v2466 = vpack.c.bf16 %v2444, %v2443
      %v2467 = vpack.c.bf16 %v2446, %v2445
      %v2468 = vpack.c.bf16 %v2448, %v2447
      %v2469 = vpack.c.bf16 %v2450, %v2449
      %v2470 = vpack.c.bf16 %v2452, %v2451
      %v2471 = vpack.c.bf16 %v2454, %v2453
      %v2472 = vpack.c.bf16 %v2456, %v2455
      %s2473 = scalar_lea.vmem %s3, 14
      %v2474 = vld [vmem:[%s2473] sm:$0x3]
      %v2476 = vsel %vm341, %v2457, 0
      %v2479 = vsel %vm341, %v2458, 0
      %v2482 = vsel %vm341, %v2459, 0
      %v2485 = vsel %vm341, %v2460, 0
      %v2488 = vsel %vm341, %v2461, 0
      %v2491 = vsel %vm341, %v2462, 0
      %v2494 = vsel %vm341, %v2463, 0
      %v2497 = vsel %vm341, %v2464, 0
      %v2500 = vsel %vm341, %v2465, 0
      %v2503 = vsel %vm341, %v2466, 0
      %v2506 = vsel %vm341, %v2467, 0
      %v2509 = vsel %vm341, %v2468, 0
      %v2512 = vsel %vm341, %v2469, 0
      %v2515 = vsel %vm341, %v2470, 0
      %v2518 = vsel %vm341, %v2471, 0
      %v2521 = vsel %vm341, %v2472, 0
      %v2524 = vsel %vm577, %v2474, 0
      %2526 = vmatprep.subr.bf16.mxu0 0
      %2527 = vmatpush1.bf16.msra.mxu0 %v2524
      %2528 = vmatprep.subr.bf16.mxu0 0
      %2529 = vmatpush1.bf16.msra.mxu0 0
      %2530 = vmatprep.subr.bf16.mxu0 0
      %2531 = vmatpush1.bf16.msra.mxu0 0
      %2532 = vmatprep.subr.bf16.mxu0 0
      %2533 = vmatpush1.bf16.msra.mxu0 0
      %2534 = vmatprep.subr.bf16.mxu0 0
      %2535 = vmatpush1.bf16.msra.mxu0 0
      %2536 = vmatprep.subr.bf16.mxu0 0
      %2537 = vmatpush1.bf16.msra.mxu0 0
      %2538 = vmatprep.subr.bf16.mxu0 0
      %2539 = vmatpush1.bf16.msra.mxu0 0
      %2540 = vmatprep.subr.bf16.mxu0 0
      %2541 = vmatpush1.bf16.msra.mxu0 0
      %2542 = vmatprep.subr.bf16.mxu0 0
      %2543 = vmatpush1.bf16.msra.mxu0 0
      %2544 = vmatprep.subr.bf16.mxu0 0
      %2545 = vmatpush1.bf16.msra.mxu0 0
      %2546 = vmatprep.subr.bf16.mxu0 0
      %2547 = vmatpush1.bf16.msra.mxu0 0
      %2548 = vmatprep.subr.bf16.mxu0 0
      %2549 = vmatpush1.bf16.msra.mxu0 0
      %2550 = vmatprep.subr.bf16.mxu0 0
      %2551 = vmatpush1.bf16.msra.mxu0 0
      %2552 = vmatprep.subr.bf16.mxu0 0
      %2553 = vmatpush1.bf16.msra.mxu0 0
      %2554 = vmatprep.subr.bf16.mxu0 0
      %2555 = vmatpush1.bf16.msra.mxu0 0
      %2556 = vmatprep.subr.bf16.mxu0 0
      %2557 = vmatpush1.bf16.msra.mxu0 0
      %2558 = vmatprep.mubr.bf16.mxu0 0
      %2559 = vmatmul.mubr.bf16.gmra.mrb[0].mxu0 %v2476
      %v2560 = vpop.f32.mrb[0].mxu0
      %v2561 = vadd.f32 0.0, %v2560
      %v2562 = vpop.f32.mrb[0].mxu0
      %v2563 = vpop.f32.mrb[0].mxu0
      %v2564 = vadd.f32 0.0, %v2563
      %v2565 = vpop.f32.mrb[0].mxu0
      %2566 = vmatprep.mubr.bf16.mxu0 0
      %2567 = vmatmul.mubr.bf16.gmra.mrb[0].mxu0 %v2479
      %v2568 = vpop.f32.mrb[0].mxu0
      %v2569 = vadd.f32 0.0, %v2568
      %v2570 = vpop.f32.mrb[0].mxu0
      %v2571 = vpop.f32.mrb[0].mxu0
      %v2572 = vadd.f32 0.0, %v2571
      %v2573 = vpop.f32.mrb[0].mxu0
      %2574 = vmatprep.mubr.bf16.mxu0 0
      %2575 = vmatmul.mubr.bf16.gmra.mrb[0].mxu0 %v2482
      %v2576 = vpop.f32.mrb[0].mxu0
      %v2577 = vadd.f32 0.0, %v2576
      %v2578 = vpop.f32.mrb[0].mxu0
      %v2579 = vpop.f32.mrb[0].mxu0
      %v2580 = vadd.f32 0.0, %v2579
      %v2581 = vpop.f32.mrb[0].mxu0
      %2582 = vmatprep.mubr.bf16.mxu0 0
      %2583 = vmatmul.mubr.bf16.gmra.mrb[0].mxu0 %v2485
      %v2584 = vpop.f32.mrb[0].mxu0
      %v2585 = vadd.f32 0.0, %v2584
      %v2586 = vpop.f32.mrb[0].mxu0
      %v2587 = vpop.f32.mrb[0].mxu0
      %v2588 = vadd.f32 0.0, %v2587
      %v2589 = vpop.f32.mrb[0].mxu0
      %2590 = vmatprep.mubr.bf16.mxu0 0
      %2591 = vmatmul.mubr.bf16.gmra.mrb[0].mxu0 %v2488
      %v2592 = vpop.f32.mrb[0].mxu0
      %v2593 = vadd.f32 0.0, %v2592
      %v2594 = vpop.f32.mrb[0].mxu0
      %v2595 = vpop.f32.mrb[0].mxu0
      %v2596 = vadd.f32 0.0, %v2595
      %v2597 = vpop.f32.mrb[0].mxu0
      %2598 = vmatprep.mubr.bf16.mxu0 0
      %2599 = vmatmul.mubr.bf16.gmra.mrb[0].mxu0 %v2491
      %v2600 = vpop.f32.mrb[0].mxu0
      %v2601 = vadd.f32 0.0, %v2600
      %v2602 = vpop.f32.mrb[0].mxu0
      %v2603 = vpop.f32.mrb[0].mxu0
      %v2604 = vadd.f32 0.0, %v2603
      %v2605 = vpop.f32.mrb[0].mxu0
      %2606 = vmatprep.mubr.bf16.mxu0 0
      %2607 = vmatmul.mubr.bf16.gmra.mrb[0].mxu0 %v2494
      %v2608 = vpop.f32.mrb[0].mxu0
      %v2609 = vadd.f32 0.0, %v2608
      %v2610 = vpop.f32.mrb[0].mxu0
      %v2611 = vpop.f32.mrb[0].mxu0
      %v2612 = vadd.f32 0.0, %v2611
      %v2613 = vpop.f32.mrb[0].mxu0
      %2614 = vmatprep.mubr.bf16.mxu0 0
      %2615 = vmatmul.mubr.bf16.gmra.mrb[0].mxu0 %v2497
      %v2616 = vpop.f32.mrb[0].mxu0
      %v2617 = vadd.f32 0.0, %v2616
      %v2618 = vpop.f32.mrb[0].mxu0
      %v2619 = vpop.f32.mrb[0].mxu0
      %v2620 = vadd.f32 0.0, %v2619
      %v2621 = vpop.f32.mrb[0].mxu0
      %2622 = vmatprep.mubr.bf16.mxu0 0
      %2623 = vmatmul.mubr.bf16.gmra.mrb[0].mxu0 %v2500
      %v2624 = vpop.f32.mrb[0].mxu0
      %v2625 = vadd.f32 0.0, %v2624
      %v2626 = vpop.f32.mrb[0].mxu0
      %v2627 = vpop.f32.mrb[0].mxu0
      %v2628 = vadd.f32 0.0, %v2627
      %v2629 = vpop.f32.mrb[0].mxu0
      %2630 = vmatprep.mubr.bf16.mxu0 0
      %2631 = vmatmul.mubr.bf16.gmra.mrb[0].mxu0 %v2503
      %v2632 = vpop.f32.mrb[0].mxu0
      %v2633 = vadd.f32 0.0, %v2632
      %v2634 = vpop.f32.mrb[0].mxu0
      %v2635 = vpop.f32.mrb[0].mxu0
      %v2636 = vadd.f32 0.0, %v2635
      %v2637 = vpop.f32.mrb[0].mxu0
      %2638 = vmatprep.mubr.bf16.mxu0 0
      %2639 = vmatmul.mubr.bf16.gmra.mrb[0].mxu0 %v2506
      %v2640 = vpop.f32.mrb[0].mxu0
      %v2641 = vadd.f32 0.0, %v2640
      %v2642 = vpop.f32.mrb[0].mxu0
      %v2643 = vpop.f32.mrb[0].mxu0
      %v2644 = vadd.f32 0.0, %v2643
      %v2645 = vpop.f32.mrb[0].mxu0
      %2646 = vmatprep.mubr.bf16.mxu0 0
      %2647 = vmatmul.mubr.bf16.gmra.mrb[0].mxu0 %v2509
      %v2648 = vpop.f32.mrb[0].mxu0
      %v2649 = vadd.f32 0.0, %v2648
      %v2650 = vpop.f32.mrb[0].mxu0
      %v2651 = vpop.f32.mrb[0].mxu0
      %v2652 = vadd.f32 0.0, %v2651
      %v2653 = vpop.f32.mrb[0].mxu0
      %2654 = vmatprep.mubr.bf16.mxu0 0
      %2655 = vmatmul.mubr.bf16.gmra.mrb[0].mxu0 %v2512
      %v2656 = vpop.f32.mrb[0].mxu0
      %v2657 = vadd.f32 0.0, %v2656
      %v2658 = vpop.f32.mrb[0].mxu0
      %v2659 = vpop.f32.mrb[0].mxu0
      %v2660 = vadd.f32 0.0, %v2659
      %v2661 = vpop.f32.mrb[0].mxu0
      %2662 = vmatprep.mubr.bf16.mxu0 0
      %2663 = vmatmul.mubr.bf16.gmra.mrb[0].mxu0 %v2515
      %v2664 = vpop.f32.mrb[0].mxu0
      %v2665 = vadd.f32 0.0, %v2664
      %v2666 = vpop.f32.mrb[0].mxu0
      %v2667 = vpop.f32.mrb[0].mxu0
      %v2668 = vadd.f32 0.0, %v2667
      %v2669 = vpop.f32.mrb[0].mxu0
      %2670 = vmatprep.mubr.bf16.mxu0 0
      %2671 = vmatmul.mubr.bf16.gmra.mrb[0].mxu0 %v2518
      %v2672 = vpop.f32.mrb[0].mxu0
      %v2673 = vadd.f32 0.0, %v2672
      %v2674 = vpop.f32.mrb[0].mxu0
      %v2675 = vpop.f32.mrb[0].mxu0
      %v2676 = vadd.f32 0.0, %v2675
      %v2677 = vpop.f32.mrb[0].mxu0
      %2678 = vmatprep.mubr.bf16.mxu0 0
      %2679 = vmatmul.mubr.bf16.gmra.mrb[0].mxu0 %v2521
      %v2680 = vpop.f32.mrb[0].mxu0
      %v2681 = vadd.f32 0.0, %v2680
      %v2682 = vpop.f32.mrb[0].mxu0
      %v2683 = vpop.f32.mrb[0].mxu0
      %v2684 = vadd.f32 0.0, %v2683
      %v2685 = vpop.f32.mrb[0].mxu0
      %2686 = vdwg.mxu0
      %v2687 = vadd.f32 %v2393, %v2561
      %v2688 = vadd.f32 %v2394, %v2564
      %v2689 = vadd.f32 %v2395, %v2569
      %v2690 = vadd.f32 %v2396, %v2572
      %v2691 = vadd.f32 %v2397, %v2577
      %v2692 = vadd.f32 %v2398, %v2580
      %v2693 = vadd.f32 %v2399, %v2585
      %v2694 = vadd.f32 %v2400, %v2588
      %v2695 = vadd.f32 %v2401, %v2593
      %v2696 = vadd.f32 %v2402, %v2596
      %v2697 = vadd.f32 %v2403, %v2601
      %v2698 = vadd.f32 %v2404, %v2604
      %v2699 = vadd.f32 %v2405, %v2609
      %v2700 = vadd.f32 %v2406, %v2612
      %v2701 = vadd.f32 %v2407, %v2617
      %v2702 = vadd.f32 %v2408, %v2620
      %v2703 = vadd.f32 %v2409, %v2625
      %v2704 = vadd.f32 %v2410, %v2628
      %v2705 = vadd.f32 %v2411, %v2633
      %v2706 = vadd.f32 %v2412, %v2636
      %v2707 = vadd.f32 %v2413, %v2641
      %v2708 = vadd.f32 %v2414, %v2644
      %v2709 = vadd.f32 %v2415, %v2649
      %v2710 = vadd.f32 %v2416, %v2652
      %v2711 = vadd.f32 %v2417, %v2657
      %v2712 = vadd.f32 %v2418, %v2660
      %v2713 = vadd.f32 %v2419, %v2665
      %v2714 = vadd.f32 %v2420, %v2668
      %v2715 = vadd.f32 %v2421, %v2673
      %v2716 = vadd.f32 %v2422, %v2676
      %v2717 = vadd.f32 %v2423, %v2681
      %v2718 = vadd.f32 %v2424, %v2684
      %v2719 = vld [vmem:[%s2130 + $0x2] sm:$0xff]
      %v2720 = vld [vmem:[%s2130 + $0xa] sm:$0xff]
      %v2721 = vld [vmem:[%s2130 + $0x1a] sm:$0xff]
      %v2722 = vld [vmem:[%s2130 + $0x22] sm:$0xff]
      %v2723 = vld [vmem:[%s2130 + $0x32] sm:$0xff]
      %v2724 = vld [vmem:[%s2130 + $0x3a] sm:$0xff]
      %v2725 = vld [vmem:[%s2130 + $0x4a] sm:$0xff]
      %v2726 = vld [vmem:[%s2130 + $0x52] sm:$0xff]
      %v2727 = vld [vmem:[%s2130 + $0x62] sm:$0xff]
      %v2728 = vld [vmem:[%s2130 + $0x6a] sm:$0xff]
      %v2729 = vld [vmem:[%s2130 + $0x7a] sm:$0xff]
      %v2730 = vld [vmem:[%s2130 + $0x82] sm:$0xff]
      %v2731 = vld [vmem:[%s2130 + $0x92] sm:$0xff]
      %v2732 = vld [vmem:[%s2130 + $0x9a] sm:$0xff]
      %v2733 = vld [vmem:[%s2130 + $0xaa] sm:$0xff]
      %v2734 = vld [vmem:[%s2130 + $0xb2] sm:$0xff]
      %v2735 = vld [vmem:[%s2130 + $0xc2] sm:$0xff]
      %v2736 = vld [vmem:[%s2130 + $0xca] sm:$0xff]
      %v2737 = vld [vmem:[%s2130 + $0xda] sm:$0xff]
      %v2738 = vld [vmem:[%s2130 + $0xe2] sm:$0xff]
      %v2739 = vld [vmem:[%s2130 + $0xf2] sm:$0xff]
      %v2740 = vld [vmem:[%s2130 + $0xfa] sm:$0xff]
      %v2741 = vld [vmem:[%s2130 + $0x10a] sm:$0xff]
      %v2742 = vld [vmem:[%s2130 + $0x112] sm:$0xff]
      %v2743 = vld [vmem:[%s2130 + $0x122] sm:$0xff]
      %v2744 = vld [vmem:[%s2130 + $0x12a] sm:$0xff]
      %v2745 = vld [vmem:[%s2130 + $0x13a] sm:$0xff]
      %v2746 = vld [vmem:[%s2130 + $0x142] sm:$0xff]
      %v2747 = vld [vmem:[%s2130 + $0x152] sm:$0xff]
      %v2748 = vld [vmem:[%s2130 + $0x15a] sm:$0xff]
      %v2749 = vld [vmem:[%s2130 + $0x16a] sm:$0xff]
      %v2750 = vld [vmem:[%s2130 + $0x172] sm:$0xff]
      %v2751 = vpack.c.bf16 %v2720, %v2719
      %v2752 = vpack.c.bf16 %v2722, %v2721
      %v2753 = vpack.c.bf16 %v2724, %v2723
      %v2754 = vpack.c.bf16 %v2726, %v2725
      %v2755 = vpack.c.bf16 %v2728, %v2727
      %v2756 = vpack.c.bf16 %v2730, %v2729
      %v2757 = vpack.c.bf16 %v2732, %v2731
      %v2758 = vpack.c.bf16 %v2734, %v2733
      %v2759 = vpack.c.bf16 %v2736, %v2735
      %v2760 = vpack.c.bf16 %v2738, %v2737
      %v2761 = vpack.c.bf16 %v2740, %v2739
      %v2762 = vpack.c.bf16 %v2742, %v2741
      %v2763 = vpack.c.bf16 %v2744, %v2743
      %v2764 = vpack.c.bf16 %v2746, %v2745
      %v2765 = vpack.c.bf16 %v2748, %v2747
      %v2766 = vpack.c.bf16 %v2750, %v2749
      %s2767 = scalar_lea.vmem %s3, 16
      %v2768 = vld [vmem:[%s2767] sm:$0x3]
      %v2770 = vsel %vm341, %v2751, 0
      %v2773 = vsel %vm341, %v2752, 0
      %v2776 = vsel %vm341, %v2753, 0
      %v2779 = vsel %vm341, %v2754, 0
      %v2782 = vsel %vm341, %v2755, 0
      %v2785 = vsel %vm341, %v2756, 0
      %v2788 = vsel %vm341, %v2757, 0
      %v2791 = vsel %vm341, %v2758, 0
      %v2794 = vsel %vm341, %v2759, 0
      %v2797 = vsel %vm341, %v2760, 0
      %v2800 = vsel %vm341, %v2761, 0
      %v2803 = vsel %vm341, %v2762, 0
      %v2806 = vsel %vm341, %v2763, 0
      %v2809 = vsel %vm341, %v2764, 0
      %v2812 = vsel %vm341, %v2765, 0
      %v2815 = vsel %vm341, %v2766, 0
      %v2818 = vsel %vm577, %v2768, 0
      %2820 = vmatprep.subr.bf16.mxu0 0
      %2821 = vmatpush1.bf16.msra.mxu0 %v2818
      %2822 = vmatprep.subr.bf16.mxu0 0
      %2823 = vmatpush1.bf16.msra.mxu0 0
      %2824 = vmatprep.subr.bf16.mxu0 0
      %2825 = vmatpush1.bf16.msra.mxu0 0
      %2826 = vmatprep.subr.bf16.mxu0 0
      %2827 = vmatpush1.bf16.msra.mxu0 0
      %2828 = vmatprep.subr.bf16.mxu0 0
      %2829 = vmatpush1.bf16.msra.mxu0 0
      %2830 = vmatprep.subr.bf16.mxu0 0
      %2831 = vmatpush1.bf16.msra.mxu0 0
      %2832 = vmatprep.subr.bf16.mxu0 0
      %2833 = vmatpush1.bf16.msra.mxu0 0
      %2834 = vmatprep.subr.bf16.mxu0 0
      %2835 = vmatpush1.bf16.msra.mxu0 0
      %2836 = vmatprep.subr.bf16.mxu0 0
      %2837 = vmatpush1.bf16.msra.mxu0 0
      %2838 = vmatprep.subr.bf16.mxu0 0
      %2839 = vmatpush1.bf16.msra.mxu0 0
      %2840 = vmatprep.subr.bf16.mxu0 0
      %2841 = vmatpush1.bf16.msra.mxu0 0
      %2842 = vmatprep.subr.bf16.mxu0 0
      %2843 = vmatpush1.bf16.msra.mxu0 0
      %2844 = vmatprep.subr.bf16.mxu0 0
      %2845 = vmatpush1.bf16.msra.mxu0 0
      %2846 = vmatprep.subr.bf16.mxu0 0
      %2847 = vmatpush1.bf16.msra.mxu0 0
      %2848 = vmatprep.subr.bf16.mxu0 0
      %2849 = vmatpush1.bf16.msra.mxu0 0
      %2850 = vmatprep.subr.bf16.mxu0 0
      %2851 = vmatpush1.bf16.msra.mxu0 0
      %2852 = vmatprep.mubr.bf16.mxu0 0
      %2853 = vmatmul.mubr.bf16.gmra.mrb[0].mxu0 %v2770
      %v2854 = vpop.f32.mrb[0].mxu0
      %v2855 = vadd.f32 0.0, %v2854
      %v2856 = vpop.f32.mrb[0].mxu0
      %v2857 = vpop.f32.mrb[0].mxu0
      %v2858 = vadd.f32 0.0, %v2857
      %v2859 = vpop.f32.mrb[0].mxu0
      %2860 = vmatprep.mubr.bf16.mxu0 0
      %2861 = vmatmul.mubr.bf16.gmra.mrb[0].mxu0 %v2773
      %v2862 = vpop.f32.mrb[0].mxu0
      %v2863 = vadd.f32 0.0, %v2862
      %v2864 = vpop.f32.mrb[0].mxu0
      %v2865 = vpop.f32.mrb[0].mxu0
      %v2866 = vadd.f32 0.0, %v2865
      %v2867 = vpop.f32.mrb[0].mxu0
      %2868 = vmatprep.mubr.bf16.mxu0 0
      %2869 = vmatmul.mubr.bf16.gmra.mrb[0].mxu0 %v2776
      %v2870 = vpop.f32.mrb[0].mxu0
      %v2871 = vadd.f32 0.0, %v2870
      %v2872 = vpop.f32.mrb[0].mxu0
      %v2873 = vpop.f32.mrb[0].mxu0
      %v2874 = vadd.f32 0.0, %v2873
      %v2875 = vpop.f32.mrb[0].mxu0
      %2876 = vmatprep.mubr.bf16.mxu0 0
      %2877 = vmatmul.mubr.bf16.gmra.mrb[0].mxu0 %v2779
      %v2878 = vpop.f32.mrb[0].mxu0
      %v2879 = vadd.f32 0.0, %v2878
      %v2880 = vpop.f32.mrb[0].mxu0
      %v2881 = vpop.f32.mrb[0].mxu0
      %v2882 = vadd.f32 0.0, %v2881
      %v2883 = vpop.f32.mrb[0].mxu0
      %2884 = vmatprep.mubr.bf16.mxu0 0
      %2885 = vmatmul.mubr.bf16.gmra.mrb[0].mxu0 %v2782
      %v2886 = vpop.f32.mrb[0].mxu0
      %v2887 = vadd.f32 0.0, %v2886
      %v2888 = vpop.f32.mrb[0].mxu0
      %v2889 = vpop.f32.mrb[0].mxu0
      %v2890 = vadd.f32 0.0, %v2889
      %v2891 = vpop.f32.mrb[0].mxu0
      %2892 = vmatprep.mubr.bf16.mxu0 0
      %2893 = vmatmul.mubr.bf16.gmra.mrb[0].mxu0 %v2785
      %v2894 = vpop.f32.mrb[0].mxu0
      %v2895 = vadd.f32 0.0, %v2894
      %v2896 = vpop.f32.mrb[0].mxu0
      %v2897 = vpop.f32.mrb[0].mxu0
      %v2898 = vadd.f32 0.0, %v2897
      %v2899 = vpop.f32.mrb[0].mxu0
      %2900 = vmatprep.mubr.bf16.mxu0 0
      %2901 = vmatmul.mubr.bf16.gmra.mrb[0].mxu0 %v2788
      %v2902 = vpop.f32.mrb[0].mxu0
      %v2903 = vadd.f32 0.0, %v2902
      %v2904 = vpop.f32.mrb[0].mxu0
      %v2905 = vpop.f32.mrb[0].mxu0
      %v2906 = vadd.f32 0.0, %v2905
      %v2907 = vpop.f32.mrb[0].mxu0
      %2908 = vmatprep.mubr.bf16.mxu0 0
      %2909 = vmatmul.mubr.bf16.gmra.mrb[0].mxu0 %v2791
      %v2910 = vpop.f32.mrb[0].mxu0
      %v2911 = vadd.f32 0.0, %v2910
      %v2912 = vpop.f32.mrb[0].mxu0
      %v2913 = vpop.f32.mrb[0].mxu0
      %v2914 = vadd.f32 0.0, %v2913
      %v2915 = vpop.f32.mrb[0].mxu0
      %2916 = vmatprep.mubr.bf16.mxu0 0
      %2917 = vmatmul.mubr.bf16.gmra.mrb[0].mxu0 %v2794
      %v2918 = vpop.f32.mrb[0].mxu0
      %v2919 = vadd.f32 0.0, %v2918
      %v2920 = vpop.f32.mrb[0].mxu0
      %v2921 = vpop.f32.mrb[0].mxu0
      %v2922 = vadd.f32 0.0, %v2921
      %v2923 = vpop.f32.mrb[0].mxu0
      %2924 = vmatprep.mubr.bf16.mxu0 0
      %2925 = vmatmul.mubr.bf16.gmra.mrb[0].mxu0 %v2797
      %v2926 = vpop.f32.mrb[0].mxu0
      %v2927 = vadd.f32 0.0, %v2926
      %v2928 = vpop.f32.mrb[0].mxu0
      %v2929 = vpop.f32.mrb[0].mxu0
      %v2930 = vadd.f32 0.0, %v2929
      %v2931 = vpop.f32.mrb[0].mxu0
      %2932 = vmatprep.mubr.bf16.mxu0 0
      %2933 = vmatmul.mubr.bf16.gmra.mrb[0].mxu0 %v2800
      %v2934 = vpop.f32.mrb[0].mxu0
      %v2935 = vadd.f32 0.0, %v2934
      %v2936 = vpop.f32.mrb[0].mxu0
      %v2937 = vpop.f32.mrb[0].mxu0
      %v2938 = vadd.f32 0.0, %v2937
      %v2939 = vpop.f32.mrb[0].mxu0
      %2940 = vmatprep.mubr.bf16.mxu0 0
      %2941 = vmatmul.mubr.bf16.gmra.mrb[0].mxu0 %v2803
      %v2942 = vpop.f32.mrb[0].mxu0
      %v2943 = vadd.f32 0.0, %v2942
      %v2944 = vpop.f32.mrb[0].mxu0
      %v2945 = vpop.f32.mrb[0].mxu0
      %v2946 = vadd.f32 0.0, %v2945
      %v2947 = vpop.f32.mrb[0].mxu0
      %2948 = vmatprep.mubr.bf16.mxu0 0
      %2949 = vmatmul.mubr.bf16.gmra.mrb[0].mxu0 %v2806
      %v2950 = vpop.f32.mrb[0].mxu0
      %v2951 = vadd.f32 0.0, %v2950
      %v2952 = vpop.f32.mrb[0].mxu0
      %v2953 = vpop.f32.mrb[0].mxu0
      %v2954 = vadd.f32 0.0, %v2953
      %v2955 = vpop.f32.mrb[0].mxu0
      %2956 = vmatprep.mubr.bf16.mxu0 0
      %2957 = vmatmul.mubr.bf16.gmra.mrb[0].mxu0 %v2809
      %v2958 = vpop.f32.mrb[0].mxu0
      %v2959 = vadd.f32 0.0, %v2958
      %v2960 = vpop.f32.mrb[0].mxu0
      %v2961 = vpop.f32.mrb[0].mxu0
      %v2962 = vadd.f32 0.0, %v2961
      %v2963 = vpop.f32.mrb[0].mxu0
      %2964 = vmatprep.mubr.bf16.mxu0 0
      %2965 = vmatmul.mubr.bf16.gmra.mrb[0].mxu0 %v2812
      %v2966 = vpop.f32.mrb[0].mxu0
      %v2967 = vadd.f32 0.0, %v2966
      %v2968 = vpop.f32.mrb[0].mxu0
      %v2969 = vpop.f32.mrb[0].mxu0
      %v2970 = vadd.f32 0.0, %v2969
      %v2971 = vpop.f32.mrb[0].mxu0
      %2972 = vmatprep.mubr.bf16.mxu0 0
      %2973 = vmatmul.mubr.bf16.gmra.mrb[0].mxu0 %v2815
      %v2974 = vpop.f32.mrb[0].mxu0
      %v2975 = vadd.f32 0.0, %v2974
      %v2976 = vpop.f32.mrb[0].mxu0
      %v2977 = vpop.f32.mrb[0].mxu0
      %v2978 = vadd.f32 0.0, %v2977
      %v2979 = vpop.f32.mrb[0].mxu0
      %2980 = vdwg.mxu0
      %v2981 = vadd.f32 %v2687, %v2855
      %v2982 = vadd.f32 %v2688, %v2858
      %v2983 = vadd.f32 %v2689, %v2863
      %v2984 = vadd.f32 %v2690, %v2866
      %v2985 = vadd.f32 %v2691, %v2871
      %v2986 = vadd.f32 %v2692, %v2874
      %v2987 = vadd.f32 %v2693, %v2879
      %v2988 = vadd.f32 %v2694, %v2882
      %v2989 = vadd.f32 %v2695, %v2887
      %v2990 = vadd.f32 %v2696, %v2890
      %v2991 = vadd.f32 %v2697, %v2895
      %v2992 = vadd.f32 %v2698, %v2898
      %v2993 = vadd.f32 %v2699, %v2903
      %v2994 = vadd.f32 %v2700, %v2906
      %v2995 = vadd.f32 %v2701, %v2911
      %v2996 = vadd.f32 %v2702, %v2914
      %v2997 = vadd.f32 %v2703, %v2919
      %v2998 = vadd.f32 %v2704, %v2922
      %v2999 = vadd.f32 %v2705, %v2927
      %v3000 = vadd.f32 %v2706, %v2930
      %v3001 = vadd.f32 %v2707, %v2935
      %v3002 = vadd.f32 %v2708, %v2938
      %v3003 = vadd.f32 %v2709, %v2943
      %v3004 = vadd.f32 %v2710, %v2946
      %v3005 = vadd.f32 %v2711, %v2951
      %v3006 = vadd.f32 %v2712, %v2954
      %v3007 = vadd.f32 %v2713, %v2959
      %v3008 = vadd.f32 %v2714, %v2962
      %v3009 = vadd.f32 %v2715, %v2967
      %v3010 = vadd.f32 %v2716, %v2970
      %v3011 = vadd.f32 %v2717, %v2975
      %v3012 = vadd.f32 %v2718, %v2978
      %3013 = vst [vmem:[%s197] sm:$0xff] %v2981
      %3014 = vst [vmem:[%s197 + $0x8] sm:$0xff] %v2982
      %3015 = vst [vmem:[%s197 + $0x10] sm:$0xff] %v2983
      %3016 = vst [vmem:[%s197 + $0x18] sm:$0xff] %v2984
      %3017 = vst [vmem:[%s197 + $0x20] sm:$0xff] %v2985
      %3018 = vst [vmem:[%s197 + $0x28] sm:$0xff] %v2986
      %3019 = vst [vmem:[%s197 + $0x30] sm:$0xff] %v2987
      %3020 = vst [vmem:[%s197 + $0x38] sm:$0xff] %v2988
      %3021 = vst [vmem:[%s197 + $0x40] sm:$0xff] %v2989
      %3022 = vst [vmem:[%s197 + $0x48] sm:$0xff] %v2990
      %3023 = vst [vmem:[%s197 + $0x50] sm:$0xff] %v2991
      %3024 = vst [vmem:[%s197 + $0x58] sm:$0xff] %v2992
      %3025 = vst [vmem:[%s197 + $0x60] sm:$0xff] %v2993
      %3026 = vst [vmem:[%s197 + $0x68] sm:$0xff] %v2994
      %3027 = vst [vmem:[%s197 + $0x70] sm:$0xff] %v2995
      %3028 = vst [vmem:[%s197 + $0x78] sm:$0xff] %v2996
      %3029 = vst [vmem:[%s197 + $0x80] sm:$0xff] %v2997
      %3030 = vst [vmem:[%s197 + $0x88] sm:$0xff] %v2998
      %3031 = vst [vmem:[%s197 + $0x90] sm:$0xff] %v2999
      %3032 = vst [vmem:[%s197 + $0x98] sm:$0xff] %v3000
      %3033 = vst [vmem:[%s197 + $0xa0] sm:$0xff] %v3001
      %3034 = vst [vmem:[%s197 + $0xa8] sm:$0xff] %v3002
      %3035 = vst [vmem:[%s197 + $0xb0] sm:$0xff] %v3003
      %3036 = vst [vmem:[%s197 + $0xb8] sm:$0xff] %v3004
      %3037 = vst [vmem:[%s197 + $0xc0] sm:$0xff] %v3005
      %3038 = vst [vmem:[%s197 + $0xc8] sm:$0xff] %v3006
      %3039 = vst [vmem:[%s197 + $0xd0] sm:$0xff] %v3007
      %3040 = vst [vmem:[%s197 + $0xd8] sm:$0xff] %v3008
      %3041 = vst [vmem:[%s197 + $0xe0] sm:$0xff] %v3009
      %3042 = vst [vmem:[%s197 + $0xe8] sm:$0xff] %v3010
      %3043 = vst [vmem:[%s197 + $0xf0] sm:$0xff] %v3011
      %3044 = vst [vmem:[%s197 + $0xf8] sm:$0xff] %v3012
      %p3045 = scmp.lt.s32.totalorder %s15, 1
      %s3046 = scalar_select %p3045, %s15, 1
      %s3047 = smul.addr %s3046, 32
      %s3048 = smul.addr %s3047, 8
      %s3049 = scalar_lea.vmem %s4, %s3048
      // Predicated region
      $region37: #{model.2} parent=35 // pred_check
        %p3050 = pneg %p122
      $region38: #{model.2} parent=35 // pred_check_branch
        %3052 = sbr.rel (%p3050) target = $region40
      $region39: #{model.2} parent=35 // pred_region
        _
      $region40: #{model.2} parent=35 // pred_fallthru
        _
    $region36: #{model.2} parent=5 // pred_fallthru
      _
    %p3053 = scmp.le.s32.totalorder 2, %s10
    // Predicated region
    $region41: #{model.2} parent=5 // pred_check
      %p3054 = pneg %p3053
    $region42: #{model.2} parent=5 // pred_check_branch
      %3056 = sbr.rel (%p3054) target = $region44
    $region43: #{model.2} parent=5 // pred_region
      %s3057 = ssub.s32 %s10, 2
      // Predicated region
      $region45: #{model.2} parent=43 // pred_check
        %p3058 = pneg %p128
      $region46: #{model.2} parent=43 // pred_check_branch
        %3060 = sbr.rel (%p3058) target = $region48
      $region47: #{model.2} parent=43 // pred_region
        %p3061 = scmp.lt.s32.totalorder %s16, 1
        %s3062 = scalar_select %p3061, %s16, 1
        %s3063 = smul.addr %s3062, 32
        %s3064 = smul.addr %s3063, 8
        %s3065 = scalar_lea.vmem %s4, %s3064
      $region48: #{model.2} parent=43 // pred_fallthru
        _
    $region44: #{model.2} parent=5 // pred_fallthru
      _
  $region6: #{model.2} parent=0 // loop_footer
    %s14 = sadd.s32 1, %s10
  $region7: #{model.2} parent=0 // loop_footer_branch
    %9 = sbr.rel target = $region3
  $region8: #{model.2} parent=0 // loop_exit
    _

</llo_original>
